<compile_context>
chip_gen: v7x
topology: tpu7x:2x2x1
jax: 0.10.0
libtpu: 0.0.40
codegen_flags: <defaults>
</compile_context>

<pallas_src>
import jax
import jax.numpy as jnp
from jax.experimental import pallas as pl
from jax.experimental.pallas import tpu as pltpu


_ENC_CHANNELS = [(1, 32), (32, 64), (64, 128), (128, 256)]
_DEC_CHANNELS = [(256, 128), (128, 64), (64, 32), (32, 1)]
_KERNEL = 3


# ---------------------------------------------------------------------------
# In-kernel building blocks (channels-last (L, C) VMEM values)
# ---------------------------------------------------------------------------

def _taps(x):
    """Shifted copies for a k=3, pad=1 conv: (x[l-1], x[l+1]) with zero
    boundaries. pltpu.roll (XLU sublane rotate) + masking — no zero-padded
    slab, no sublane-unaligned slices."""
    n = x.shape[0]
    row = jax.lax.broadcasted_iota(jnp.int32, x.shape, 0)
    x_prev = jnp.where(row == 0, 0.0, pltpu.roll(x, 1, 0))          # x[l-1]
    x_next = jnp.where(row == n - 1, 0.0, pltpu.roll(x, n - 1, 0))  # x[l+1]
    return x_prev, x_next


def _maxpool2(y):
    lc, c = y.shape
    return jnp.max(y.reshape(lc // 2, 2, c), axis=1)


def _upsample2(x):
    # nn.Upsample(scale_factor=2, mode='nearest'): out[l] = in[l // 2]
    lc, c = x.shape
    return jnp.broadcast_to(x[:, None, :], (lc, 2, c)).reshape(2 * lc, c)


def _conv3_mxu(x, w_ref, b_ref, *, pool):
    """Conv1d(k=3,s=1,p=1) + bias + ReLU (+ MaxPool(2,2)) as 3 shifted MXU
    matmuls. x: (L, Cin) f32; w_ref: (3, Cin, Cout) bf16; b_ref: (1, Cout) f32."""
    x_prev, x_next = _taps(x)
    w0, w1, w2 = w_ref[0], w_ref[1], w_ref[2]
    dt = w0.dtype
    y = (jnp.dot(x_prev.astype(dt), w0, preferred_element_type=jnp.float32)
         + jnp.dot(x.astype(dt), w1, preferred_element_type=jnp.float32)
         + jnp.dot(x_next.astype(dt), w2, preferred_element_type=jnp.float32)
         + b_ref[...])
    y = jnp.maximum(y, 0.0)
    if pool:
        y = _maxpool2(y)
    return y


def _conv3_cin1(x, w_ref, b_ref):
    """First encoder layer (C_in=1): VPU broadcast multiplies instead of a
    K=1 MXU matmul. x: (L, 1); w_ref: (3, 1, Cout); b_ref: (1, Cout)."""
    x_prev, x_next = _taps(x)
    y = x_prev * w_ref[0] + x * w_ref[1] + x_next * w_ref[2] + b_ref[...]
    y = jnp.maximum(y, 0.0)
    return _maxpool2(y)


def _conv3_cout1(x, wt_ref, b_ref):
    """Last decoder layer (C_out=1): VPU multiply + lane reduction instead of
    an N=1 matmul. x: (L, Cin); wt_ref: (3, 1, Cin) pre-transposed; b: (1, 1)."""
    x_prev, x_next = _taps(x)
    z = x_prev * wt_ref[0] + x * wt_ref[1] + x_next * wt_ref[2]
    y = jnp.sum(z, axis=1, keepdims=True) + b_ref[...]
    return jax.nn.sigmoid(y)


# ---------------------------------------------------------------------------
# Fused whole-network kernel (one batch element per grid step)
# ---------------------------------------------------------------------------

def _ecg_fused_kernel(x_ref,
                      we0, be0, we1, be1, we2, be2, we3, be3,
                      wd0, bd0, wd1, bd1, wd2, bd2, wd3, bd3,
                      o_ref):
    # Encoder: 4 x [Conv1d + ReLU + MaxPool(2,2)]
    h = _conv3_cin1(x_ref[0], we0, be0)                   # (L/2,  32)
    h = _conv3_mxu(h, we1, be1, pool=True)                # (L/4,  64)
    h = _conv3_mxu(h, we2, be2, pool=True)                # (L/8,  128)
    h = _conv3_mxu(h, we3, be3, pool=True)                # (L/16, 256)
    # Decoder: 4 x [Upsample(x2) + Conv1d + (ReLU | Sigmoid)]
    h = _conv3_mxu(_upsample2(h), wd0, bd0, pool=False)   # (L/8,  128)
    h = _conv3_mxu(_upsample2(h), wd1, bd1, pool=False)   # (L/4,  64)
    h = _conv3_mxu(_upsample2(h), wd2, bd2, pool=False)   # (L/2,  32)
    y = _conv3_cout1(_upsample2(h), wd3, bd3)             # (L, 1), sigmoid
    o_ref[0] = y.astype(o_ref.dtype)


# ---------------------------------------------------------------------------
# Parameters (deterministic, PyTorch-like uniform init)
# ---------------------------------------------------------------------------

def init_params(key):
    """Weights stored as (K, C_in, C_out) f32 (a PyTorch (C_out, C_in, K)
    checkpoint would need a transpose); biases as (C_out,)."""
    params = {}
    layers = ([("enc", i, cin, cout) for i, (cin, cout) in enumerate(_ENC_CHANNELS)]
              + [("dec", i, cin, cout) for i, (cin, cout) in enumerate(_DEC_CHANNELS)])
    for name, i, cin, cout in layers:
        key, kw, kb = jax.random.split(key, 3)
        bound = 1.0 / jnp.sqrt(cin * _KERNEL)
        w = jax.random.uniform(kw, (_KERNEL, cin, cout), jnp.float32, -bound, bound)
        b = jax.random.uniform(kb, (cout,), jnp.float32, -bound, bound)
        params[f"{name}{i}"] = (w, b)
    return params


def _prepare_operands(params):
    """Flatten params into kernel operand order with kernel-ready layouts:
    bf16 weights for the MXU layers, f32 for the VPU layers (enc0 / dec3,
    dec3 weights pre-transposed to (3, 1, C_in)), biases as (1, C_out) f32."""
    ops = []
    for i in range(4):
        w, b = params[f"enc{i}"]
        wk = w.astype(jnp.float32) if i == 0 else w.astype(jnp.bfloat16)
        ops += [wk, b.reshape(1, -1).astype(jnp.float32)]
    for i in range(4):
        w, b = params[f"dec{i}"]
        if i == 3:
            wk = jnp.transpose(w, (0, 2, 1)).astype(jnp.float32)   # (3, 1, 32)
        else:
            wk = w.astype(jnp.bfloat16)
        ops += [wk, b.reshape(1, -1).astype(jnp.float32)]
    return ops


# ---------------------------------------------------------------------------
# Forward pass (matches ECGAutoencoder.forward)
# ---------------------------------------------------------------------------

def ecg_autoencoder_forward(x_ncl, params):
    """x_ncl: (B, 1, L) float32 (PyTorch NCL). Returns (B, 1, L) float32."""
    B, c_in, L = x_ncl.shape
    assert c_in == 1, "ECGAutoencoder expects a single input channel."
    assert L % 16 == 0, "L must be divisible by 16 (4 MaxPool(2,2) stages)."

    x_lc = jnp.transpose(x_ncl, (0, 2, 1)).astype(jnp.float32)  # (B, L, 1)
    operands = _prepare_operands(params)

    def _const_spec(a):
        nd = a.ndim
        return pl.BlockSpec(a.shape, lambda i, nd=nd: (0,) * nd)

    out = pl.pallas_call(
        _ecg_fused_kernel,
        out_shape=jax.ShapeDtypeStruct((B, L, 1), jnp.float32),
        grid=(B,),
        in_specs=[pl.BlockSpec((1, L, 1), lambda i: (i, 0, 0))]
                 + [_const_spec(a) for a in operands],
        out_specs=pl.BlockSpec((1, L, 1), lambda i: (i, 0, 0)),
        compiler_params=pltpu.CompilerParams(
            dimension_semantics=("parallel",)),
    )(x_lc, *operands)

    # (B, L, 1) -> (B, 1, L): transposing a size-1 dim is a free XLA bitcast.
    return jnp.transpose(out, (0, 2, 1))


if __name__ == "__main__":
    key = jax.random.PRNGKey(0)
    kp, kx = jax.random.split(key)

    params = init_params(kp)

    B, C, L = 2, 1, 64  # L divisible by 16 (4 pooling stages)
    x = jax.random.normal(kx, (B, C, L), jnp.float32)

    out = ecg_autoencoder_forward(x, params)
    out = jax.block_until_ready(out)

    assert out.shape == (B, 1, L), out.shape
    assert out.dtype == jnp.float32
    # Sigmoid output must lie in (0, 1)
    assert bool(jnp.all(out > 0.0)) and bool(jnp.all(out < 1.0))

    print("KERNEL_OK")
</pallas_src>

<mosaic_0001>
module attributes {stable_mosaic.version = 11 : i64} {
  func.func @_ecg_fused_kernel(%arg0: i32, %arg1: memref<1x64x1xf32, #tpu.memory_space<vmem>>, %arg2: memref<3x1x32xf32, #tpu.memory_space<vmem>>, %arg3: memref<1x32xf32, #tpu.memory_space<vmem>>, %arg4: memref<3x32x64xbf16, #tpu.memory_space<vmem>>, %arg5: memref<1x64xf32, #tpu.memory_space<vmem>>, %arg6: memref<3x64x128xbf16, #tpu.memory_space<vmem>>, %arg7: memref<1x128xf32, #tpu.memory_space<vmem>>, %arg8: memref<3x128x256xbf16, #tpu.memory_space<vmem>>, %arg9: memref<1x256xf32, #tpu.memory_space<vmem>>, %arg10: memref<3x256x128xbf16, #tpu.memory_space<vmem>>, %arg11: memref<1x128xf32, #tpu.memory_space<vmem>>, %arg12: memref<3x128x64xbf16, #tpu.memory_space<vmem>>, %arg13: memref<1x64xf32, #tpu.memory_space<vmem>>, %arg14: memref<3x64x32xbf16, #tpu.memory_space<vmem>>, %arg15: memref<1x32xf32, #tpu.memory_space<vmem>>, %arg16: memref<3x1x32xf32, #tpu.memory_space<vmem>>, %arg17: memref<1x1xf32, #tpu.memory_space<vmem>>, %arg18: memref<1x64x1xf32, #tpu.memory_space<vmem>>) attributes {dimension_semantics = [#tpu.dimension_semantics<parallel>], iteration_bounds = array<i64: 2>, scalar_prefetch = 0 : i64, scratch_operands = 0 : i64, tpu.core_type = #tpu.core_type<tc>, window_params = [{transform_indices = @transform_0, window_bounds = array<i64: 1, 64, 1>}, {pipeline_mode = #tpu.pipeline_mode<synchronous>, transform_indices = @transform_1, window_bounds = array<i64: 3, 1, 32>}, {pipeline_mode = #tpu.pipeline_mode<synchronous>, transform_indices = @transform_2, window_bounds = array<i64: 1, 32>}, {pipeline_mode = #tpu.pipeline_mode<synchronous>, transform_indices = @transform_3, window_bounds = array<i64: 3, 32, 64>}, {pipeline_mode = #tpu.pipeline_mode<synchronous>, transform_indices = @transform_4, window_bounds = array<i64: 1, 64>}, {pipeline_mode = #tpu.pipeline_mode<synchronous>, transform_indices = @transform_5, window_bounds = array<i64: 3, 64, 128>}, {pipeline_mode = #tpu.pipeline_mode<synchronous>, transform_indices = @transform_6, window_bounds = array<i64: 1, 128>}, {pipeline_mode = #tpu.pipeline_mode<synchronous>, transform_indices = @transform_7, window_bounds = array<i64: 3, 128, 256>}, {pipeline_mode = #tpu.pipeline_mode<synchronous>, transform_indices = @transform_8, window_bounds = array<i64: 1, 256>}, {pipeline_mode = #tpu.pipeline_mode<synchronous>, transform_indices = @transform_9, window_bounds = array<i64: 3, 256, 128>}, {pipeline_mode = #tpu.pipeline_mode<synchronous>, transform_indices = @transform_10, window_bounds = array<i64: 1, 128>}, {pipeline_mode = #tpu.pipeline_mode<synchronous>, transform_indices = @transform_11, window_bounds = array<i64: 3, 128, 64>}, {pipeline_mode = #tpu.pipeline_mode<synchronous>, transform_indices = @transform_12, window_bounds = array<i64: 1, 64>}, {pipeline_mode = #tpu.pipeline_mode<synchronous>, transform_indices = @transform_13, window_bounds = array<i64: 3, 64, 32>}, {pipeline_mode = #tpu.pipeline_mode<synchronous>, transform_indices = @transform_14, window_bounds = array<i64: 1, 32>}, {pipeline_mode = #tpu.pipeline_mode<synchronous>, transform_indices = @transform_15, window_bounds = array<i64: 3, 1, 32>}, {pipeline_mode = #tpu.pipeline_mode<synchronous>, transform_indices = @transform_16, window_bounds = array<i64: 1, 1>}, {transform_indices = @transform_17, window_bounds = array<i64: 1, 64, 1>}]} {
    %c0 = arith.constant 0 : index
    %c0_0 = arith.constant 0 : index
    %c0_1 = arith.constant 0 : index
    %0 = vector.load %arg1[%c0, %c0_0, %c0_1] : memref<1x64x1xf32, #tpu.memory_space<vmem>>, vector<1x64x1xf32>
    %1 = vector.shape_cast %0 : vector<1x64x1xf32> to vector<64x1xf32>
    %2 = tpu.iota {dimensions = array<i32: 0>} : vector<64x1xi32>
    %c0_i32 = arith.constant 0 : i32
    %3 = vector.broadcast %c0_i32 : i32 to vector<64x1xi32>
    %4 = arith.cmpi eq, %2, %3 : vector<64x1xi32>
    %c1_i32 = arith.constant 1 : i32
    %5 = tpu.dynamic_rotate %1 by %c1_i32 dim 0 : vector<64x1xf32>, i32 -> vector<64x1xf32>
    %cst = arith.constant 0.000000e+00 : f32
    %6 = vector.broadcast %cst : f32 to vector<64x1xf32>
    %7 = arith.select %4, %6, %5 : vector<64x1xi1>, vector<64x1xf32>
    %c63_i32 = arith.constant 63 : i32
    %8 = vector.broadcast %c63_i32 : i32 to vector<64x1xi32>
    %9 = arith.cmpi eq, %2, %8 : vector<64x1xi32>
    %c63_i32_2 = arith.constant 63 : i32
    %10 = tpu.dynamic_rotate %1 by %c63_i32_2 dim 0 : vector<64x1xf32>, i32 -> vector<64x1xf32>
    %cst_3 = arith.constant 0.000000e+00 : f32
    %11 = vector.broadcast %cst_3 : f32 to vector<64x1xf32>
    %12 = arith.select %9, %11, %10 : vector<64x1xi1>, vector<64x1xf32>
    %c0_4 = arith.constant 0 : index
    %c0_5 = arith.constant 0 : index
    %c0_6 = arith.constant 0 : index
    %13 = vector.load %arg2[%c0_4, %c0_5, %c0_6] : memref<3x1x32xf32, #tpu.memory_space<vmem>>, vector<1x1x32xf32>
    %14 = vector.shape_cast %13 : vector<1x1x32xf32> to vector<1x32xf32>
    %15 = vector.broadcast %7 : vector<64x1xf32> to vector<64x32xf32>
    %16 = vector.broadcast %14 : vector<1x32xf32> to vector<64x32xf32>
    %17 = arith.mulf %15, %16 : vector<64x32xf32>
    %c1 = arith.constant 1 : index
    %c0_7 = arith.constant 0 : index
    %c0_8 = arith.constant 0 : index
    %18 = vector.load %arg2[%c1, %c0_7, %c0_8] : memref<3x1x32xf32, #tpu.memory_space<vmem>>, vector<1x1x32xf32>
    %19 = vector.shape_cast %18 : vector<1x1x32xf32> to vector<1x32xf32>
    %20 = vector.broadcast %1 : vector<64x1xf32> to vector<64x32xf32>
    %21 = vector.broadcast %19 : vector<1x32xf32> to vector<64x32xf32>
    %22 = arith.mulf %20, %21 : vector<64x32xf32>
    %23 = arith.addf %17, %22 : vector<64x32xf32>
    %c2 = arith.constant 2 : index
    %c0_9 = arith.constant 0 : index
    %c0_10 = arith.constant 0 : index
    %24 = vector.load %arg2[%c2, %c0_9, %c0_10] : memref<3x1x32xf32, #tpu.memory_space<vmem>>, vector<1x1x32xf32>
    %25 = vector.shape_cast %24 : vector<1x1x32xf32> to vector<1x32xf32>
    %26 = vector.broadcast %12 : vector<64x1xf32> to vector<64x32xf32>
    %27 = vector.broadcast %25 : vector<1x32xf32> to vector<64x32xf32>
    %28 = arith.mulf %26, %27 : vector<64x32xf32>
    %29 = arith.addf %23, %28 : vector<64x32xf32>
    %c0_11 = arith.constant 0 : index
    %c0_12 = arith.constant 0 : index
    %30 = vector.load %arg3[%c0_11, %c0_12] : memref<1x32xf32, #tpu.memory_space<vmem>>, vector<1x32xf32>
    %31 = vector.broadcast %30 : vector<1x32xf32> to vector<64x32xf32>
    %32 = arith.addf %29, %31 : vector<64x32xf32>
    %cst_13 = arith.constant 0.000000e+00 : f32
    %33 = vector.broadcast %cst_13 : f32 to vector<64x32xf32>
    %34 = arith.maximumf %32, %33 : vector<64x32xf32>
    %35 = vector.shape_cast %34 : vector<64x32xf32> to vector<32x2x32xf32>
    %cst_14 = arith.constant dense<0xFF800000> : vector<32x32xf32>
    %36 = vector.multi_reduction <maximumf>, %35, %cst_14 [1] : vector<32x2x32xf32> to vector<32x32xf32>
    %37 = tpu.iota {dimensions = array<i32: 0>} : vector<32x32xi32>
    %c0_i32_15 = arith.constant 0 : i32
    %38 = vector.broadcast %c0_i32_15 : i32 to vector<32x32xi32>
    %39 = arith.cmpi eq, %37, %38 : vector<32x32xi32>
    %c1_i32_16 = arith.constant 1 : i32
    %40 = tpu.dynamic_rotate %36 by %c1_i32_16 dim 0 : vector<32x32xf32>, i32 -> vector<32x32xf32>
    %cst_17 = arith.constant 0.000000e+00 : f32
    %41 = vector.broadcast %cst_17 : f32 to vector<32x32xf32>
    %42 = arith.select %39, %41, %40 : vector<32x32xi1>, vector<32x32xf32>
    %c31_i32 = arith.constant 31 : i32
    %43 = vector.broadcast %c31_i32 : i32 to vector<32x32xi32>
    %44 = arith.cmpi eq, %37, %43 : vector<32x32xi32>
    %c31_i32_18 = arith.constant 31 : i32
    %45 = tpu.dynamic_rotate %36 by %c31_i32_18 dim 0 : vector<32x32xf32>, i32 -> vector<32x32xf32>
    %cst_19 = arith.constant 0.000000e+00 : f32
    %46 = vector.broadcast %cst_19 : f32 to vector<32x32xf32>
    %47 = arith.select %44, %46, %45 : vector<32x32xi1>, vector<32x32xf32>
    %c0_20 = arith.constant 0 : index
    %c0_21 = arith.constant 0 : index
    %c0_22 = arith.constant 0 : index
    %48 = vector.load %arg4[%c0_20, %c0_21, %c0_22] : memref<3x32x64xbf16, #tpu.memory_space<vmem>>, vector<1x32x64xbf16>
    %49 = vector.shape_cast %48 : vector<1x32x64xbf16> to vector<32x64xbf16>
    %c1_23 = arith.constant 1 : index
    %c0_24 = arith.constant 0 : index
    %c0_25 = arith.constant 0 : index
    %50 = vector.load %arg4[%c1_23, %c0_24, %c0_25] : memref<3x32x64xbf16, #tpu.memory_space<vmem>>, vector<1x32x64xbf16>
    %51 = vector.shape_cast %50 : vector<1x32x64xbf16> to vector<32x64xbf16>
    %c2_26 = arith.constant 2 : index
    %c0_27 = arith.constant 0 : index
    %c0_28 = arith.constant 0 : index
    %52 = vector.load %arg4[%c2_26, %c0_27, %c0_28] : memref<3x32x64xbf16, #tpu.memory_space<vmem>>, vector<1x32x64xbf16>
    %53 = vector.shape_cast %52 : vector<1x32x64xbf16> to vector<32x64xbf16>
    %54 = arith.truncf %42 : vector<32x32xf32> to vector<32x32xbf16>
    %cst_29 = arith.constant dense<0.000000e+00> : vector<32x64xf32>
    %55 = tpu.matmul %54, %49, %cst_29 {dimension_numbers = #tpu.dot_dimension_numbers<[1], [0], [0], [1], [0, 0, 1, 1], [], []>} : vector<32x32xbf16>, vector<32x64xbf16>, vector<32x64xf32> -> vector<32x64xf32>
    %56 = arith.truncf %36 : vector<32x32xf32> to vector<32x32xbf16>
    %cst_30 = arith.constant dense<0.000000e+00> : vector<32x64xf32>
    %57 = tpu.matmul %56, %51, %cst_30 {dimension_numbers = #tpu.dot_dimension_numbers<[1], [0], [0], [1], [0, 0, 1, 1], [], []>} : vector<32x32xbf16>, vector<32x64xbf16>, vector<32x64xf32> -> vector<32x64xf32>
    %58 = arith.addf %55, %57 : vector<32x64xf32>
    %59 = arith.truncf %47 : vector<32x32xf32> to vector<32x32xbf16>
    %cst_31 = arith.constant dense<0.000000e+00> : vector<32x64xf32>
    %60 = tpu.matmul %59, %53, %cst_31 {dimension_numbers = #tpu.dot_dimension_numbers<[1], [0], [0], [1], [0, 0, 1, 1], [], []>} : vector<32x32xbf16>, vector<32x64xbf16>, vector<32x64xf32> -> vector<32x64xf32>
    %61 = arith.addf %58, %60 : vector<32x64xf32>
    %c0_32 = arith.constant 0 : index
    %c0_33 = arith.constant 0 : index
    %62 = vector.load %arg5[%c0_32, %c0_33] : memref<1x64xf32, #tpu.memory_space<vmem>>, vector<1x64xf32>
    %63 = vector.broadcast %62 : vector<1x64xf32> to vector<32x64xf32>
    %64 = arith.addf %61, %63 : vector<32x64xf32>
    %cst_34 = arith.constant 0.000000e+00 : f32
    %65 = vector.broadcast %cst_34 : f32 to vector<32x64xf32>
    %66 = arith.maximumf %64, %65 : vector<32x64xf32>
    %67 = vector.shape_cast %66 : vector<32x64xf32> to vector<16x2x64xf32>
    %cst_35 = arith.constant dense<0xFF800000> : vector<16x64xf32>
    %68 = vector.multi_reduction <maximumf>, %67, %cst_35 [1] : vector<16x2x64xf32> to vector<16x64xf32>
    %69 = tpu.iota {dimensions = array<i32: 0>} : vector<16x64xi32>
    %c0_i32_36 = arith.constant 0 : i32
    %70 = vector.broadcast %c0_i32_36 : i32 to vector<16x64xi32>
    %71 = arith.cmpi eq, %69, %70 : vector<16x64xi32>
    %c1_i32_37 = arith.constant 1 : i32
    %72 = tpu.dynamic_rotate %68 by %c1_i32_37 dim 0 : vector<16x64xf32>, i32 -> vector<16x64xf32>
    %cst_38 = arith.constant 0.000000e+00 : f32
    %73 = vector.broadcast %cst_38 : f32 to vector<16x64xf32>
    %74 = arith.select %71, %73, %72 : vector<16x64xi1>, vector<16x64xf32>
    %c15_i32 = arith.constant 15 : i32
    %75 = vector.broadcast %c15_i32 : i32 to vector<16x64xi32>
    %76 = arith.cmpi eq, %69, %75 : vector<16x64xi32>
    %c15_i32_39 = arith.constant 15 : i32
    %77 = tpu.dynamic_rotate %68 by %c15_i32_39 dim 0 : vector<16x64xf32>, i32 -> vector<16x64xf32>
    %cst_40 = arith.constant 0.000000e+00 : f32
    %78 = vector.broadcast %cst_40 : f32 to vector<16x64xf32>
    %79 = arith.select %76, %78, %77 : vector<16x64xi1>, vector<16x64xf32>
    %c0_41 = arith.constant 0 : index
    %c0_42 = arith.constant 0 : index
    %c0_43 = arith.constant 0 : index
    %80 = vector.load %arg6[%c0_41, %c0_42, %c0_43] : memref<3x64x128xbf16, #tpu.memory_space<vmem>>, vector<1x64x128xbf16>
    %81 = vector.shape_cast %80 : vector<1x64x128xbf16> to vector<64x128xbf16>
    %c1_44 = arith.constant 1 : index
    %c0_45 = arith.constant 0 : index
    %c0_46 = arith.constant 0 : index
    %82 = vector.load %arg6[%c1_44, %c0_45, %c0_46] : memref<3x64x128xbf16, #tpu.memory_space<vmem>>, vector<1x64x128xbf16>
    %83 = vector.shape_cast %82 : vector<1x64x128xbf16> to vector<64x128xbf16>
    %c2_47 = arith.constant 2 : index
    %c0_48 = arith.constant 0 : index
    %c0_49 = arith.constant 0 : index
    %84 = vector.load %arg6[%c2_47, %c0_48, %c0_49] : memref<3x64x128xbf16, #tpu.memory_space<vmem>>, vector<1x64x128xbf16>
    %85 = vector.shape_cast %84 : vector<1x64x128xbf16> to vector<64x128xbf16>
    %86 = arith.truncf %74 : vector<16x64xf32> to vector<16x64xbf16>
    %cst_50 = arith.constant dense<0.000000e+00> : vector<16x128xf32>
    %87 = tpu.matmul %86, %81, %cst_50 {dimension_numbers = #tpu.dot_dimension_numbers<[1], [0], [0], [1], [0, 0, 1, 1], [], []>} : vector<16x64xbf16>, vector<64x128xbf16>, vector<16x128xf32> -> vector<16x128xf32>
    %88 = arith.truncf %68 : vector<16x64xf32> to vector<16x64xbf16>
    %cst_51 = arith.constant dense<0.000000e+00> : vector<16x128xf32>
    %89 = tpu.matmul %88, %83, %cst_51 {dimension_numbers = #tpu.dot_dimension_numbers<[1], [0], [0], [1], [0, 0, 1, 1], [], []>} : vector<16x64xbf16>, vector<64x128xbf16>, vector<16x128xf32> -> vector<16x128xf32>
    %90 = arith.addf %87, %89 : vector<16x128xf32>
    %91 = arith.truncf %79 : vector<16x64xf32> to vector<16x64xbf16>
    %cst_52 = arith.constant dense<0.000000e+00> : vector<16x128xf32>
    %92 = tpu.matmul %91, %85, %cst_52 {dimension_numbers = #tpu.dot_dimension_numbers<[1], [0], [0], [1], [0, 0, 1, 1], [], []>} : vector<16x64xbf16>, vector<64x128xbf16>, vector<16x128xf32> -> vector<16x128xf32>
    %93 = arith.addf %90, %92 : vector<16x128xf32>
    %c0_53 = arith.constant 0 : index
    %c0_54 = arith.constant 0 : index
    %94 = vector.load %arg7[%c0_53, %c0_54] : memref<1x128xf32, #tpu.memory_space<vmem>>, vector<1x128xf32>
    %95 = vector.broadcast %94 : vector<1x128xf32> to vector<16x128xf32>
    %96 = arith.addf %93, %95 : vector<16x128xf32>
    %cst_55 = arith.constant 0.000000e+00 : f32
    %97 = vector.broadcast %cst_55 : f32 to vector<16x128xf32>
    %98 = arith.maximumf %96, %97 : vector<16x128xf32>
    %99 = vector.shape_cast %98 : vector<16x128xf32> to vector<8x2x128xf32>
    %cst_56 = arith.constant dense<0xFF800000> : vector<8x128xf32>
    %100 = vector.multi_reduction <maximumf>, %99, %cst_56 [1] : vector<8x2x128xf32> to vector<8x128xf32>
    %101 = tpu.iota {dimensions = array<i32: 0>} : vector<8x128xi32>
    %c0_i32_57 = arith.constant 0 : i32
    %102 = vector.broadcast %c0_i32_57 : i32 to vector<8x128xi32>
    %103 = arith.cmpi eq, %101, %102 : vector<8x128xi32>
    %c1_i32_58 = arith.constant 1 : i32
    %104 = tpu.dynamic_rotate %100 by %c1_i32_58 dim 0 : vector<8x128xf32>, i32 -> vector<8x128xf32>
    %cst_59 = arith.constant 0.000000e+00 : f32
    %105 = vector.broadcast %cst_59 : f32 to vector<8x128xf32>
    %106 = arith.select %103, %105, %104 : vector<8x128xi1>, vector<8x128xf32>
    %c7_i32 = arith.constant 7 : i32
    %107 = vector.broadcast %c7_i32 : i32 to vector<8x128xi32>
    %108 = arith.cmpi eq, %101, %107 : vector<8x128xi32>
    %c7_i32_60 = arith.constant 7 : i32
    %109 = tpu.dynamic_rotate %100 by %c7_i32_60 dim 0 : vector<8x128xf32>, i32 -> vector<8x128xf32>
    %cst_61 = arith.constant 0.000000e+00 : f32
    %110 = vector.broadcast %cst_61 : f32 to vector<8x128xf32>
    %111 = arith.select %108, %110, %109 : vector<8x128xi1>, vector<8x128xf32>
    %c0_62 = arith.constant 0 : index
    %c0_63 = arith.constant 0 : index
    %c0_64 = arith.constant 0 : index
    %112 = vector.load %arg8[%c0_62, %c0_63, %c0_64] : memref<3x128x256xbf16, #tpu.memory_space<vmem>>, vector<1x128x256xbf16>
    %113 = vector.shape_cast %112 : vector<1x128x256xbf16> to vector<128x256xbf16>
    %c1_65 = arith.constant 1 : index
    %c0_66 = arith.constant 0 : index
    %c0_67 = arith.constant 0 : index
    %114 = vector.load %arg8[%c1_65, %c0_66, %c0_67] : memref<3x128x256xbf16, #tpu.memory_space<vmem>>, vector<1x128x256xbf16>
    %115 = vector.shape_cast %114 : vector<1x128x256xbf16> to vector<128x256xbf16>
    %c2_68 = arith.constant 2 : index
    %c0_69 = arith.constant 0 : index
    %c0_70 = arith.constant 0 : index
    %116 = vector.load %arg8[%c2_68, %c0_69, %c0_70] : memref<3x128x256xbf16, #tpu.memory_space<vmem>>, vector<1x128x256xbf16>
    %117 = vector.shape_cast %116 : vector<1x128x256xbf16> to vector<128x256xbf16>
    %118 = arith.truncf %106 : vector<8x128xf32> to vector<8x128xbf16>
    %cst_71 = arith.constant dense<0.000000e+00> : vector<8x256xf32>
    %119 = tpu.matmul %118, %113, %cst_71 {dimension_numbers = #tpu.dot_dimension_numbers<[1], [0], [0], [1], [0, 0, 1, 1], [], []>} : vector<8x128xbf16>, vector<128x256xbf16>, vector<8x256xf32> -> vector<8x256xf32>
    %120 = arith.truncf %100 : vector<8x128xf32> to vector<8x128xbf16>
    %cst_72 = arith.constant dense<0.000000e+00> : vector<8x256xf32>
    %121 = tpu.matmul %120, %115, %cst_72 {dimension_numbers = #tpu.dot_dimension_numbers<[1], [0], [0], [1], [0, 0, 1, 1], [], []>} : vector<8x128xbf16>, vector<128x256xbf16>, vector<8x256xf32> -> vector<8x256xf32>
    %122 = arith.addf %119, %121 : vector<8x256xf32>
    %123 = arith.truncf %111 : vector<8x128xf32> to vector<8x128xbf16>
    %cst_73 = arith.constant dense<0.000000e+00> : vector<8x256xf32>
    %124 = tpu.matmul %123, %117, %cst_73 {dimension_numbers = #tpu.dot_dimension_numbers<[1], [0], [0], [1], [0, 0, 1, 1], [], []>} : vector<8x128xbf16>, vector<128x256xbf16>, vector<8x256xf32> -> vector<8x256xf32>
    %125 = arith.addf %122, %124 : vector<8x256xf32>
    %c0_74 = arith.constant 0 : index
    %c0_75 = arith.constant 0 : index
    %126 = vector.load %arg9[%c0_74, %c0_75] : memref<1x256xf32, #tpu.memory_space<vmem>>, vector<1x256xf32>
    %127 = vector.broadcast %126 : vector<1x256xf32> to vector<8x256xf32>
    %128 = arith.addf %125, %127 : vector<8x256xf32>
    %cst_76 = arith.constant 0.000000e+00 : f32
    %129 = vector.broadcast %cst_76 : f32 to vector<8x256xf32>
    %130 = arith.maximumf %128, %129 : vector<8x256xf32>
    %131 = vector.shape_cast %130 : vector<8x256xf32> to vector<4x2x256xf32>
    %cst_77 = arith.constant dense<0xFF800000> : vector<4x256xf32>
    %132 = vector.multi_reduction <maximumf>, %131, %cst_77 [1] : vector<4x2x256xf32> to vector<4x256xf32>
    %133 = vector.shape_cast %132 : vector<4x256xf32> to vector<4x1x256xf32>
    %134 = vector.shape_cast %133 : vector<4x1x256xf32> to vector<4x1x256xf32>
    %135 = vector.broadcast %134 : vector<4x1x256xf32> to vector<4x2x256xf32>
    %136 = vector.shape_cast %135 : vector<4x2x256xf32> to vector<8x256xf32>
    %137 = tpu.iota {dimensions = array<i32: 0>} : vector<8x256xi32>
    %c0_i32_78 = arith.constant 0 : i32
    %138 = vector.broadcast %c0_i32_78 : i32 to vector<8x256xi32>
    %139 = arith.cmpi eq, %137, %138 : vector<8x256xi32>
    %c1_i32_79 = arith.constant 1 : i32
    %140 = tpu.dynamic_rotate %136 by %c1_i32_79 dim 0 : vector<8x256xf32>, i32 -> vector<8x256xf32>
    %cst_80 = arith.constant 0.000000e+00 : f32
    %141 = vector.broadcast %cst_80 : f32 to vector<8x256xf32>
    %142 = arith.select %139, %141, %140 : vector<8x256xi1>, vector<8x256xf32>
    %c7_i32_81 = arith.constant 7 : i32
    %143 = vector.broadcast %c7_i32_81 : i32 to vector<8x256xi32>
    %144 = arith.cmpi eq, %137, %143 : vector<8x256xi32>
    %c7_i32_82 = arith.constant 7 : i32
    %145 = tpu.dynamic_rotate %136 by %c7_i32_82 dim 0 : vector<8x256xf32>, i32 -> vector<8x256xf32>
    %cst_83 = arith.constant 0.000000e+00 : f32
    %146 = vector.broadcast %cst_83 : f32 to vector<8x256xf32>
    %147 = arith.select %144, %146, %145 : vector<8x256xi1>, vector<8x256xf32>
    %c0_84 = arith.constant 0 : index
    %c0_85 = arith.constant 0 : index
    %c0_86 = arith.constant 0 : index
    %148 = vector.load %arg10[%c0_84, %c0_85, %c0_86] : memref<3x256x128xbf16, #tpu.memory_space<vmem>>, vector<1x256x128xbf16>
    %149 = vector.shape_cast %148 : vector<1x256x128xbf16> to vector<256x128xbf16>
    %c1_87 = arith.constant 1 : index
    %c0_88 = arith.constant 0 : index
    %c0_89 = arith.constant 0 : index
    %150 = vector.load %arg10[%c1_87, %c0_88, %c0_89] : memref<3x256x128xbf16, #tpu.memory_space<vmem>>, vector<1x256x128xbf16>
    %151 = vector.shape_cast %150 : vector<1x256x128xbf16> to vector<256x128xbf16>
    %c2_90 = arith.constant 2 : index
    %c0_91 = arith.constant 0 : index
    %c0_92 = arith.constant 0 : index
    %152 = vector.load %arg10[%c2_90, %c0_91, %c0_92] : memref<3x256x128xbf16, #tpu.memory_space<vmem>>, vector<1x256x128xbf16>
    %153 = vector.shape_cast %152 : vector<1x256x128xbf16> to vector<256x128xbf16>
    %154 = arith.truncf %142 : vector<8x256xf32> to vector<8x256xbf16>
    %cst_93 = arith.constant dense<0.000000e+00> : vector<8x128xf32>
    %155 = tpu.matmul %154, %149, %cst_93 {dimension_numbers = #tpu.dot_dimension_numbers<[1], [0], [0], [1], [0, 0, 1, 1], [], []>} : vector<8x256xbf16>, vector<256x128xbf16>, vector<8x128xf32> -> vector<8x128xf32>
    %156 = arith.truncf %136 : vector<8x256xf32> to vector<8x256xbf16>
    %cst_94 = arith.constant dense<0.000000e+00> : vector<8x128xf32>
    %157 = tpu.matmul %156, %151, %cst_94 {dimension_numbers = #tpu.dot_dimension_numbers<[1], [0], [0], [1], [0, 0, 1, 1], [], []>} : vector<8x256xbf16>, vector<256x128xbf16>, vector<8x128xf32> -> vector<8x128xf32>
    %158 = arith.addf %155, %157 : vector<8x128xf32>
    %159 = arith.truncf %147 : vector<8x256xf32> to vector<8x256xbf16>
    %cst_95 = arith.constant dense<0.000000e+00> : vector<8x128xf32>
    %160 = tpu.matmul %159, %153, %cst_95 {dimension_numbers = #tpu.dot_dimension_numbers<[1], [0], [0], [1], [0, 0, 1, 1], [], []>} : vector<8x256xbf16>, vector<256x128xbf16>, vector<8x128xf32> -> vector<8x128xf32>
    %161 = arith.addf %158, %160 : vector<8x128xf32>
    %c0_96 = arith.constant 0 : index
    %c0_97 = arith.constant 0 : index
    %162 = vector.load %arg11[%c0_96, %c0_97] : memref<1x128xf32, #tpu.memory_space<vmem>>, vector<1x128xf32>
    %163 = vector.broadcast %162 : vector<1x128xf32> to vector<8x128xf32>
    %164 = arith.addf %161, %163 : vector<8x128xf32>
    %cst_98 = arith.constant 0.000000e+00 : f32
    %165 = vector.broadcast %cst_98 : f32 to vector<8x128xf32>
    %166 = arith.maximumf %164, %165 : vector<8x128xf32>
    %167 = vector.shape_cast %166 : vector<8x128xf32> to vector<8x1x128xf32>
    %168 = vector.shape_cast %167 : vector<8x1x128xf32> to vector<8x1x128xf32>
    %169 = vector.broadcast %168 : vector<8x1x128xf32> to vector<8x2x128xf32>
    %170 = vector.shape_cast %169 : vector<8x2x128xf32> to vector<16x128xf32>
    %171 = tpu.iota {dimensions = array<i32: 0>} : vector<16x128xi32>
    %c0_i32_99 = arith.constant 0 : i32
    %172 = vector.broadcast %c0_i32_99 : i32 to vector<16x128xi32>
    %173 = arith.cmpi eq, %171, %172 : vector<16x128xi32>
    %c1_i32_100 = arith.constant 1 : i32
    %174 = tpu.dynamic_rotate %170 by %c1_i32_100 dim 0 : vector<16x128xf32>, i32 -> vector<16x128xf32>
    %cst_101 = arith.constant 0.000000e+00 : f32
    %175 = vector.broadcast %cst_101 : f32 to vector<16x128xf32>
    %176 = arith.select %173, %175, %174 : vector<16x128xi1>, vector<16x128xf32>
    %c15_i32_102 = arith.constant 15 : i32
    %177 = vector.broadcast %c15_i32_102 : i32 to vector<16x128xi32>
    %178 = arith.cmpi eq, %171, %177 : vector<16x128xi32>
    %c15_i32_103 = arith.constant 15 : i32
    %179 = tpu.dynamic_rotate %170 by %c15_i32_103 dim 0 : vector<16x128xf32>, i32 -> vector<16x128xf32>
    %cst_104 = arith.constant 0.000000e+00 : f32
    %180 = vector.broadcast %cst_104 : f32 to vector<16x128xf32>
    %181 = arith.select %178, %180, %179 : vector<16x128xi1>, vector<16x128xf32>
    %c0_105 = arith.constant 0 : index
    %c0_106 = arith.constant 0 : index
    %c0_107 = arith.constant 0 : index
    %182 = vector.load %arg12[%c0_105, %c0_106, %c0_107] : memref<3x128x64xbf16, #tpu.memory_space<vmem>>, vector<1x128x64xbf16>
    %183 = vector.shape_cast %182 : vector<1x128x64xbf16> to vector<128x64xbf16>
    %c1_108 = arith.constant 1 : index
    %c0_109 = arith.constant 0 : index
    %c0_110 = arith.constant 0 : index
    %184 = vector.load %arg12[%c1_108, %c0_109, %c0_110] : memref<3x128x64xbf16, #tpu.memory_space<vmem>>, vector<1x128x64xbf16>
    %185 = vector.shape_cast %184 : vector<1x128x64xbf16> to vector<128x64xbf16>
    %c2_111 = arith.constant 2 : index
    %c0_112 = arith.constant 0 : index
    %c0_113 = arith.constant 0 : index
    %186 = vector.load %arg12[%c2_111, %c0_112, %c0_113] : memref<3x128x64xbf16, #tpu.memory_space<vmem>>, vector<1x128x64xbf16>
    %187 = vector.shape_cast %186 : vector<1x128x64xbf16> to vector<128x64xbf16>
    %188 = arith.truncf %176 : vector<16x128xf32> to vector<16x128xbf16>
    %cst_114 = arith.constant dense<0.000000e+00> : vector<16x64xf32>
    %189 = tpu.matmul %188, %183, %cst_114 {dimension_numbers = #tpu.dot_dimension_numbers<[1], [0], [0], [1], [0, 0, 1, 1], [], []>} : vector<16x128xbf16>, vector<128x64xbf16>, vector<16x64xf32> -> vector<16x64xf32>
    %190 = arith.truncf %170 : vector<16x128xf32> to vector<16x128xbf16>
    %cst_115 = arith.constant dense<0.000000e+00> : vector<16x64xf32>
    %191 = tpu.matmul %190, %185, %cst_115 {dimension_numbers = #tpu.dot_dimension_numbers<[1], [0], [0], [1], [0, 0, 1, 1], [], []>} : vector<16x128xbf16>, vector<128x64xbf16>, vector<16x64xf32> -> vector<16x64xf32>
    %192 = arith.addf %189, %191 : vector<16x64xf32>
    %193 = arith.truncf %181 : vector<16x128xf32> to vector<16x128xbf16>
    %cst_116 = arith.constant dense<0.000000e+00> : vector<16x64xf32>
    %194 = tpu.matmul %193, %187, %cst_116 {dimension_numbers = #tpu.dot_dimension_numbers<[1], [0], [0], [1], [0, 0, 1, 1], [], []>} : vector<16x128xbf16>, vector<128x64xbf16>, vector<16x64xf32> -> vector<16x64xf32>
    %195 = arith.addf %192, %194 : vector<16x64xf32>
    %c0_117 = arith.constant 0 : index
    %c0_118 = arith.constant 0 : index
    %196 = vector.load %arg13[%c0_117, %c0_118] : memref<1x64xf32, #tpu.memory_space<vmem>>, vector<1x64xf32>
    %197 = vector.broadcast %196 : vector<1x64xf32> to vector<16x64xf32>
    %198 = arith.addf %195, %197 : vector<16x64xf32>
    %cst_119 = arith.constant 0.000000e+00 : f32
    %199 = vector.broadcast %cst_119 : f32 to vector<16x64xf32>
    %200 = arith.maximumf %198, %199 : vector<16x64xf32>
    %201 = vector.shape_cast %200 : vector<16x64xf32> to vector<16x1x64xf32>
    %202 = vector.shape_cast %201 : vector<16x1x64xf32> to vector<16x1x64xf32>
    %203 = vector.broadcast %202 : vector<16x1x64xf32> to vector<16x2x64xf32>
    %204 = vector.shape_cast %203 : vector<16x2x64xf32> to vector<32x64xf32>
    %205 = tpu.iota {dimensions = array<i32: 0>} : vector<32x64xi32>
    %c0_i32_120 = arith.constant 0 : i32
    %206 = vector.broadcast %c0_i32_120 : i32 to vector<32x64xi32>
    %207 = arith.cmpi eq, %205, %206 : vector<32x64xi32>
    %c1_i32_121 = arith.constant 1 : i32
    %208 = tpu.dynamic_rotate %204 by %c1_i32_121 dim 0 : vector<32x64xf32>, i32 -> vector<32x64xf32>
    %cst_122 = arith.constant 0.000000e+00 : f32
    %209 = vector.broadcast %cst_122 : f32 to vector<32x64xf32>
    %210 = arith.select %207, %209, %208 : vector<32x64xi1>, vector<32x64xf32>
    %c31_i32_123 = arith.constant 31 : i32
    %211 = vector.broadcast %c31_i32_123 : i32 to vector<32x64xi32>
    %212 = arith.cmpi eq, %205, %211 : vector<32x64xi32>
    %c31_i32_124 = arith.constant 31 : i32
    %213 = tpu.dynamic_rotate %204 by %c31_i32_124 dim 0 : vector<32x64xf32>, i32 -> vector<32x64xf32>
    %cst_125 = arith.constant 0.000000e+00 : f32
    %214 = vector.broadcast %cst_125 : f32 to vector<32x64xf32>
    %215 = arith.select %212, %214, %213 : vector<32x64xi1>, vector<32x64xf32>
    %c0_126 = arith.constant 0 : index
    %c0_127 = arith.constant 0 : index
    %c0_128 = arith.constant 0 : index
    %216 = vector.load %arg14[%c0_126, %c0_127, %c0_128] : memref<3x64x32xbf16, #tpu.memory_space<vmem>>, vector<1x64x32xbf16>
    %217 = vector.shape_cast %216 : vector<1x64x32xbf16> to vector<64x32xbf16>
    %c1_129 = arith.constant 1 : index
    %c0_130 = arith.constant 0 : index
    %c0_131 = arith.constant 0 : index
    %218 = vector.load %arg14[%c1_129, %c0_130, %c0_131] : memref<3x64x32xbf16, #tpu.memory_space<vmem>>, vector<1x64x32xbf16>
    %219 = vector.shape_cast %218 : vector<1x64x32xbf16> to vector<64x32xbf16>
    %c2_132 = arith.constant 2 : index
    %c0_133 = arith.constant 0 : index
    %c0_134 = arith.constant 0 : index
    %220 = vector.load %arg14[%c2_132, %c0_133, %c0_134] : memref<3x64x32xbf16, #tpu.memory_space<vmem>>, vector<1x64x32xbf16>
    %221 = vector.shape_cast %220 : vector<1x64x32xbf16> to vector<64x32xbf16>
    %222 = arith.truncf %210 : vector<32x64xf32> to vector<32x64xbf16>
    %cst_135 = arith.constant dense<0.000000e+00> : vector<32x32xf32>
    %223 = tpu.matmul %222, %217, %cst_135 {dimension_numbers = #tpu.dot_dimension_numbers<[1], [0], [0], [1], [0, 0, 1, 1], [], []>} : vector<32x64xbf16>, vector<64x32xbf16>, vector<32x32xf32> -> vector<32x32xf32>
    %224 = arith.truncf %204 : vector<32x64xf32> to vector<32x64xbf16>
    %cst_136 = arith.constant dense<0.000000e+00> : vector<32x32xf32>
    %225 = tpu.matmul %224, %219, %cst_136 {dimension_numbers = #tpu.dot_dimension_numbers<[1], [0], [0], [1], [0, 0, 1, 1], [], []>} : vector<32x64xbf16>, vector<64x32xbf16>, vector<32x32xf32> -> vector<32x32xf32>
    %226 = arith.addf %223, %225 : vector<32x32xf32>
    %227 = arith.truncf %215 : vector<32x64xf32> to vector<32x64xbf16>
    %cst_137 = arith.constant dense<0.000000e+00> : vector<32x32xf32>
    %228 = tpu.matmul %227, %221, %cst_137 {dimension_numbers = #tpu.dot_dimension_numbers<[1], [0], [0], [1], [0, 0, 1, 1], [], []>} : vector<32x64xbf16>, vector<64x32xbf16>, vector<32x32xf32> -> vector<32x32xf32>
    %229 = arith.addf %226, %228 : vector<32x32xf32>
    %c0_138 = arith.constant 0 : index
    %c0_139 = arith.constant 0 : index
    %230 = vector.load %arg15[%c0_138, %c0_139] : memref<1x32xf32, #tpu.memory_space<vmem>>, vector<1x32xf32>
    %231 = vector.broadcast %230 : vector<1x32xf32> to vector<32x32xf32>
    %232 = arith.addf %229, %231 : vector<32x32xf32>
    %cst_140 = arith.constant 0.000000e+00 : f32
    %233 = vector.broadcast %cst_140 : f32 to vector<32x32xf32>
    %234 = arith.maximumf %232, %233 : vector<32x32xf32>
    %235 = vector.shape_cast %234 : vector<32x32xf32> to vector<32x1x32xf32>
    %236 = vector.shape_cast %235 : vector<32x1x32xf32> to vector<32x1x32xf32>
    %237 = vector.broadcast %236 : vector<32x1x32xf32> to vector<32x2x32xf32>
    %238 = vector.shape_cast %237 : vector<32x2x32xf32> to vector<64x32xf32>
    %239 = tpu.iota {dimensions = array<i32: 0>} : vector<64x32xi32>
    %c0_i32_141 = arith.constant 0 : i32
    %240 = vector.broadcast %c0_i32_141 : i32 to vector<64x32xi32>
    %241 = arith.cmpi eq, %239, %240 : vector<64x32xi32>
    %c1_i32_142 = arith.constant 1 : i32
    %242 = tpu.dynamic_rotate %238 by %c1_i32_142 dim 0 : vector<64x32xf32>, i32 -> vector<64x32xf32>
    %cst_143 = arith.constant 0.000000e+00 : f32
    %243 = vector.broadcast %cst_143 : f32 to vector<64x32xf32>
    %244 = arith.select %241, %243, %242 : vector<64x32xi1>, vector<64x32xf32>
    %c63_i32_144 = arith.constant 63 : i32
    %245 = vector.broadcast %c63_i32_144 : i32 to vector<64x32xi32>
    %246 = arith.cmpi eq, %239, %245 : vector<64x32xi32>
    %c63_i32_145 = arith.constant 63 : i32
    %247 = tpu.dynamic_rotate %238 by %c63_i32_145 dim 0 : vector<64x32xf32>, i32 -> vector<64x32xf32>
    %cst_146 = arith.constant 0.000000e+00 : f32
    %248 = vector.broadcast %cst_146 : f32 to vector<64x32xf32>
    %249 = arith.select %246, %248, %247 : vector<64x32xi1>, vector<64x32xf32>
    %c0_147 = arith.constant 0 : index
    %c0_148 = arith.constant 0 : index
    %c0_149 = arith.constant 0 : index
    %250 = vector.load %arg16[%c0_147, %c0_148, %c0_149] : memref<3x1x32xf32, #tpu.memory_space<vmem>>, vector<1x1x32xf32>
    %251 = vector.shape_cast %250 : vector<1x1x32xf32> to vector<1x32xf32>
    %252 = vector.broadcast %251 : vector<1x32xf32> to vector<64x32xf32>
    %253 = arith.mulf %244, %252 : vector<64x32xf32>
    %c1_150 = arith.constant 1 : index
    %c0_151 = arith.constant 0 : index
    %c0_152 = arith.constant 0 : index
    %254 = vector.load %arg16[%c1_150, %c0_151, %c0_152] : memref<3x1x32xf32, #tpu.memory_space<vmem>>, vector<1x1x32xf32>
    %255 = vector.shape_cast %254 : vector<1x1x32xf32> to vector<1x32xf32>
    %256 = vector.broadcast %255 : vector<1x32xf32> to vector<64x32xf32>
    %257 = arith.mulf %238, %256 : vector<64x32xf32>
    %258 = arith.addf %253, %257 : vector<64x32xf32>
    %c2_153 = arith.constant 2 : index
    %c0_154 = arith.constant 0 : index
    %c0_155 = arith.constant 0 : index
    %259 = vector.load %arg16[%c2_153, %c0_154, %c0_155] : memref<3x1x32xf32, #tpu.memory_space<vmem>>, vector<1x1x32xf32>
    %260 = vector.shape_cast %259 : vector<1x1x32xf32> to vector<1x32xf32>
    %261 = vector.broadcast %260 : vector<1x32xf32> to vector<64x32xf32>
    %262 = arith.mulf %249, %261 : vector<64x32xf32>
    %263 = arith.addf %258, %262 : vector<64x32xf32>
    %cst_156 = arith.constant dense<0.000000e+00> : vector<64xf32>
    %264 = vector.multi_reduction <add>, %263, %cst_156 [1] : vector<64x32xf32> to vector<64xf32>
    %265 = vector.shape_cast %264 : vector<64xf32> to vector<64x1xf32>
    %c0_157 = arith.constant 0 : index
    %c0_158 = arith.constant 0 : index
    %266 = vector.load %arg17[%c0_157, %c0_158] : memref<1x1xf32, #tpu.memory_space<vmem>>, vector<1x1xf32>
    %267 = vector.broadcast %266 : vector<1x1xf32> to vector<64x1xf32>
    %268 = arith.addf %265, %267 : vector<64x1xf32>
    %269 = arith.negf %268 : vector<64x1xf32>
    %270 = math.exp %269 : vector<64x1xf32>
    %cst_159 = arith.constant 1.000000e+00 : f32
    %271 = vector.broadcast %cst_159 : f32 to vector<64x1xf32>
    %272 = arith.addf %271, %270 : vector<64x1xf32>
    %273 = arith.divf %271, %272 : vector<64x1xf32>
    %c0_160 = arith.constant 0 : index
    %c0_161 = arith.constant 0 : index
    %c0_162 = arith.constant 0 : index
    %274 = vector.load %arg18[%c0_160, %c0_161, %c0_162] : memref<1x64x1xf32, #tpu.memory_space<vmem>>, vector<1x64x1xf32>
    %275 = vector.shape_cast %274 : vector<1x64x1xf32> to vector<64x1xf32>
    %276 = vector.shape_cast %273 : vector<64x1xf32> to vector<1x64x1xf32>
    tpu.vector_store %arg18[%c0_160, %c0_161, %c0_162], %276 {strides = array<i32>} : memref<1x64x1xf32, #tpu.memory_space<vmem>>, vector<1x64x1xf32>,
    return
  }
  func.func @transform_0(%arg0: i32) -> (i32, i32, i32) {
    %c0_i32 = arith.constant 0 : i32
    %c0_i32_0 = arith.constant 0 : i32
    %c0_i32_1 = arith.constant 0 : i32
    return %arg0, %c0_i32, %c0_i32_0 : i32, i32, i32
  }
  func.func @transform_1(%arg0: i32) -> (i32, i32, i32) {
    %c0_i32 = arith.constant 0 : i32
    %c0_i32_0 = arith.constant 0 : i32
    %c0_i32_1 = arith.constant 0 : i32
    %c0_i32_2 = arith.constant 0 : i32
    return %c0_i32, %c0_i32_0, %c0_i32_1 : i32, i32, i32
  }
  func.func @transform_2(%arg0: i32) -> (i32, i32) {
    %c0_i32 = arith.constant 0 : i32
    %c0_i32_0 = arith.constant 0 : i32
    %c0_i32_1 = arith.constant 0 : i32
    return %c0_i32, %c0_i32_0 : i32, i32
  }
  func.func @transform_3(%arg0: i32) -> (i32, i32, i32) {
    %c0_i32 = arith.constant 0 : i32
    %c0_i32_0 = arith.constant 0 : i32
    %c0_i32_1 = arith.constant 0 : i32
    %c0_i32_2 = arith.constant 0 : i32
    return %c0_i32, %c0_i32_0, %c0_i32_1 : i32, i32, i32
  }
  func.func @transform_4(%arg0: i32) -> (i32, i32) {
    %c0_i32 = arith.constant 0 : i32
    %c0_i32_0 = arith.constant 0 : i32
    %c0_i32_1 = arith.constant 0 : i32
    return %c0_i32, %c0_i32_0 : i32, i32
  }
  func.func @transform_5(%arg0: i32) -> (i32, i32, i32) {
    %c0_i32 = arith.constant 0 : i32
    %c0_i32_0 = arith.constant 0 : i32
    %c0_i32_1 = arith.constant 0 : i32
    %c0_i32_2 = arith.constant 0 : i32
    return %c0_i32, %c0_i32_0, %c0_i32_1 : i32, i32, i32
  }
  func.func @transform_6(%arg0: i32) -> (i32, i32) {
    %c0_i32 = arith.constant 0 : i32
    %c0_i32_0 = arith.constant 0 : i32
    %c0_i32_1 = arith.constant 0 : i32
    return %c0_i32, %c0_i32_0 : i32, i32
  }
  func.func @transform_7(%arg0: i32) -> (i32, i32, i32) {
    %c0_i32 = arith.constant 0 : i32
    %c0_i32_0 = arith.constant 0 : i32
    %c0_i32_1 = arith.constant 0 : i32
    %c0_i32_2 = arith.constant 0 : i32
    return %c0_i32, %c0_i32_0, %c0_i32_1 : i32, i32, i32
  }
  func.func @transform_8(%arg0: i32) -> (i32, i32) {
    %c0_i32 = arith.constant 0 : i32
    %c0_i32_0 = arith.constant 0 : i32
    %c0_i32_1 = arith.constant 0 : i32
    return %c0_i32, %c0_i32_0 : i32, i32
  }
  func.func @transform_9(%arg0: i32) -> (i32, i32, i32) {
    %c0_i32 = arith.constant 0 : i32
    %c0_i32_0 = arith.constant 0 : i32
    %c0_i32_1 = arith.constant 0 : i32
    %c0_i32_2 = arith.constant 0 : i32
    return %c0_i32, %c0_i32_0, %c0_i32_1 : i32, i32, i32
  }
  func.func @transform_10(%arg0: i32) -> (i32, i32) {
    %c0_i32 = arith.constant 0 : i32
    %c0_i32_0 = arith.constant 0 : i32
    %c0_i32_1 = arith.constant 0 : i32
    return %c0_i32, %c0_i32_0 : i32, i32
  }
  func.func @transform_11(%arg0: i32) -> (i32, i32, i32) {
    %c0_i32 = arith.constant 0 : i32
    %c0_i32_0 = arith.constant 0 : i32
    %c0_i32_1 = arith.constant 0 : i32
    %c0_i32_2 = arith.constant 0 : i32
    return %c0_i32, %c0_i32_0, %c0_i32_1 : i32, i32, i32
  }
  func.func @transform_12(%arg0: i32) -> (i32, i32) {
    %c0_i32 = arith.constant 0 : i32
    %c0_i32_0 = arith.constant 0 : i32
    %c0_i32_1 = arith.constant 0 : i32
    return %c0_i32, %c0_i32_0 : i32, i32
  }
  func.func @transform_13(%arg0: i32) -> (i32, i32, i32) {
    %c0_i32 = arith.constant 0 : i32
    %c0_i32_0 = arith.constant 0 : i32
    %c0_i32_1 = arith.constant 0 : i32
    %c0_i32_2 = arith.constant 0 : i32
    return %c0_i32, %c0_i32_0, %c0_i32_1 : i32, i32, i32
  }
  func.func @transform_14(%arg0: i32) -> (i32, i32) {
    %c0_i32 = arith.constant 0 : i32
    %c0_i32_0 = arith.constant 0 : i32
    %c0_i32_1 = arith.constant 0 : i32
    return %c0_i32, %c0_i32_0 : i32, i32
  }
  func.func @transform_15(%arg0: i32) -> (i32, i32, i32) {
    %c0_i32 = arith.constant 0 : i32
    %c0_i32_0 = arith.constant 0 : i32
    %c0_i32_1 = arith.constant 0 : i32
    %c0_i32_2 = arith.constant 0 : i32
    return %c0_i32, %c0_i32_0, %c0_i32_1 : i32, i32, i32
  }
  func.func @transform_16(%arg0: i32) -> (i32, i32) {
    %c0_i32 = arith.constant 0 : i32
    %c0_i32_0 = arith.constant 0 : i32
    %c0_i32_1 = arith.constant 0 : i32
    return %c0_i32, %c0_i32_0 : i32, i32
  }
  func.func @transform_17(%arg0: i32) -> (i32, i32, i32) {
    %c0_i32 = arith.constant 0 : i32
    %c0_i32_0 = arith.constant 0 : i32
    %c0_i32_1 = arith.constant 0 : i32
    return %arg0, %c0_i32, %c0_i32_0 : i32, i32, i32
  }
}

</mosaic_0001>

<llo_original>
// kernel: tpu_custom_call.1
$region0: #{tpu_custom_call.1}
  #allocation0 [shape = 'u32[]', space=smem, size = 0x4, offset = 0x4, fixed_abs, tag = 'smem constant byte address 0x4 - core index']
  #allocation1 [shape = 'u32[144,128]{1,0:T(1,128)}', space=vmem, size = 0x12000, scoped, tag = 'internal scratch']
  #allocation2 [shape = 'f32[1,1]{1,0:T(1,128)S(1)}', space=vmem, size = 0x200, scoped, tag = 'scoped memory for tpu_custom_call.1']
  %s0 = inlined_call_operand.vmem [shape: f32[2,64,1], index: 0, kind: input, shape index: {}]
  %s1 = inlined_call_operand.vmem [shape: f32[3,1,32], index: 1, kind: input, shape index: {}]
  %s2 = inlined_call_operand.vmem [shape: f32[1,32], index: 2, kind: input, shape index: {}]
  %s3 = inlined_call_operand.hbm [shape: bf16[3,32,64], index: 3, kind: input, shape index: {}]
  %s4 = inlined_call_operand.vmem [shape: f32[1,64], index: 4, kind: input, shape index: {}]
  %s5 = inlined_call_operand.vmem [shape: bf16[3,64,128], index: 5, kind: input, shape index: {}]
  %s6 = inlined_call_operand.vmem [shape: f32[1,128], index: 6, kind: input, shape index: {}]
  %s7 = inlined_call_operand.vmem [shape: bf16[3,128,256], index: 7, kind: input, shape index: {}]
  %s8 = inlined_call_operand.vmem [shape: f32[1,256], index: 8, kind: input, shape index: {}]
  %s9 = inlined_call_operand.hbm [shape: bf16[3,256,128], index: 9, kind: input, shape index: {}]
  %s10 = inlined_call_operand.vmem [shape: f32[1,128], index: 10, kind: input, shape index: {}]
  %s11 = inlined_call_operand.vmem [shape: bf16[3,128,64], index: 11, kind: input, shape index: {}]
  %s12 = inlined_call_operand.vmem [shape: f32[1,64], index: 12, kind: input, shape index: {}]
  %s13 = inlined_call_operand.vmem [shape: bf16[3,64,32], index: 13, kind: input, shape index: {}]
  %s14 = inlined_call_operand.vmem [shape: f32[1,32], index: 14, kind: input, shape index: {}]
  %s15 = inlined_call_operand.vmem [shape: f32[3,1,32], index: 15, kind: input, shape index: {}]
  %s16 = inlined_call_operand.<no memory space> [shape: f32[1,1], index: 16, kind: input, shape index: {}]
  %s17 = inlined_call_operand.vmem [shape: f32[2,64,1], index: 17, kind: output, shape index: {}]
  %s18 = sld [smem:[#allocation0]]
  $region109: #{tpu_custom_call.1} parent=0
    _
  %s20 = ssub.s32 1, %s18
  %s21 = scalar_select 0, %s20, %s18
  %v22 = vstv %s16
  %23 = vst [vmem:[#allocation2] sm:$0x1] %v22
  $region1: #{tpu_custom_call.1} parent=0
    #allocation3 [shape = 'u8[24576]{0}', space=vmem, size = 0x6000, scoped, tag = 'input window, operand 3, single buffered']
    #allocation4 [shape = 's32[2]{0}', space=sflag, size = 0x8, scoped, tag = 'scoped memory for tpu_custom_call.1']
    #allocation5 [shape = 'u8[196608]{0}', space=vmem, size = 0x30000, scoped, tag = 'input window, operand 9, single buffered']
    #allocation6 [shape = 's32[1]{0}', space=sflag, size = 0x4, scoped, tag = 'scoped memory for tpu_custom_call.1']
    %24 = vsyncpa [#allocation4], 0
    %25 = vsyncpa [#allocation6], 0
    loop: start=0, step=1, limit=4
    $region2: #{tpu_custom_call.1} parent=1 // loop_pre_header
      _
    $region3: #{tpu_custom_call.1} parent=1 // loop_header
      %s27 = sphi 0, %s31
      %p28 = scmp.ge.s32.totalorder %s27, 4
      %s37 = sphi 0, %s39
      %s40 = sphi 0, %s37
      %s41 = sphi 0, %s40
      %s57 = sphi 0, %s41
      %s61 = sphi 0, %s61
      %s63 = sphi 0, %s61
      %s64 = sphi 0, %s63
      %s78 = sphi 0, %s64
      %s82 = sphi 0, %s82
      %s84 = sphi 0, %s82
      %s85 = sphi 0, %s84
      %s99 = sphi 0, %s85
      %s103 = sphi 0, %s103
      %s105 = sphi 0, %s103
      %s106 = sphi 0, %s105
      %s120 = sphi 0, %s106
      %s124 = sphi 0, %s124
      %s126 = sphi 0, %s124
      %s127 = sphi 0, %s126
      %s141 = sphi 0, %s127
      %s145 = sphi 0, %s145
      %s147 = sphi 0, %s145
      %s148 = sphi 0, %s147
      %s162 = sphi 0, %s148
      %s166 = sphi 0, %s166
      %s168 = sphi 0, %s166
      %s169 = sphi 0, %s168
      %s183 = sphi 0, %s169
      %s187 = sphi 0, %s187
      %s189 = sphi 0, %s187
      %s190 = sphi 0, %s189
      %s204 = sphi 0, %s190
      %s208 = sphi 0, %s208
      %s210 = sphi 0, %s208
      %s211 = sphi 0, %s210
      %s225 = sphi 0, %s211
      %s229 = sphi 0, %s229
      %s231 = sphi 0, %s229
      %s232 = sphi 0, %s231
      %s246 = sphi 0, %s232
      %s250 = sphi 0, %s250
      %s252 = sphi 0, %s250
      %s253 = sphi 0, %s252
      %s267 = sphi 0, %s253
      %s271 = sphi 0, %s271
      %s273 = sphi 0, %s271
      %s274 = sphi 0, %s273
      %s288 = sphi 0, %s274
      %s292 = sphi 0, %s292
      %s294 = sphi 0, %s292
      %s295 = sphi 0, %s294
      %s309 = sphi 0, %s295
      %s313 = sphi 0, %s313
      %s315 = sphi 0, %s313
      %s316 = sphi 0, %s315
      %s330 = sphi 0, %s316
      %s334 = sphi 0, %s334
      %s336 = sphi 0, %s334
      %s337 = sphi 0, %s336
      %s351 = sphi 0, %s337
      %s355 = sphi 0, %s355
      %s357 = sphi 0, %s355
      %s358 = sphi 0, %s357
      %s372 = sphi 0, %s358
      %s376 = sphi 0, %s376
      %s378 = sphi 0, %s376
      %s379 = sphi 0, %s378
      %s393 = sphi 0, %s379
      %s399 = sphi 0, %s401
      %s402 = sphi 0, %s399
      %s403 = sphi 0, %s402
      %s419 = sphi 0, %s403
    $region4: #{tpu_custom_call.1} parent=1 // loop_header_branch
      %30 = sbr.rel (%p28) target = $region8
    $region5: #{tpu_custom_call.1} parent=1 // loop_body
      %s32 = ssub.s32 %s27, 1
      %s33 = ssub.s32 %s27, 2
      %s34 = sadd.s32 %s27, 1
      %s35 = ssub.s32 %s27, %s34
      %p36 = scmp.eq.s32.totalorder %s35, 0
      %s38 = sadd.s32 %s37, 1
      %s39 = scalar_select %p36, %s37, %s38
      %p42 = pneg %p36
      %p43 = scmp.eq.s32.totalorder %s27, 1
      %p44 = por %p42, %p43
      %p45 = scmp.ne.s32.totalorder %s37, %s40
      %p46 = scmp.eq.s32.totalorder %s27, 0
      %p47 = por %p45, %p46
      %p48 = scmp.ne.s32.totalorder %s37, %s40
      %p49 = scmp.eq.s32.totalorder %s32, 1
      %p50 = por %p48, %p49
      %p51 = scmp.ne.s32.totalorder %s40, %s41
      %p52 = scmp.eq.s32.totalorder %s32, 0
      %p53 = por %p51, %p52
      %p54 = scmp.ne.s32.totalorder %s40, %s41
      %p55 = scmp.eq.s32.totalorder %s33, 1
      %p56 = por %p54, %p55
      %p58 = scmp.ne.s32.totalorder %s41, %s57
      %p59 = scmp.eq.s32.totalorder %s33, 0
      %p60 = por %p58, %p59
      %s62 = sadd.s32 %s61, 1
      %p65 = scmp.eq.s32.totalorder %s27, 1
      %p66 = scmp.ne.s32.totalorder %s61, %s63
      %p67 = scmp.eq.s32.totalorder %s27, 0
      %p68 = por %p66, %p67
      %p69 = scmp.ne.s32.totalorder %s61, %s63
      %p70 = scmp.eq.s32.totalorder %s32, 1
      %p71 = por %p69, %p70
      %p72 = scmp.ne.s32.totalorder %s63, %s64
      %p73 = scmp.eq.s32.totalorder %s32, 0
      %p74 = por %p72, %p73
      %p75 = scmp.ne.s32.totalorder %s63, %s64
      %p76 = scmp.eq.s32.totalorder %s33, 1
      %p77 = por %p75, %p76
      %p79 = scmp.ne.s32.totalorder %s64, %s78
      %p80 = scmp.eq.s32.totalorder %s33, 0
      %p81 = por %p79, %p80
      %s83 = sadd.s32 %s82, 1
      %p86 = scmp.eq.s32.totalorder %s27, 1
      %p87 = scmp.ne.s32.totalorder %s82, %s84
      %p88 = scmp.eq.s32.totalorder %s27, 0
      %p89 = por %p87, %p88
      %p90 = scmp.ne.s32.totalorder %s82, %s84
      %p91 = scmp.eq.s32.totalorder %s32, 1
      %p92 = por %p90, %p91
      %p93 = scmp.ne.s32.totalorder %s84, %s85
      %p94 = scmp.eq.s32.totalorder %s32, 0
      %p95 = por %p93, %p94
      %p96 = scmp.ne.s32.totalorder %s84, %s85
      %p97 = scmp.eq.s32.totalorder %s33, 1
      %p98 = por %p96, %p97
      %p100 = scmp.ne.s32.totalorder %s85, %s99
      %p101 = scmp.eq.s32.totalorder %s33, 0
      %p102 = por %p100, %p101
      %s104 = sadd.s32 %s103, 1
      %p107 = scmp.eq.s32.totalorder %s27, 1
      %p108 = scmp.ne.s32.totalorder %s103, %s105
      %p109 = scmp.eq.s32.totalorder %s27, 0
      %p110 = por %p108, %p109
      %p111 = scmp.ne.s32.totalorder %s103, %s105
      %p112 = scmp.eq.s32.totalorder %s32, 1
      %p113 = por %p111, %p112
      %p114 = scmp.ne.s32.totalorder %s105, %s106
      %p115 = scmp.eq.s32.totalorder %s32, 0
      %p116 = por %p114, %p115
      %p117 = scmp.ne.s32.totalorder %s105, %s106
      %p118 = scmp.eq.s32.totalorder %s33, 1
      %p119 = por %p117, %p118
      %p121 = scmp.ne.s32.totalorder %s106, %s120
      %p122 = scmp.eq.s32.totalorder %s33, 0
      %p123 = por %p121, %p122
      %s125 = sadd.s32 %s124, 1
      %p128 = scmp.eq.s32.totalorder %s27, 1
      %p129 = scmp.ne.s32.totalorder %s124, %s126
      %p130 = scmp.eq.s32.totalorder %s27, 0
      %p131 = por %p129, %p130
      %p132 = scmp.ne.s32.totalorder %s124, %s126
      %p133 = scmp.eq.s32.totalorder %s32, 1
      %p134 = por %p132, %p133
      %p135 = scmp.ne.s32.totalorder %s126, %s127
      %p136 = scmp.eq.s32.totalorder %s32, 0
      %p137 = por %p135, %p136
      %p138 = scmp.ne.s32.totalorder %s126, %s127
      %p139 = scmp.eq.s32.totalorder %s33, 1
      %p140 = por %p138, %p139
      %p142 = scmp.ne.s32.totalorder %s127, %s141
      %p143 = scmp.eq.s32.totalorder %s33, 0
      %p144 = por %p142, %p143
      %s146 = sadd.s32 %s145, 1
      %p149 = scmp.eq.s32.totalorder %s27, 1
      %p150 = scmp.ne.s32.totalorder %s145, %s147
      %p151 = scmp.eq.s32.totalorder %s27, 0
      %p152 = por %p150, %p151
      %p153 = scmp.ne.s32.totalorder %s145, %s147
      %p154 = scmp.eq.s32.totalorder %s32, 1
      %p155 = por %p153, %p154
      %p156 = scmp.ne.s32.totalorder %s147, %s148
      %p157 = scmp.eq.s32.totalorder %s32, 0
      %p158 = por %p156, %p157
      %p159 = scmp.ne.s32.totalorder %s147, %s148
      %p160 = scmp.eq.s32.totalorder %s33, 1
      %p161 = por %p159, %p160
      %p163 = scmp.ne.s32.totalorder %s148, %s162
      %p164 = scmp.eq.s32.totalorder %s33, 0
      %p165 = por %p163, %p164
      %s167 = sadd.s32 %s166, 1
      %p170 = scmp.eq.s32.totalorder %s27, 1
      %p171 = scmp.ne.s32.totalorder %s166, %s168
      %p172 = scmp.eq.s32.totalorder %s27, 0
      %p173 = por %p171, %p172
      %p174 = scmp.ne.s32.totalorder %s166, %s168
      %p175 = scmp.eq.s32.totalorder %s32, 1
      %p176 = por %p174, %p175
      %p177 = scmp.ne.s32.totalorder %s168, %s169
      %p178 = scmp.eq.s32.totalorder %s32, 0
      %p179 = por %p177, %p178
      %p180 = scmp.ne.s32.totalorder %s168, %s169
      %p181 = scmp.eq.s32.totalorder %s33, 1
      %p182 = por %p180, %p181
      %p184 = scmp.ne.s32.totalorder %s169, %s183
      %p185 = scmp.eq.s32.totalorder %s33, 0
      %p186 = por %p184, %p185
      %s188 = sadd.s32 %s187, 1
      %p191 = scmp.eq.s32.totalorder %s27, 1
      %p192 = scmp.ne.s32.totalorder %s187, %s189
      %p193 = scmp.eq.s32.totalorder %s27, 0
      %p194 = por %p192, %p193
      %p195 = scmp.ne.s32.totalorder %s187, %s189
      %p196 = scmp.eq.s32.totalorder %s32, 1
      %p197 = por %p195, %p196
      %p198 = scmp.ne.s32.totalorder %s189, %s190
      %p199 = scmp.eq.s32.totalorder %s32, 0
      %p200 = por %p198, %p199
      %p201 = scmp.ne.s32.totalorder %s189, %s190
      %p202 = scmp.eq.s32.totalorder %s33, 1
      %p203 = por %p201, %p202
      %p205 = scmp.ne.s32.totalorder %s190, %s204
      %p206 = scmp.eq.s32.totalorder %s33, 0
      %p207 = por %p205, %p206
      %s209 = sadd.s32 %s208, 1
      %p212 = scmp.eq.s32.totalorder %s27, 1
      %p213 = scmp.ne.s32.totalorder %s208, %s210
      %p214 = scmp.eq.s32.totalorder %s27, 0
      %p215 = por %p213, %p214
      %p216 = scmp.ne.s32.totalorder %s208, %s210
      %p217 = scmp.eq.s32.totalorder %s32, 1
      %p218 = por %p216, %p217
      %p219 = scmp.ne.s32.totalorder %s210, %s211
      %p220 = scmp.eq.s32.totalorder %s32, 0
      %p221 = por %p219, %p220
      %p222 = scmp.ne.s32.totalorder %s210, %s211
      %p223 = scmp.eq.s32.totalorder %s33, 1
      %p224 = por %p222, %p223
      %p226 = scmp.ne.s32.totalorder %s211, %s225
      %p227 = scmp.eq.s32.totalorder %s33, 0
      %p228 = por %p226, %p227
      %s230 = sadd.s32 %s229, 1
      %p233 = scmp.eq.s32.totalorder %s27, 1
      %p234 = scmp.ne.s32.totalorder %s229, %s231
      %p235 = scmp.eq.s32.totalorder %s27, 0
      %p236 = por %p234, %p235
      %p237 = scmp.ne.s32.totalorder %s229, %s231
      %p238 = scmp.eq.s32.totalorder %s32, 1
      %p239 = por %p237, %p238
      %p240 = scmp.ne.s32.totalorder %s231, %s232
      %p241 = scmp.eq.s32.totalorder %s32, 0
      %p242 = por %p240, %p241
      %p243 = scmp.ne.s32.totalorder %s231, %s232
      %p244 = scmp.eq.s32.totalorder %s33, 1
      %p245 = por %p243, %p244
      %p247 = scmp.ne.s32.totalorder %s232, %s246
      %p248 = scmp.eq.s32.totalorder %s33, 0
      %p249 = por %p247, %p248
      %s251 = sadd.s32 %s250, 1
      %p254 = scmp.eq.s32.totalorder %s27, 1
      %p255 = scmp.ne.s32.totalorder %s250, %s252
      %p256 = scmp.eq.s32.totalorder %s27, 0
      %p257 = por %p255, %p256
      %p258 = scmp.ne.s32.totalorder %s250, %s252
      %p259 = scmp.eq.s32.totalorder %s32, 1
      %p260 = por %p258, %p259
      %p261 = scmp.ne.s32.totalorder %s252, %s253
      %p262 = scmp.eq.s32.totalorder %s32, 0
      %p263 = por %p261, %p262
      %p264 = scmp.ne.s32.totalorder %s252, %s253
      %p265 = scmp.eq.s32.totalorder %s33, 1
      %p266 = por %p264, %p265
      %p268 = scmp.ne.s32.totalorder %s253, %s267
      %p269 = scmp.eq.s32.totalorder %s33, 0
      %p270 = por %p268, %p269
      %s272 = sadd.s32 %s271, 1
      %p275 = scmp.eq.s32.totalorder %s27, 1
      %p276 = scmp.ne.s32.totalorder %s271, %s273
      %p277 = scmp.eq.s32.totalorder %s27, 0
      %p278 = por %p276, %p277
      %p279 = scmp.ne.s32.totalorder %s271, %s273
      %p280 = scmp.eq.s32.totalorder %s32, 1
      %p281 = por %p279, %p280
      %p282 = scmp.ne.s32.totalorder %s273, %s274
      %p283 = scmp.eq.s32.totalorder %s32, 0
      %p284 = por %p282, %p283
      %p285 = scmp.ne.s32.totalorder %s273, %s274
      %p286 = scmp.eq.s32.totalorder %s33, 1
      %p287 = por %p285, %p286
      %p289 = scmp.ne.s32.totalorder %s274, %s288
      %p290 = scmp.eq.s32.totalorder %s33, 0
      %p291 = por %p289, %p290
      %s293 = sadd.s32 %s292, 1
      %p296 = scmp.eq.s32.totalorder %s27, 1
      %p297 = scmp.ne.s32.totalorder %s292, %s294
      %p298 = scmp.eq.s32.totalorder %s27, 0
      %p299 = por %p297, %p298
      %p300 = scmp.ne.s32.totalorder %s292, %s294
      %p301 = scmp.eq.s32.totalorder %s32, 1
      %p302 = por %p300, %p301
      %p303 = scmp.ne.s32.totalorder %s294, %s295
      %p304 = scmp.eq.s32.totalorder %s32, 0
      %p305 = por %p303, %p304
      %p306 = scmp.ne.s32.totalorder %s294, %s295
      %p307 = scmp.eq.s32.totalorder %s33, 1
      %p308 = por %p306, %p307
      %p310 = scmp.ne.s32.totalorder %s295, %s309
      %p311 = scmp.eq.s32.totalorder %s33, 0
      %p312 = por %p310, %p311
      %s314 = sadd.s32 %s313, 1
      %p317 = scmp.eq.s32.totalorder %s27, 1
      %p318 = scmp.ne.s32.totalorder %s313, %s315
      %p319 = scmp.eq.s32.totalorder %s27, 0
      %p320 = por %p318, %p319
      %p321 = scmp.ne.s32.totalorder %s313, %s315
      %p322 = scmp.eq.s32.totalorder %s32, 1
      %p323 = por %p321, %p322
      %p324 = scmp.ne.s32.totalorder %s315, %s316
      %p325 = scmp.eq.s32.totalorder %s32, 0
      %p326 = por %p324, %p325
      %p327 = scmp.ne.s32.totalorder %s315, %s316
      %p328 = scmp.eq.s32.totalorder %s33, 1
      %p329 = por %p327, %p328
      %p331 = scmp.ne.s32.totalorder %s316, %s330
      %p332 = scmp.eq.s32.totalorder %s33, 0
      %p333 = por %p331, %p332
      %s335 = sadd.s32 %s334, 1
      %p338 = scmp.eq.s32.totalorder %s27, 1
      %p339 = scmp.ne.s32.totalorder %s334, %s336
      %p340 = scmp.eq.s32.totalorder %s27, 0
      %p341 = por %p339, %p340
      %p342 = scmp.ne.s32.totalorder %s334, %s336
      %p343 = scmp.eq.s32.totalorder %s32, 1
      %p344 = por %p342, %p343
      %p345 = scmp.ne.s32.totalorder %s336, %s337
      %p346 = scmp.eq.s32.totalorder %s32, 0
      %p347 = por %p345, %p346
      %p348 = scmp.ne.s32.totalorder %s336, %s337
      %p349 = scmp.eq.s32.totalorder %s33, 1
      %p350 = por %p348, %p349
      %p352 = scmp.ne.s32.totalorder %s337, %s351
      %p353 = scmp.eq.s32.totalorder %s33, 0
      %p354 = por %p352, %p353
      %s356 = sadd.s32 %s355, 1
      %p359 = scmp.eq.s32.totalorder %s27, 1
      %p360 = scmp.ne.s32.totalorder %s355, %s357
      %p361 = scmp.eq.s32.totalorder %s27, 0
      %p362 = por %p360, %p361
      %p363 = scmp.ne.s32.totalorder %s355, %s357
      %p364 = scmp.eq.s32.totalorder %s32, 1
      %p365 = por %p363, %p364
      %p366 = scmp.ne.s32.totalorder %s357, %s358
      %p367 = scmp.eq.s32.totalorder %s32, 0
      %p368 = por %p366, %p367
      %p369 = scmp.ne.s32.totalorder %s357, %s358
      %p370 = scmp.eq.s32.totalorder %s33, 1
      %p371 = por %p369, %p370
      %p373 = scmp.ne.s32.totalorder %s358, %s372
      %p374 = scmp.eq.s32.totalorder %s33, 0
      %p375 = por %p373, %p374
      %s377 = sadd.s32 %s376, 1
      %p380 = scmp.eq.s32.totalorder %s27, 1
      %p381 = scmp.ne.s32.totalorder %s376, %s378
      %p382 = scmp.eq.s32.totalorder %s27, 0
      %p383 = por %p381, %p382
      %p384 = scmp.ne.s32.totalorder %s376, %s378
      %p385 = scmp.eq.s32.totalorder %s32, 1
      %p386 = por %p384, %p385
      %p387 = scmp.ne.s32.totalorder %s378, %s379
      %p388 = scmp.eq.s32.totalorder %s32, 0
      %p389 = por %p387, %p388
      %p390 = scmp.ne.s32.totalorder %s378, %s379
      %p391 = scmp.eq.s32.totalorder %s33, 1
      %p392 = por %p390, %p391
      %p394 = scmp.ne.s32.totalorder %s379, %s393
      %p395 = scmp.eq.s32.totalorder %s33, 0
      %p396 = por %p394, %p395
      %s397 = ssub.s32 %s27, %s34
      %p398 = scmp.eq.s32.totalorder %s397, 0
      %s400 = sadd.s32 %s399, 1
      %s401 = scalar_select %p398, %s399, %s400
      %p404 = pneg %p398
      %p405 = scmp.eq.s32.totalorder %s27, 1
      %p406 = por %p404, %p405
      %p407 = scmp.ne.s32.totalorder %s399, %s402
      %p408 = scmp.eq.s32.totalorder %s27, 0
      %p409 = por %p407, %p408
      %p410 = scmp.ne.s32.totalorder %s399, %s402
      %p411 = scmp.eq.s32.totalorder %s32, 1
      %p412 = por %p410, %p411
      %p413 = scmp.ne.s32.totalorder %s402, %s403
      %p414 = scmp.eq.s32.totalorder %s32, 0
      %p415 = por %p413, %p414
      %p416 = scmp.ne.s32.totalorder %s402, %s403
      %p417 = scmp.eq.s32.totalorder %s33, 1
      %p418 = por %p416, %p417
      %p420 = scmp.ne.s32.totalorder %s403, %s419
      %p421 = scmp.eq.s32.totalorder %s33, 0
      %p422 = por %p420, %p421
      %p423 = scmp.le.s32.totalorder 1, %s27
      %p424 = scmp.lt.s32.totalorder %s27, 3
      %p425 = pnand %p423, %p424
      %p426 = pneg %p425
      // Predicated region
      $region9: #{tpu_custom_call.1} parent=5 // pred_check
        _
      $region10: #{tpu_custom_call.1} parent=5 // pred_check_branch
        %428 = sbr.rel (%p425) target = $region12
      $region11: #{tpu_custom_call.1} parent=5 // pred_region
        %s429 = ssub.s32 %s27, 1
        // Predicated region
        $region13: #{tpu_custom_call.1} parent=11 // pred_check
          %p430 = pneg %p74
        $region14: #{tpu_custom_call.1} parent=11 // pred_check_branch
          %432 = sbr.rel (%p430) target = $region16
        $region15: #{tpu_custom_call.1} parent=11 // pred_region
          _
        $region16: #{tpu_custom_call.1} parent=11 // pred_fallthru
          _
        // Predicated region
        $region17: #{tpu_custom_call.1} parent=11 // pred_check
          %p433 = pneg %p95
        $region18: #{tpu_custom_call.1} parent=11 // pred_check_branch
          %435 = sbr.rel (%p433) target = $region20
        $region19: #{tpu_custom_call.1} parent=11 // pred_region
          _
        $region20: #{tpu_custom_call.1} parent=11 // pred_fallthru
          _
        // Predicated region
        $region21: #{tpu_custom_call.1} parent=11 // pred_check
          %p436 = pneg %p116
        $region22: #{tpu_custom_call.1} parent=11 // pred_check_branch
          %438 = sbr.rel (%p436) target = $region24
        $region23: #{tpu_custom_call.1} parent=11 // pred_region
          %s440 = ssub.s32 768, 768
          %441 = vsyncadd [#allocation4], %s440
          %s442 = sshll.u32 [#allocation3], 4
          %s443 = int_to_ptr.vmem [resolvable:$true] %s442
          %448 = dma.hbm_to_vmem [thread:$0]  %s3, 768, %s443, [#allocation4], 64, 64, 4
        $region24: #{tpu_custom_call.1} parent=11 // pred_fallthru
          _
        // Predicated region
        $region25: #{tpu_custom_call.1} parent=11 // pred_check
          %p449 = pneg %p137
        $region26: #{tpu_custom_call.1} parent=11 // pred_check_branch
          %451 = sbr.rel (%p449) target = $region28
        $region27: #{tpu_custom_call.1} parent=11 // pred_region
          _
        $region28: #{tpu_custom_call.1} parent=11 // pred_fallthru
          _
        // Predicated region
        $region29: #{tpu_custom_call.1} parent=11 // pred_check
          %p452 = pneg %p158
        $region30: #{tpu_custom_call.1} parent=11 // pred_check_branch
          %454 = sbr.rel (%p452) target = $region32
        $region31: #{tpu_custom_call.1} parent=11 // pred_region
          _
        $region32: #{tpu_custom_call.1} parent=11 // pred_fallthru
          _
        // Predicated region
        $region33: #{tpu_custom_call.1} parent=11 // pred_check
          %p455 = pneg %p179
        $region34: #{tpu_custom_call.1} parent=11 // pred_check_branch
          %457 = sbr.rel (%p455) target = $region36
        $region35: #{tpu_custom_call.1} parent=11 // pred_region
          _
        $region36: #{tpu_custom_call.1} parent=11 // pred_fallthru
          _
        // Predicated region
        $region37: #{tpu_custom_call.1} parent=11 // pred_check
          %p458 = pneg %p200
        $region38: #{tpu_custom_call.1} parent=11 // pred_check_branch
          %460 = sbr.rel (%p458) target = $region40
        $region39: #{tpu_custom_call.1} parent=11 // pred_region
          _
        $region40: #{tpu_custom_call.1} parent=11 // pred_fallthru
          _
        // Predicated region
        $region41: #{tpu_custom_call.1} parent=11 // pred_check
          %p461 = pneg %p221
        $region42: #{tpu_custom_call.1} parent=11 // pred_check_branch
          %463 = sbr.rel (%p461) target = $region44
        $region43: #{tpu_custom_call.1} parent=11 // pred_region
          _
        $region44: #{tpu_custom_call.1} parent=11 // pred_fallthru
          _
        // Predicated region
        $region45: #{tpu_custom_call.1} parent=11 // pred_check
          %p464 = pneg %p242
        $region46: #{tpu_custom_call.1} parent=11 // pred_check_branch
          %466 = sbr.rel (%p464) target = $region48
        $region47: #{tpu_custom_call.1} parent=11 // pred_region
          %s468 = ssub.s32 6144, 6144
          %469 = vsyncadd [#allocation6], %s468
          %s470 = sshll.u32 [#allocation5], 4
          %s471 = int_to_ptr.vmem [resolvable:$true] %s470
          %476 = dma.hbm_to_vmem [thread:$0]  %s9, 6144, %s471, [#allocation6], 64, 64, 4
        $region48: #{tpu_custom_call.1} parent=11 // pred_fallthru
          _
        // Predicated region
        $region49: #{tpu_custom_call.1} parent=11 // pred_check
          %p477 = pneg %p263
        $region50: #{tpu_custom_call.1} parent=11 // pred_check_branch
          %479 = sbr.rel (%p477) target = $region52
        $region51: #{tpu_custom_call.1} parent=11 // pred_region
          _
        $region52: #{tpu_custom_call.1} parent=11 // pred_fallthru
          _
        // Predicated region
        $region53: #{tpu_custom_call.1} parent=11 // pred_check
          %p480 = pneg %p284
        $region54: #{tpu_custom_call.1} parent=11 // pred_check_branch
          %482 = sbr.rel (%p480) target = $region56
        $region55: #{tpu_custom_call.1} parent=11 // pred_region
          _
        $region56: #{tpu_custom_call.1} parent=11 // pred_fallthru
          _
        // Predicated region
        $region57: #{tpu_custom_call.1} parent=11 // pred_check
          %p483 = pneg %p305
        $region58: #{tpu_custom_call.1} parent=11 // pred_check_branch
          %485 = sbr.rel (%p483) target = $region60
        $region59: #{tpu_custom_call.1} parent=11 // pred_region
          _
        $region60: #{tpu_custom_call.1} parent=11 // pred_fallthru
          _
        // Predicated region
        $region61: #{tpu_custom_call.1} parent=11 // pred_check
          %p486 = pneg %p326
        $region62: #{tpu_custom_call.1} parent=11 // pred_check_branch
          %488 = sbr.rel (%p486) target = $region64
        $region63: #{tpu_custom_call.1} parent=11 // pred_region
          _
        $region64: #{tpu_custom_call.1} parent=11 // pred_fallthru
          _
        // Predicated region
        $region65: #{tpu_custom_call.1} parent=11 // pred_check
          %p489 = pneg %p347
        $region66: #{tpu_custom_call.1} parent=11 // pred_check_branch
          %491 = sbr.rel (%p489) target = $region68
        $region67: #{tpu_custom_call.1} parent=11 // pred_region
          _
        $region68: #{tpu_custom_call.1} parent=11 // pred_fallthru
          _
        // Predicated region
        $region69: #{tpu_custom_call.1} parent=11 // pred_check
          %p492 = pneg %p368
        $region70: #{tpu_custom_call.1} parent=11 // pred_check_branch
          %494 = sbr.rel (%p492) target = $region72
        $region71: #{tpu_custom_call.1} parent=11 // pred_region
          _
        $region72: #{tpu_custom_call.1} parent=11 // pred_fallthru
          _
        // Predicated region
        $region73: #{tpu_custom_call.1} parent=11 // pred_check
          %p495 = pneg %p389
        $region74: #{tpu_custom_call.1} parent=11 // pred_check_branch
          %497 = sbr.rel (%p495) target = $region76
        $region75: #{tpu_custom_call.1} parent=11 // pred_region
          _
        $region76: #{tpu_custom_call.1} parent=11 // pred_fallthru
          _
      $region12: #{tpu_custom_call.1} parent=5 // pred_fallthru
        _
      %p498 = scmp.lt.s32.totalorder %s27, 2
      // Predicated region
      $region77: #{tpu_custom_call.1} parent=5 // pred_check
        %p499 = pneg %p498
      $region78: #{tpu_custom_call.1} parent=5 // pred_check_branch
        %501 = sbr.rel (%p499) target = $region80
      $region79: #{tpu_custom_call.1} parent=5 // pred_region
        // Predicated region
        $region81: #{tpu_custom_call.1} parent=79 // pred_check
          %p502 = pneg %p47
        $region82: #{tpu_custom_call.1} parent=79 // pred_check_branch
          %504 = sbr.rel (%p502) target = $region84
        $region83: #{tpu_custom_call.1} parent=79 // pred_region
          %p505 = scmp.lt.s32.totalorder %s27, 1
          %s506 = scalar_select %p505, %s27, 1
          %s507 = smul.addr %s506, 8
          %s508 = smul.addr %s507, 8
          %s509 = scalar_lea.vmem %s0, %s508
        $region84: #{tpu_custom_call.1} parent=79 // pred_fallthru
          _
      $region80: #{tpu_custom_call.1} parent=5 // pred_fallthru
        _
      %p510 = scmp.le.s32.totalorder 1, %s27
      %p511 = scmp.lt.s32.totalorder %s27, 3
      %p512 = pnand %p510, %p511
      %p513 = pneg %p512
      // Predicated region
      $region85: #{tpu_custom_call.1} parent=5 // pred_check
        _
      $region86: #{tpu_custom_call.1} parent=5 // pred_check_branch
        %515 = sbr.rel (%p512) target = $region88
      $region87: #{tpu_custom_call.1} parent=5 // pred_region
        %s516 = ssub.s32 %s27, 1
        // Predicated region
        $region89: #{tpu_custom_call.1} parent=87 // pred_check
          %p517 = pneg %p116
        $region90: #{tpu_custom_call.1} parent=87 // pred_check_branch
          %519 = sbr.rel (%p517) target = $region92
        $region91: #{tpu_custom_call.1} parent=87 // pred_region
          %520 = dma.done [#allocation4], 768
        $region92: #{tpu_custom_call.1} parent=87 // pred_fallthru
          _
        // Predicated region
        $region93: #{tpu_custom_call.1} parent=87 // pred_check
          %p521 = pneg %p242
        $region94: #{tpu_custom_call.1} parent=87 // pred_check_branch
          %523 = sbr.rel (%p521) target = $region96
        $region95: #{tpu_custom_call.1} parent=87 // pred_region
          %524 = dma.done [#allocation6], 6144
        $region96: #{tpu_custom_call.1} parent=87 // pred_fallthru
          _
        %p525 = scmp.lt.s32.totalorder %s32, 1
        %s526 = scalar_select %p525, %s32, 1
        %s527 = smul.addr %s526, 8
        %s528 = smul.addr %s527, 8
        %s529 = scalar_lea.vmem %s0, %s528
        %p530 = pneg %p53
        %p531 = pneg %p50
        %p532 = pneg %p74
        %p533 = pneg %p71
        %p534 = pneg %p95
        %p535 = pneg %p92
        %p536 = pneg %p116
        %p537 = pneg %p113
        %p538 = pneg %p137
        %p539 = pneg %p134
        %p540 = pneg %p158
        %p541 = pneg %p155
        %p542 = pneg %p179
        %p543 = pneg %p176
        %p544 = pneg %p200
        %p545 = pneg %p197
        %p546 = pneg %p221
        %p547 = pneg %p218
        %p548 = pneg %p242
        %p549 = pneg %p239
        %p550 = pneg %p263
        %p551 = pneg %p260
        %p552 = pneg %p284
        %p553 = pneg %p281
        %p554 = pneg %p305
        %p555 = pneg %p302
        %p556 = pneg %p326
        %p557 = pneg %p323
        %p558 = pneg %p347
        %p559 = pneg %p344
        %p560 = pneg %p368
        %p561 = pneg %p365
        %p562 = pneg %p389
        %p563 = pneg %p386
        %p564 = pneg %p415
        %p565 = pneg %p412
        %p566 = scmp.lt.s32.totalorder %s32, 1
        %s567 = scalar_select %p566, %s32, 1
        %s568 = smul.addr %s567, 8
        %s569 = smul.addr %s568, 8
        %s570 = scalar_lea.vmem %s17, %s569
        %p571 = scmp.lt.s32.totalorder %s32, 1
        %s572 = scalar_select %p571, %s32, 1
        %s573 = smul.addr %s572, 8
        %s574 = smul.addr %s573, 8
        %s575 = scalar_lea.vmem %s0, %s574
        %p576 = scmp.lt.s32.totalorder %s32, 1
        %s577 = scalar_select %p576, %s32, 1
        %s578 = smul.addr %s577, 8
        %s579 = smul.addr %s578, 8
        %s580 = scalar_lea.vmem %s17, %s579
        %v582 = vld [vmem:[%s575] sm:$0xff]
        %v583 = vld [vmem:[%s575 + $0x8] sm:$0xff]
        %v584 = vld [vmem:[%s575 + $0x10] sm:$0xff]
        %v585 = vld [vmem:[%s575 + $0x18] sm:$0xff]
        %v586 = vld [vmem:[%s575 + $0x20] sm:$0xff]
        %v587 = vld [vmem:[%s575 + $0x28] sm:$0xff]
        %v588 = vld [vmem:[%s575 + $0x30] sm:$0xff]
        %v589 = vld [vmem:[%s575 + $0x38] sm:$0xff]
        %v590 = vlaneseq
        %v591 = vshrl.u32 %v590, 7
        %v592 = vadd.s32 %v591, 8
        %v593 = vadd.s32 %v591, 16
        %v594 = vadd.s32 %v591, 24
        %v595 = vadd.s32 %v591, 32
        %v596 = vadd.s32 %v591, 40
        %v597 = vadd.s32 %v591, 48
        %v598 = vadd.s32 %v591, 56
        %vm599 = vcmp.eq.s32.totalorder %v591, 0
        %vm600 = vcmp.eq.s32.totalorder %v592, 0
        %vm601 = vcmp.eq.s32.totalorder %v593, 0
        %vm602 = vcmp.eq.s32.totalorder %v594, 0
        %vm603 = vcmp.eq.s32.totalorder %v595, 0
        %vm604 = vcmp.eq.s32.totalorder %v596, 0
        %vm605 = vcmp.eq.s32.totalorder %v597, 0
        %vm606 = vcmp.eq.s32.totalorder %v598, 0
        %v607 = vrot.slane %v582, 7
        %v608 = vrot.slane %v583, 7
        %v609 = vrot.slane %v584, 7
        %v610 = vrot.slane %v585, 7
        %v611 = vrot.slane %v586, 7
        %v612 = vrot.slane %v587, 7
        %v613 = vrot.slane %v588, 7
        %v614 = vrot.slane %v589, 7
        %vm615 = vcmp.lt.s32.totalorder %v591, 1
        %v616 = vsel %vm615, %v613, %v614
        %v617 = vsel %vm615, %v612, %v613
        %v618 = vsel %vm615, %v611, %v612
        %v619 = vsel %vm615, %v610, %v611
        %v620 = vsel %vm615, %v609, %v610
        %v621 = vsel %vm615, %v608, %v609
        %v622 = vsel %vm615, %v607, %v608
        %v623 = vsel %vm615, %v614, %v607
        %v624 = vsel %vm599, 0.0, %v623
        %v625 = vsel %vm600, 0.0, %v622
        %v626 = vsel %vm601, 0.0, %v621
        %v627 = vsel %vm602, 0.0, %v620
        %v628 = vsel %vm603, 0.0, %v619
        %v629 = vsel %vm604, 0.0, %v618
        %v630 = vsel %vm605, 0.0, %v617
        %v631 = vsel %vm606, 0.0, %v616
        %vm632 = vcmp.eq.s32.totalorder %v591, 63
        %vm633 = vcmp.eq.s32.totalorder %v592, 63
        %vm634 = vcmp.eq.s32.totalorder %v593, 63
        %vm635 = vcmp.eq.s32.totalorder %v594, 63
        %vm636 = vcmp.eq.s32.totalorder %v595, 63
        %vm637 = vcmp.eq.s32.totalorder %v596, 63
        %vm638 = vcmp.eq.s32.totalorder %v597, 63
        %vm639 = vcmp.eq.s32.totalorder %v598, 63
        %v640 = vrot.slane %v582, 1
        %v641 = vrot.slane %v583, 1
        %v642 = vrot.slane %v584, 1
        %v643 = vrot.slane %v585, 1
        %v644 = vrot.slane %v586, 1
        %v645 = vrot.slane %v587, 1
        %v646 = vrot.slane %v588, 1
        %v647 = vrot.slane %v589, 1
        %vm648 = vcmp.lt.s32.totalorder %v591, 7
        %v649 = vsel %vm648, %v646, %v647
        %v650 = vsel %vm648, %v645, %v646
        %v651 = vsel %vm648, %v644, %v645
        %v652 = vsel %vm648, %v643, %v644
        %v653 = vsel %vm648, %v642, %v643
        %v654 = vsel %vm648, %v641, %v642
        %v655 = vsel %vm648, %v640, %v641
        %v656 = vsel %vm648, %v647, %v640
        %v657 = vsel %vm632, 0.0, %v655
        %v658 = vsel %vm633, 0.0, %v654
        %v659 = vsel %vm634, 0.0, %v653
        %v660 = vsel %vm635, 0.0, %v652
        %v661 = vsel %vm636, 0.0, %v651
        %v662 = vsel %vm637, 0.0, %v650
        %v663 = vsel %vm638, 0.0, %v649
        %v664 = vsel %vm639, 0.0, %v656
        %v665 = vld [vmem:[%s1] sm:$0x1]
        %667 = vset.pattern.permute.xlu0 0
        %668 = vperm.xlu0 %667, %v624
        %v669 = vpop.permute.xlu0 %668
        %672 = vset.pattern.permute.xlu0 0
        %673 = vperm.xlu0 %672, %v625
        %v674 = vpop.permute.xlu0 %673
        %677 = vset.pattern.permute.xlu0 0
        %678 = vperm.xlu0 %677, %v626
        %v679 = vpop.permute.xlu0 %678
        %682 = vset.pattern.permute.xlu0 0
        %683 = vperm.xlu0 %682, %v627
        %v684 = vpop.permute.xlu0 %683
        %687 = vset.pattern.permute.xlu0 0
        %688 = vperm.xlu0 %687, %v628
        %v689 = vpop.permute.xlu0 %688
        %692 = vset.pattern.permute.xlu0 0
        %693 = vperm.xlu0 %692, %v629
        %v694 = vpop.permute.xlu0 %693
        %697 = vset.pattern.permute.xlu0 0
        %698 = vperm.xlu0 %697, %v630
        %v699 = vpop.permute.xlu0 %698
        %702 = vset.pattern.permute.xlu0 0
        %703 = vperm.xlu0 %702, %v631
        %v704 = vpop.permute.xlu0 %703
        %v707 = vlaneseq
        %v708 = vshrl.u32 %v707, 7
        %v709 = vsub.s32 0, %v708
        %v710 = vrot.slane %v665, %v709
        %v712 = vmul.f32 %v669, %v710
        %v713 = vmul.f32 %v674, %v710
        %v714 = vmul.f32 %v679, %v710
        %v715 = vmul.f32 %v684, %v710
        %v716 = vmul.f32 %v689, %v710
        %v717 = vmul.f32 %v694, %v710
        %v718 = vmul.f32 %v699, %v710
        %v719 = vmul.f32 %v704, %v710
        %s720 = scalar_lea.vmem %s1, 1
        %v721 = vld [vmem:[%s720] sm:$0x1]
        %723 = vset.pattern.permute.xlu0 0
        %724 = vperm.xlu0 %723, %v582
        %v725 = vpop.permute.xlu0 %724
        %728 = vset.pattern.permute.xlu0 0
        %729 = vperm.xlu0 %728, %v583
        %v730 = vpop.permute.xlu0 %729
        %733 = vset.pattern.permute.xlu0 0
        %734 = vperm.xlu0 %733, %v584
        %v735 = vpop.permute.xlu0 %734
        %738 = vset.pattern.permute.xlu0 0
        %739 = vperm.xlu0 %738, %v585
        %v740 = vpop.permute.xlu0 %739
        %743 = vset.pattern.permute.xlu0 0
        %744 = vperm.xlu0 %743, %v586
        %v745 = vpop.permute.xlu0 %744
        %748 = vset.pattern.permute.xlu0 0
        %749 = vperm.xlu0 %748, %v587
        %v750 = vpop.permute.xlu0 %749
        %753 = vset.pattern.permute.xlu0 0
        %754 = vperm.xlu0 %753, %v588
        %v755 = vpop.permute.xlu0 %754
        %758 = vset.pattern.permute.xlu0 0
        %759 = vperm.xlu0 %758, %v589
        %v760 = vpop.permute.xlu0 %759
        %v763 = vlaneseq
        %v764 = vshrl.u32 %v763, 7
        %v765 = vsub.s32 0, %v764
        %v766 = vrot.slane %v721, %v765
        %v768 = vmul.f32 %v725, %v766
        %v769 = vmul.f32 %v730, %v766
        %v770 = vmul.f32 %v735, %v766
        %v771 = vmul.f32 %v740, %v766
        %v772 = vmul.f32 %v745, %v766
        %v773 = vmul.f32 %v750, %v766
        %v774 = vmul.f32 %v755, %v766
        %v775 = vmul.f32 %v760, %v766
        %v776 = vadd.f32 %v712, %v768
        %v777 = vadd.f32 %v713, %v769
        %v778 = vadd.f32 %v714, %v770
        %v779 = vadd.f32 %v715, %v771
        %v780 = vadd.f32 %v716, %v772
        %v781 = vadd.f32 %v717, %v773
        %v782 = vadd.f32 %v718, %v774
        %v783 = vadd.f32 %v719, %v775
        %s784 = scalar_lea.vmem %s1, 2
        %v785 = vld [vmem:[%s784] sm:$0x1]
        %787 = vset.pattern.permute.xlu0 0
        %788 = vperm.xlu0 %787, %v657
        %v789 = vpop.permute.xlu0 %788
        %792 = vset.pattern.permute.xlu0 0
        %793 = vperm.xlu0 %792, %v658
        %v794 = vpop.permute.xlu0 %793
        %797 = vset.pattern.permute.xlu0 0
        %798 = vperm.xlu0 %797, %v659
        %v799 = vpop.permute.xlu0 %798
        %802 = vset.pattern.permute.xlu0 0
        %803 = vperm.xlu0 %802, %v660
        %v804 = vpop.permute.xlu0 %803
        %807 = vset.pattern.permute.xlu0 0
        %808 = vperm.xlu0 %807, %v661
        %v809 = vpop.permute.xlu0 %808
        %812 = vset.pattern.permute.xlu0 0
        %813 = vperm.xlu0 %812, %v662
        %v814 = vpop.permute.xlu0 %813
        %817 = vset.pattern.permute.xlu0 0
        %818 = vperm.xlu0 %817, %v663
        %v819 = vpop.permute.xlu0 %818
        %822 = vset.pattern.permute.xlu0 0
        %823 = vperm.xlu0 %822, %v664
        %v824 = vpop.permute.xlu0 %823
        %v827 = vlaneseq
        %v828 = vshrl.u32 %v827, 7
        %v829 = vsub.s32 0, %v828
        %v830 = vrot.slane %v785, %v829
        %v832 = vmul.f32 %v789, %v830
        %v833 = vmul.f32 %v794, %v830
        %v834 = vmul.f32 %v799, %v830
        %v835 = vmul.f32 %v804, %v830
        %v836 = vmul.f32 %v809, %v830
        %v837 = vmul.f32 %v814, %v830
        %v838 = vmul.f32 %v819, %v830
        %v839 = vmul.f32 %v824, %v830
        %v840 = vadd.f32 %v776, %v832
        %v841 = vadd.f32 %v777, %v833
        %v842 = vadd.f32 %v778, %v834
        %v843 = vadd.f32 %v779, %v835
        %v844 = vadd.f32 %v780, %v836
        %v845 = vadd.f32 %v781, %v837
        %v846 = vadd.f32 %v782, %v838
        %v847 = vadd.f32 %v783, %v839
        %v848 = vld [vmem:[%s2] sm:$0x1]
        %v850 = vlaneseq
        %v851 = vshrl.u32 %v850, 7
        %v852 = vsub.s32 0, %v851
        %v853 = vrot.slane %v848, %v852
        %v855 = vadd.f32 %v840, %v853
        %v856 = vadd.f32 %v841, %v853
        %v857 = vadd.f32 %v842, %v853
        %v858 = vadd.f32 %v843, %v853
        %v859 = vadd.f32 %v844, %v853
        %v860 = vadd.f32 %v845, %v853
        %v861 = vadd.f32 %v846, %v853
        %v862 = vadd.f32 %v847, %v853
        %v863 = vmax.f32 %v855, 0.0
        %v864 = vmax.f32 %v856, 0.0
        %v865 = vmax.f32 %v857, 0.0
        %v866 = vmax.f32 %v858, 0.0
        %v867 = vmax.f32 %v859, 0.0
        %v868 = vmax.f32 %v860, 0.0
        %v869 = vmax.f32 %v861, 0.0
        %v870 = vmax.f32 %v862, 0.0
        %v879 = vcombine.high %v863, %v863
        %v881 = vunpack.c.l.s4 1983009808
        %v882 = vunpack.c.0.s8 %v881
        %v883 = vlaneseq
        %v884 = vshrl.u32 %v883, 7
        %v885 = vsub.s32 %v882, %v884
        %v886 = vrot.slane %v863, %v885
        %v888 = vunpack.c.l.s4 1983009808
        %v889 = vunpack.c.0.s8 %v888
        %v890 = vlaneseq
        %v891 = vshrl.u32 %v890, 7
        %v892 = vsub.s32 %v889, %v891
        %v893 = vrot.slane %v879, %v892
        %v894 = vcombine.high %v886, %v886
        %v895 = vcombine.high %v893, %v893
        %v896 = vcombine.high %v864, %v864
        %v898 = vunpack.c.l.s4 1983009808
        %v899 = vunpack.c.0.s8 %v898
        %v900 = vlaneseq
        %v901 = vshrl.u32 %v900, 7
        %v902 = vsub.s32 %v899, %v901
        %v903 = vrot.slane %v864, %v902
        %v905 = vunpack.c.l.s4 1983009808
        %v906 = vunpack.c.0.s8 %v905
        %v907 = vlaneseq
        %v908 = vshrl.u32 %v907, 7
        %v909 = vsub.s32 %v906, %v908
        %v910 = vrot.slane %v896, %v909
        %v911 = vcombine.high %v903, %v903
        %v912 = vcombine.high %v910, %v910
        %v913 = vcombine.high %v865, %v865
        %v915 = vunpack.c.l.s4 1983009808
        %v916 = vunpack.c.0.s8 %v915
        %v917 = vlaneseq
        %v918 = vshrl.u32 %v917, 7
        %v919 = vsub.s32 %v916, %v918
        %v920 = vrot.slane %v865, %v919
        %v922 = vunpack.c.l.s4 1983009808
        %v923 = vunpack.c.0.s8 %v922
        %v924 = vlaneseq
        %v925 = vshrl.u32 %v924, 7
        %v926 = vsub.s32 %v923, %v925
        %v927 = vrot.slane %v913, %v926
        %v928 = vcombine.high %v920, %v920
        %v929 = vcombine.high %v927, %v927
        %v930 = vcombine.high %v866, %v866
        %v932 = vunpack.c.l.s4 1983009808
        %v933 = vunpack.c.0.s8 %v932
        %v934 = vlaneseq
        %v935 = vshrl.u32 %v934, 7
        %v936 = vsub.s32 %v933, %v935
        %v937 = vrot.slane %v866, %v936
        %v939 = vunpack.c.l.s4 1983009808
        %v940 = vunpack.c.0.s8 %v939
        %v941 = vlaneseq
        %v942 = vshrl.u32 %v941, 7
        %v943 = vsub.s32 %v940, %v942
        %v944 = vrot.slane %v930, %v943
        %v945 = vcombine.high %v937, %v937
        %v946 = vcombine.high %v944, %v944
        %v947 = vcombine.high %v867, %v867
        %v949 = vunpack.c.l.s4 1983009808
        %v950 = vunpack.c.0.s8 %v949
        %v951 = vlaneseq
        %v952 = vshrl.u32 %v951, 7
        %v953 = vsub.s32 %v950, %v952
        %v954 = vrot.slane %v867, %v953
        %v956 = vunpack.c.l.s4 1983009808
        %v957 = vunpack.c.0.s8 %v956
        %v958 = vlaneseq
        %v959 = vshrl.u32 %v958, 7
        %v960 = vsub.s32 %v957, %v959
        %v961 = vrot.slane %v947, %v960
        %v962 = vcombine.high %v954, %v954
        %v963 = vcombine.high %v961, %v961
        %v964 = vcombine.high %v868, %v868
        %v966 = vunpack.c.l.s4 1983009808
        %v967 = vunpack.c.0.s8 %v966
        %v968 = vlaneseq
        %v969 = vshrl.u32 %v968, 7
        %v970 = vsub.s32 %v967, %v969
        %v971 = vrot.slane %v868, %v970
        %v973 = vunpack.c.l.s4 1983009808
        %v974 = vunpack.c.0.s8 %v973
        %v975 = vlaneseq
        %v976 = vshrl.u32 %v975, 7
        %v977 = vsub.s32 %v974, %v976
        %v978 = vrot.slane %v964, %v977
        %v979 = vcombine.high %v971, %v971
        %v980 = vcombine.high %v978, %v978
        %v981 = vcombine.high %v869, %v869
        %v983 = vunpack.c.l.s4 1983009808
        %v984 = vunpack.c.0.s8 %v983
        %v985 = vlaneseq
        %v986 = vshrl.u32 %v985, 7
        %v987 = vsub.s32 %v984, %v986
        %v988 = vrot.slane %v869, %v987
        %v990 = vunpack.c.l.s4 1983009808
        %v991 = vunpack.c.0.s8 %v990
        %v992 = vlaneseq
        %v993 = vshrl.u32 %v992, 7
        %v994 = vsub.s32 %v991, %v993
        %v995 = vrot.slane %v981, %v994
        %v996 = vcombine.high %v988, %v988
        %v997 = vcombine.high %v995, %v995
        %v998 = vcombine.high %v870, %v870
        %v1000 = vunpack.c.l.s4 1983009808
        %v1001 = vunpack.c.0.s8 %v1000
        %v1002 = vlaneseq
        %v1003 = vshrl.u32 %v1002, 7
        %v1004 = vsub.s32 %v1001, %v1003
        %v1005 = vrot.slane %v870, %v1004
        %v1007 = vunpack.c.l.s4 1983009808
        %v1008 = vunpack.c.0.s8 %v1007
        %v1009 = vlaneseq
        %v1010 = vshrl.u32 %v1009, 7
        %v1011 = vsub.s32 %v1008, %v1010
        %v1012 = vrot.slane %v998, %v1011
        %v1013 = vcombine.high %v1005, %v1005
        %v1014 = vcombine.high %v1012, %v1012
        %vm1047 = vcmask 254976
        %v1048 = vsel %vm1047, %v886, -inf
        %v1049 = vrot.slane %v1048, 4
        %v1050 = vmax.f32 %v1048, %v1049
        %v1051 = vrot.slane %v1050, 2
        %v1052 = vmax.f32 %v1050, %v1051
        %v1053 = vrot.slane %v1052, 1
        %v1054 = vmax.f32 %v1052, %v1053
        %v1055 = vsel %vm1047, %v894, -inf
        %v1056 = vrot.slane %v1055, 4
        %v1057 = vmax.f32 %v1055, %v1056
        %v1058 = vrot.slane %v1057, 2
        %v1059 = vmax.f32 %v1057, %v1058
        %v1060 = vrot.slane %v1059, 1
        %v1061 = vmax.f32 %v1059, %v1060
        %v1062 = vsel %vm1047, %v893, -inf
        %v1063 = vrot.slane %v1062, 4
        %v1064 = vmax.f32 %v1062, %v1063
        %v1065 = vrot.slane %v1064, 2
        %v1066 = vmax.f32 %v1064, %v1065
        %v1067 = vrot.slane %v1066, 1
        %v1068 = vmax.f32 %v1066, %v1067
        %v1069 = vsel %vm1047, %v895, -inf
        %v1070 = vrot.slane %v1069, 4
        %v1071 = vmax.f32 %v1069, %v1070
        %v1072 = vrot.slane %v1071, 2
        %v1073 = vmax.f32 %v1071, %v1072
        %v1074 = vrot.slane %v1073, 1
        %v1075 = vmax.f32 %v1073, %v1074
        %v1076 = vsel %vm1047, %v903, -inf
        %v1077 = vrot.slane %v1076, 4
        %v1078 = vmax.f32 %v1076, %v1077
        %v1079 = vrot.slane %v1078, 2
        %v1080 = vmax.f32 %v1078, %v1079
        %v1081 = vrot.slane %v1080, 1
        %v1082 = vmax.f32 %v1080, %v1081
        %v1083 = vsel %vm1047, %v911, -inf
        %v1084 = vrot.slane %v1083, 4
        %v1085 = vmax.f32 %v1083, %v1084
        %v1086 = vrot.slane %v1085, 2
        %v1087 = vmax.f32 %v1085, %v1086
        %v1088 = vrot.slane %v1087, 1
        %v1089 = vmax.f32 %v1087, %v1088
        %v1090 = vsel %vm1047, %v910, -inf
        %v1091 = vrot.slane %v1090, 4
        %v1092 = vmax.f32 %v1090, %v1091
        %v1093 = vrot.slane %v1092, 2
        %v1094 = vmax.f32 %v1092, %v1093
        %v1095 = vrot.slane %v1094, 1
        %v1096 = vmax.f32 %v1094, %v1095
        %v1097 = vsel %vm1047, %v912, -inf
        %v1098 = vrot.slane %v1097, 4
        %v1099 = vmax.f32 %v1097, %v1098
        %v1100 = vrot.slane %v1099, 2
        %v1101 = vmax.f32 %v1099, %v1100
        %v1102 = vrot.slane %v1101, 1
        %v1103 = vmax.f32 %v1101, %v1102
        %v1104 = vsel %vm1047, %v920, -inf
        %v1105 = vrot.slane %v1104, 4
        %v1106 = vmax.f32 %v1104, %v1105
        %v1107 = vrot.slane %v1106, 2
        %v1108 = vmax.f32 %v1106, %v1107
        %v1109 = vrot.slane %v1108, 1
        %v1110 = vmax.f32 %v1108, %v1109
        %v1111 = vsel %vm1047, %v928, -inf
        %v1112 = vrot.slane %v1111, 4
        %v1113 = vmax.f32 %v1111, %v1112
        %v1114 = vrot.slane %v1113, 2
        %v1115 = vmax.f32 %v1113, %v1114
        %v1116 = vrot.slane %v1115, 1
        %v1117 = vmax.f32 %v1115, %v1116
        %v1118 = vsel %vm1047, %v927, -inf
        %v1119 = vrot.slane %v1118, 4
        %v1120 = vmax.f32 %v1118, %v1119
        %v1121 = vrot.slane %v1120, 2
        %v1122 = vmax.f32 %v1120, %v1121
        %v1123 = vrot.slane %v1122, 1
        %v1124 = vmax.f32 %v1122, %v1123
        %v1125 = vsel %vm1047, %v929, -inf
        %v1126 = vrot.slane %v1125, 4
        %v1127 = vmax.f32 %v1125, %v1126
        %v1128 = vrot.slane %v1127, 2
        %v1129 = vmax.f32 %v1127, %v1128
        %v1130 = vrot.slane %v1129, 1
        %v1131 = vmax.f32 %v1129, %v1130
        %v1132 = vsel %vm1047, %v937, -inf
        %v1133 = vrot.slane %v1132, 4
        %v1134 = vmax.f32 %v1132, %v1133
        %v1135 = vrot.slane %v1134, 2
        %v1136 = vmax.f32 %v1134, %v1135
        %v1137 = vrot.slane %v1136, 1
        %v1138 = vmax.f32 %v1136, %v1137
        %v1139 = vsel %vm1047, %v945, -inf
        %v1140 = vrot.slane %v1139, 4
        %v1141 = vmax.f32 %v1139, %v1140
        %v1142 = vrot.slane %v1141, 2
        %v1143 = vmax.f32 %v1141, %v1142
        %v1144 = vrot.slane %v1143, 1
        %v1145 = vmax.f32 %v1143, %v1144
        %v1146 = vsel %vm1047, %v944, -inf
        %v1147 = vrot.slane %v1146, 4
        %v1148 = vmax.f32 %v1146, %v1147
        %v1149 = vrot.slane %v1148, 2
        %v1150 = vmax.f32 %v1148, %v1149
        %v1151 = vrot.slane %v1150, 1
        %v1152 = vmax.f32 %v1150, %v1151
        %v1153 = vsel %vm1047, %v946, -inf
        %v1154 = vrot.slane %v1153, 4
        %v1155 = vmax.f32 %v1153, %v1154
        %v1156 = vrot.slane %v1155, 2
        %v1157 = vmax.f32 %v1155, %v1156
        %v1158 = vrot.slane %v1157, 1
        %v1159 = vmax.f32 %v1157, %v1158
        %v1160 = vsel %vm1047, %v954, -inf
        %v1161 = vrot.slane %v1160, 4
        %v1162 = vmax.f32 %v1160, %v1161
        %v1163 = vrot.slane %v1162, 2
        %v1164 = vmax.f32 %v1162, %v1163
        %v1165 = vrot.slane %v1164, 1
        %v1166 = vmax.f32 %v1164, %v1165
        %v1167 = vsel %vm1047, %v962, -inf
        %v1168 = vrot.slane %v1167, 4
        %v1169 = vmax.f32 %v1167, %v1168
        %v1170 = vrot.slane %v1169, 2
        %v1171 = vmax.f32 %v1169, %v1170
        %v1172 = vrot.slane %v1171, 1
        %v1173 = vmax.f32 %v1171, %v1172
        %v1174 = vsel %vm1047, %v961, -inf
        %v1175 = vrot.slane %v1174, 4
        %v1176 = vmax.f32 %v1174, %v1175
        %v1177 = vrot.slane %v1176, 2
        %v1178 = vmax.f32 %v1176, %v1177
        %v1179 = vrot.slane %v1178, 1
        %v1180 = vmax.f32 %v1178, %v1179
        %v1181 = vsel %vm1047, %v963, -inf
        %v1182 = vrot.slane %v1181, 4
        %v1183 = vmax.f32 %v1181, %v1182
        %v1184 = vrot.slane %v1183, 2
        %v1185 = vmax.f32 %v1183, %v1184
        %v1186 = vrot.slane %v1185, 1
        %v1187 = vmax.f32 %v1185, %v1186
        %v1188 = vsel %vm1047, %v971, -inf
        %v1189 = vrot.slane %v1188, 4
        %v1190 = vmax.f32 %v1188, %v1189
        %v1191 = vrot.slane %v1190, 2
        %v1192 = vmax.f32 %v1190, %v1191
        %v1193 = vrot.slane %v1192, 1
        %v1194 = vmax.f32 %v1192, %v1193
        %v1195 = vsel %vm1047, %v979, -inf
        %v1196 = vrot.slane %v1195, 4
        %v1197 = vmax.f32 %v1195, %v1196
        %v1198 = vrot.slane %v1197, 2
        %v1199 = vmax.f32 %v1197, %v1198
        %v1200 = vrot.slane %v1199, 1
        %v1201 = vmax.f32 %v1199, %v1200
        %v1202 = vsel %vm1047, %v978, -inf
        %v1203 = vrot.slane %v1202, 4
        %v1204 = vmax.f32 %v1202, %v1203
        %v1205 = vrot.slane %v1204, 2
        %v1206 = vmax.f32 %v1204, %v1205
        %v1207 = vrot.slane %v1206, 1
        %v1208 = vmax.f32 %v1206, %v1207
        %v1209 = vsel %vm1047, %v980, -inf
        %v1210 = vrot.slane %v1209, 4
        %v1211 = vmax.f32 %v1209, %v1210
        %v1212 = vrot.slane %v1211, 2
        %v1213 = vmax.f32 %v1211, %v1212
        %v1214 = vrot.slane %v1213, 1
        %v1215 = vmax.f32 %v1213, %v1214
        %v1216 = vsel %vm1047, %v988, -inf
        %v1217 = vrot.slane %v1216, 4
        %v1218 = vmax.f32 %v1216, %v1217
        %v1219 = vrot.slane %v1218, 2
        %v1220 = vmax.f32 %v1218, %v1219
        %v1221 = vrot.slane %v1220, 1
        %v1222 = vmax.f32 %v1220, %v1221
        %v1223 = vsel %vm1047, %v996, -inf
        %v1224 = vrot.slane %v1223, 4
        %v1225 = vmax.f32 %v1223, %v1224
        %v1226 = vrot.slane %v1225, 2
        %v1227 = vmax.f32 %v1225, %v1226
        %v1228 = vrot.slane %v1227, 1
        %v1229 = vmax.f32 %v1227, %v1228
        %v1230 = vsel %vm1047, %v995, -inf
        %v1231 = vrot.slane %v1230, 4
        %v1232 = vmax.f32 %v1230, %v1231
        %v1233 = vrot.slane %v1232, 2
        %v1234 = vmax.f32 %v1232, %v1233
        %v1235 = vrot.slane %v1234, 1
        %v1236 = vmax.f32 %v1234, %v1235
        %v1237 = vsel %vm1047, %v997, -inf
        %v1238 = vrot.slane %v1237, 4
        %v1239 = vmax.f32 %v1237, %v1238
        %v1240 = vrot.slane %v1239, 2
        %v1241 = vmax.f32 %v1239, %v1240
        %v1242 = vrot.slane %v1241, 1
        %v1243 = vmax.f32 %v1241, %v1242
        %v1244 = vsel %vm1047, %v1005, -inf
        %v1245 = vrot.slane %v1244, 4
        %v1246 = vmax.f32 %v1244, %v1245
        %v1247 = vrot.slane %v1246, 2
        %v1248 = vmax.f32 %v1246, %v1247
        %v1249 = vrot.slane %v1248, 1
        %v1250 = vmax.f32 %v1248, %v1249
        %v1251 = vsel %vm1047, %v1013, -inf
        %v1252 = vrot.slane %v1251, 4
        %v1253 = vmax.f32 %v1251, %v1252
        %v1254 = vrot.slane %v1253, 2
        %v1255 = vmax.f32 %v1253, %v1254
        %v1256 = vrot.slane %v1255, 1
        %v1257 = vmax.f32 %v1255, %v1256
        %v1258 = vsel %vm1047, %v1012, -inf
        %v1259 = vrot.slane %v1258, 4
        %v1260 = vmax.f32 %v1258, %v1259
        %v1261 = vrot.slane %v1260, 2
        %v1262 = vmax.f32 %v1260, %v1261
        %v1263 = vrot.slane %v1262, 1
        %v1264 = vmax.f32 %v1262, %v1263
        %v1265 = vsel %vm1047, %v1014, -inf
        %v1266 = vrot.slane %v1265, 4
        %v1267 = vmax.f32 %v1265, %v1266
        %v1268 = vrot.slane %v1267, 2
        %v1269 = vmax.f32 %v1267, %v1268
        %v1270 = vrot.slane %v1269, 1
        %v1271 = vmax.f32 %v1269, %v1270
        %vm1304 = vcmask 1041409
        %v1305 = vsel %vm1304, %v1061, %v1054
        %vm1306 = vcmask 1042434
        %v1307 = vsel %vm1306, %v1068, %v1305
        %vm1308 = vcmask 1043459
        %v1309 = vsel %vm1308, %v1075, %v1307
        %vm1310 = vcmask 1044484
        %v1311 = vsel %vm1310, %v1082, %v1309
        %vm1312 = vcmask 1045509
        %v1313 = vsel %vm1312, %v1089, %v1311
        %vm1314 = vcmask 1046534
        %v1315 = vsel %vm1314, %v1096, %v1313
        %vm1316 = vcmask 1047559
        %v1317 = vsel %vm1316, %v1103, %v1315
        %v1318 = vsel %vm1304, %v1117, %v1110
        %v1319 = vsel %vm1306, %v1124, %v1318
        %v1320 = vsel %vm1308, %v1131, %v1319
        %v1321 = vsel %vm1310, %v1138, %v1320
        %v1322 = vsel %vm1312, %v1145, %v1321
        %v1323 = vsel %vm1314, %v1152, %v1322
        %v1324 = vsel %vm1316, %v1159, %v1323
        %v1325 = vsel %vm1304, %v1173, %v1166
        %v1326 = vsel %vm1306, %v1180, %v1325
        %v1327 = vsel %vm1308, %v1187, %v1326
        %v1328 = vsel %vm1310, %v1194, %v1327
        %v1329 = vsel %vm1312, %v1201, %v1328
        %v1330 = vsel %vm1314, %v1208, %v1329
        %v1331 = vsel %vm1316, %v1215, %v1330
        %v1332 = vsel %vm1304, %v1229, %v1222
        %v1333 = vsel %vm1306, %v1236, %v1332
        %v1334 = vsel %vm1308, %v1243, %v1333
        %v1335 = vsel %vm1310, %v1250, %v1334
        %v1336 = vsel %vm1312, %v1257, %v1335
        %v1337 = vsel %vm1314, %v1264, %v1336
        %v1338 = vsel %vm1316, %v1271, %v1337
        %v1343 = vrot.slane %v1317, 7
        %v1344 = vrot.slane %v1324, 7
        %v1345 = vrot.slane %v1331, 7
        %v1346 = vrot.slane %v1338, 7
        %v1347 = vsel %vm615, %v1345, %v1346
        %v1348 = vsel %vm615, %v1344, %v1345
        %v1349 = vsel %vm615, %v1343, %v1344
        %v1350 = vsel %vm615, %v1346, %v1343
        %v1351 = vsel %vm599, 0.0, %v1350
        %v1352 = vsel %vm600, 0.0, %v1349
        %v1353 = vsel %vm601, 0.0, %v1348
        %v1354 = vsel %vm602, 0.0, %v1347
        %vm1355 = vcmp.eq.s32.totalorder %v591, 31
        %vm1356 = vcmp.eq.s32.totalorder %v592, 31
        %vm1357 = vcmp.eq.s32.totalorder %v593, 31
        %vm1358 = vcmp.eq.s32.totalorder %v594, 31
        %v1359 = vrot.slane %v1317, 1
        %v1360 = vrot.slane %v1324, 1
        %v1361 = vrot.slane %v1331, 1
        %v1362 = vrot.slane %v1338, 1
        %v1363 = vsel %vm648, %v1361, %v1362
        %v1364 = vsel %vm648, %v1360, %v1361
        %v1365 = vsel %vm648, %v1359, %v1360
        %v1366 = vsel %vm648, %v1362, %v1359
        %v1367 = vsel %vm1355, 0.0, %v1365
        %v1368 = vsel %vm1356, 0.0, %v1364
        %v1369 = vsel %vm1357, 0.0, %v1363
        %v1370 = vsel %vm1358, 0.0, %v1366
        %v1371 = vld [vmem:[#allocation3] sm:$0xf]
        %v1372 = vld [vmem:[#allocation3 + $0x4] sm:$0xf]
        %v1373 = vld [vmem:[#allocation3 + $0x8] sm:$0xf]
        %v1374 = vld [vmem:[#allocation3 + $0xc] sm:$0xf]
        %s1375 = scalar_lea.vmem [#allocation3], 16
        %v1376 = vld [vmem:[%s1375] sm:$0xf]
        %v1377 = vld [vmem:[%s1375 + $0x4] sm:$0xf]
        %v1378 = vld [vmem:[%s1375 + $0x8] sm:$0xf]
        %v1379 = vld [vmem:[%s1375 + $0xc] sm:$0xf]
        %s1380 = scalar_lea.vmem [#allocation3], 32
        %v1381 = vld [vmem:[%s1380] sm:$0xf]
        %v1382 = vld [vmem:[%s1380 + $0x4] sm:$0xf]
        %v1383 = vld [vmem:[%s1380 + $0x8] sm:$0xf]
        %v1384 = vld [vmem:[%s1380 + $0xc] sm:$0xf]
        %v1385 = vpack.c.bf16 %v1352, %v1351
        %v1386 = vpack.c.bf16 %v1354, %v1353
        %v1387 = vpack.c.bf16 %v1054, %v1054
        %v1388 = vpack.c.bf16 %v1061, %v1061
        %v1389 = vpack.c.bf16 %v1068, %v1068
        %v1390 = vpack.c.bf16 %v1075, %v1075
        %v1391 = vpack.c.bf16 %v1082, %v1082
        %v1392 = vpack.c.bf16 %v1089, %v1089
        %v1393 = vpack.c.bf16 %v1096, %v1096
        %v1394 = vpack.c.bf16 %v1103, %v1103
        %v1395 = vpack.c.bf16 %v1110, %v1110
        %v1396 = vpack.c.bf16 %v1117, %v1117
        %v1397 = vpack.c.bf16 %v1124, %v1124
        %v1398 = vpack.c.bf16 %v1131, %v1131
        %v1399 = vpack.c.bf16 %v1138, %v1138
        %v1400 = vpack.c.bf16 %v1145, %v1145
        %v1401 = vpack.c.bf16 %v1152, %v1152
        %v1402 = vpack.c.bf16 %v1159, %v1159
        %v1403 = vpack.c.bf16 %v1166, %v1166
        %v1404 = vpack.c.bf16 %v1173, %v1173
        %v1405 = vpack.c.bf16 %v1180, %v1180
        %v1406 = vpack.c.bf16 %v1187, %v1187
        %v1407 = vpack.c.bf16 %v1194, %v1194
        %v1408 = vpack.c.bf16 %v1201, %v1201
        %v1409 = vpack.c.bf16 %v1208, %v1208
        %v1410 = vpack.c.bf16 %v1215, %v1215
        %v1411 = vpack.c.bf16 %v1222, %v1222
        %v1412 = vpack.c.bf16 %v1229, %v1229
        %v1413 = vpack.c.bf16 %v1236, %v1236
        %v1414 = vpack.c.bf16 %v1243, %v1243
        %v1415 = vpack.c.bf16 %v1250, %v1250
        %v1416 = vpack.c.bf16 %v1257, %v1257
        %v1417 = vpack.c.bf16 %v1264, %v1264
        %v1418 = vpack.c.bf16 %v1271, %v1271
        %v1451 = vunpack.c.l.b16 %v1387
        %v1452 = vunpack.c.l.b16 %v1388
        %v1453 = vunpack.c.l.b16 %v1389
        %v1454 = vunpack.c.l.b16 %v1390
        %v1455 = vunpack.c.l.b16 %v1391
        %v1456 = vunpack.c.l.b16 %v1392
        %v1457 = vunpack.c.l.b16 %v1393
        %v1458 = vunpack.c.l.b16 %v1394
        %v1459 = vunpack.c.l.b16 %v1395
        %v1460 = vunpack.c.l.b16 %v1396
        %v1461 = vunpack.c.l.b16 %v1397
        %v1462 = vunpack.c.l.b16 %v1398
        %v1463 = vunpack.c.l.b16 %v1399
        %v1464 = vunpack.c.l.b16 %v1400
        %v1465 = vunpack.c.l.b16 %v1401
        %v1466 = vunpack.c.l.b16 %v1402
        %v1467 = vunpack.c.l.b16 %v1403
        %v1468 = vunpack.c.l.b16 %v1404
        %v1469 = vunpack.c.l.b16 %v1405
        %v1470 = vunpack.c.l.b16 %v1406
        %v1471 = vunpack.c.l.b16 %v1407
        %v1472 = vunpack.c.l.b16 %v1408
        %v1473 = vunpack.c.l.b16 %v1409
        %v1474 = vunpack.c.l.b16 %v1410
        %v1475 = vunpack.c.l.b16 %v1411
        %v1476 = vunpack.c.l.b16 %v1412
        %v1477 = vunpack.c.l.b16 %v1413
        %v1478 = vunpack.c.l.b16 %v1414
        %v1479 = vunpack.c.l.b16 %v1415
        %v1480 = vunpack.c.l.b16 %v1416
        %v1481 = vunpack.c.l.b16 %v1417
        %v1482 = vunpack.c.l.b16 %v1418
        %v1483 = vsel %vm1304, %v1452, %v1451
        %v1484 = vsel %vm1306, %v1453, %v1483
        %v1485 = vsel %vm1308, %v1454, %v1484
        %v1486 = vsel %vm1310, %v1455, %v1485
        %v1487 = vsel %vm1312, %v1456, %v1486
        %v1488 = vsel %vm1314, %v1457, %v1487
        %v1489 = vsel %vm1316, %v1458, %v1488
        %v1490 = vsel %vm1304, %v1460, %v1459
        %v1491 = vsel %vm1306, %v1461, %v1490
        %v1492 = vsel %vm1308, %v1462, %v1491
        %v1493 = vsel %vm1310, %v1463, %v1492
        %v1494 = vsel %vm1312, %v1464, %v1493
        %v1495 = vsel %vm1314, %v1465, %v1494
        %v1496 = vsel %vm1316, %v1466, %v1495
        %v1497 = vsel %vm1304, %v1468, %v1467
        %v1498 = vsel %vm1306, %v1469, %v1497
        %v1499 = vsel %vm1308, %v1470, %v1498
        %v1500 = vsel %vm1310, %v1471, %v1499
        %v1501 = vsel %vm1312, %v1472, %v1500
        %v1502 = vsel %vm1314, %v1473, %v1501
        %v1503 = vsel %vm1316, %v1474, %v1502
        %v1504 = vsel %vm1304, %v1476, %v1475
        %v1505 = vsel %vm1306, %v1477, %v1504
        %v1506 = vsel %vm1308, %v1478, %v1505
        %v1507 = vsel %vm1310, %v1479, %v1506
        %v1508 = vsel %vm1312, %v1480, %v1507
        %v1509 = vsel %vm1314, %v1481, %v1508
        %v1510 = vsel %vm1316, %v1482, %v1509
        %v1511 = vpack.c.b16 %v1496, %v1489
        %v1512 = vpack.c.b16 %v1510, %v1503
        %v1517 = vunpack.c.l.b16 %v1376
        %v1518 = vunpack.c.l.b16 %v1377
        %v1519 = vunpack.c.l.b16 %v1378
        %v1520 = vunpack.c.l.b16 %v1379
        %v1521 = vpack.c.b16 %v1518, %v1517
        %v1522 = vpack.c.b16 %v1520, %v1519
        %vm1525 = vcmask 261120
        %v1527 = vsel %vm1525, %v1511, 0
        %v1530 = vsel %vm1525, %v1512, 0
        %1532 = vmatprep.subr.bf16.mxu0 0
        %1533 = vmatpush1.bf16.msra.mxu0 %v1521
        %1534 = vmatprep.subr.bf16.mxu0 0
        %1535 = vmatpush1.bf16.msra.mxu0 %v1522
        %1536 = vmatprep.subr.bf16.mxu0 0
        %1537 = vmatpush1.bf16.msra.mxu0 0
        %1538 = vmatprep.subr.bf16.mxu0 0
        %1539 = vmatpush1.bf16.msra.mxu0 0
        %1540 = vmatprep.subr.bf16.mxu0 0
        %1541 = vmatpush1.bf16.msra.mxu0 0
        %1542 = vmatprep.subr.bf16.mxu0 0
        %1543 = vmatpush1.bf16.msra.mxu0 0
        %1544 = vmatprep.subr.bf16.mxu0 0
        %1545 = vmatpush1.bf16.msra.mxu0 0
        %1546 = vmatprep.subr.bf16.mxu0 0
        %1547 = vmatpush1.bf16.msra.mxu0 0
        %1548 = vmatprep.subr.bf16.mxu0 0
        %1549 = vmatpush1.bf16.msra.mxu0 0
        %1550 = vmatprep.subr.bf16.mxu0 0
        %1551 = vmatpush1.bf16.msra.mxu0 0
        %1552 = vmatprep.subr.bf16.mxu0 0
        %1553 = vmatpush1.bf16.msra.mxu0 0
        %1554 = vmatprep.subr.bf16.mxu0 0
        %1555 = vmatpush1.bf16.msra.mxu0 0
        %1556 = vmatprep.subr.bf16.mxu0 0
        %1557 = vmatpush1.bf16.msra.mxu0 0
        %1558 = vmatprep.subr.bf16.mxu0 0
        %1559 = vmatpush1.bf16.msra.mxu0 0
        %1560 = vmatprep.subr.bf16.mxu0 0
        %1561 = vmatpush1.bf16.msra.mxu0 0
        %1562 = vmatprep.subr.bf16.mxu0 0
        %1563 = vmatpush1.bf16.msra.mxu0 0
        %1564 = vmatprep.mubr.bf16.mxu0 0
        %1565 = vmatmul.mubr.bf16.gmra.mrb[0].mxu0 %v1527
        %v1566 = vpop.f32.mrb[0].mxu0
        %v1567 = vadd.f32 0.0, %v1566
        %v1568 = vpop.f32.mrb[0].mxu0
        %v1569 = vpop.f32.mrb[0].mxu0
        %v1570 = vadd.f32 0.0, %v1569
        %v1571 = vpop.f32.mrb[0].mxu0
        %1572 = vmatprep.mubr.bf16.mxu0 0
        %1573 = vmatmul.mubr.bf16.gmra.mrb[0].mxu0 %v1530
        %v1574 = vpop.f32.mrb[0].mxu0
        %v1575 = vadd.f32 0.0, %v1574
        %v1576 = vpop.f32.mrb[0].mxu0
        %v1577 = vpop.f32.mrb[0].mxu0
        %v1578 = vadd.f32 0.0, %v1577
        %v1579 = vpop.f32.mrb[0].mxu0
        %1580 = vdwg.mxu0
        %v1585 = vunpack.c.l.b16 %v1371
        %v1586 = vunpack.c.l.b16 %v1372
        %v1587 = vunpack.c.l.b16 %v1373
        %v1588 = vunpack.c.l.b16 %v1374
        %v1589 = vpack.c.b16 %v1586, %v1585
        %v1590 = vpack.c.b16 %v1588, %v1587
        %v1594 = vsel %vm1525, %v1385, 0
        %v1597 = vsel %vm1525, %v1386, 0
        %1599 = vmatprep.subr.bf16.mxu0 0
        %1600 = vmatpush1.bf16.msra.mxu0 %v1589
        %1601 = vmatprep.subr.bf16.mxu0 0
        %1602 = vmatpush1.bf16.msra.mxu0 %v1590
        %1603 = vmatprep.subr.bf16.mxu0 0
        %1604 = vmatpush1.bf16.msra.mxu0 0
        %1605 = vmatprep.subr.bf16.mxu0 0
        %1606 = vmatpush1.bf16.msra.mxu0 0
        %1607 = vmatprep.subr.bf16.mxu0 0
        %1608 = vmatpush1.bf16.msra.mxu0 0
        %1609 = vmatprep.subr.bf16.mxu0 0
        %1610 = vmatpush1.bf16.msra.mxu0 0
        %1611 = vmatprep.subr.bf16.mxu0 0
        %1612 = vmatpush1.bf16.msra.mxu0 0
        %1613 = vmatprep.subr.bf16.mxu0 0
        %1614 = vmatpush1.bf16.msra.mxu0 0
        %1615 = vmatprep.subr.bf16.mxu0 0
        %1616 = vmatpush1.bf16.msra.mxu0 0
        %1617 = vmatprep.subr.bf16.mxu0 0
        %1618 = vmatpush1.bf16.msra.mxu0 0
        %1619 = vmatprep.subr.bf16.mxu0 0
        %1620 = vmatpush1.bf16.msra.mxu0 0
        %1621 = vmatprep.subr.bf16.mxu0 0
        %1622 = vmatpush1.bf16.msra.mxu0 0
        %1623 = vmatprep.subr.bf16.mxu0 0
        %1624 = vmatpush1.bf16.msra.mxu0 0
        %1625 = vmatprep.subr.bf16.mxu0 0
        %1626 = vmatpush1.bf16.msra.mxu0 0
        %1627 = vmatprep.subr.bf16.mxu0 0
        %1628 = vmatpush1.bf16.msra.mxu0 0
        %1629 = vmatprep.subr.bf16.mxu0 0
        %1630 = vmatpush1.bf16.msra.mxu0 0
        %1631 = vmatprep.mubr.bf16.mxu0 0
        %1632 = vmatmul.mubr.bf16.gmra.mrb[0].mxu0 %v1594
        %v1633 = vpop.f32.mrb[0].mxu0
        %v1634 = vadd.f32 %v1567, %v1633
        %v1635 = vpop.f32.mrb[0].mxu0
        %v1636 = vpop.f32.mrb[0].mxu0
        %v1637 = vadd.f32 %v1570, %v1636
        %v1638 = vpop.f32.mrb[0].mxu0
        %1639 = vmatprep.mubr.bf16.mxu0 0
        %1640 = vmatmul.mubr.bf16.gmra.mrb[0].mxu0 %v1597
        %v1641 = vpop.f32.mrb[0].mxu0
        %v1642 = vadd.f32 %v1575, %v1641
        %v1643 = vpop.f32.mrb[0].mxu0
        %v1644 = vpop.f32.mrb[0].mxu0
        %v1645 = vadd.f32 %v1578, %v1644
        %v1646 = vpop.f32.mrb[0].mxu0
        %1647 = vdwg.mxu0
        %v1648 = vpack.c.bf16 %v1368, %v1367
        %v1649 = vpack.c.bf16 %v1370, %v1369
        %v1654 = vunpack.c.l.b16 %v1381
        %v1655 = vunpack.c.l.b16 %v1382
        %v1656 = vunpack.c.l.b16 %v1383
        %v1657 = vunpack.c.l.b16 %v1384
        %v1658 = vpack.c.b16 %v1655, %v1654
        %v1659 = vpack.c.b16 %v1657, %v1656
        %v1663 = vsel %vm1525, %v1648, 0
        %v1666 = vsel %vm1525, %v1649, 0
        %1668 = vmatprep.subr.bf16.mxu0 0
        %1669 = vmatpush1.bf16.msra.mxu0 %v1658
        %1670 = vmatprep.subr.bf16.mxu0 0
        %1671 = vmatpush1.bf16.msra.mxu0 %v1659
        %1672 = vmatprep.subr.bf16.mxu0 0
        %1673 = vmatpush1.bf16.msra.mxu0 0
        %1674 = vmatprep.subr.bf16.mxu0 0
        %1675 = vmatpush1.bf16.msra.mxu0 0
        %1676 = vmatprep.subr.bf16.mxu0 0
        %1677 = vmatpush1.bf16.msra.mxu0 0
        %1678 = vmatprep.subr.bf16.mxu0 0
        %1679 = vmatpush1.bf16.msra.mxu0 0
        %1680 = vmatprep.subr.bf16.mxu0 0
        %1681 = vmatpush1.bf16.msra.mxu0 0
        %1682 = vmatprep.subr.bf16.mxu0 0
        %1683 = vmatpush1.bf16.msra.mxu0 0
        %1684 = vmatprep.subr.bf16.mxu0 0
        %1685 = vmatpush1.bf16.msra.mxu0 0
        %1686 = vmatprep.subr.bf16.mxu0 0
        %1687 = vmatpush1.bf16.msra.mxu0 0
        %1688 = vmatprep.subr.bf16.mxu0 0
        %1689 = vmatpush1.bf16.msra.mxu0 0
        %1690 = vmatprep.subr.bf16.mxu0 0
        %1691 = vmatpush1.bf16.msra.mxu0 0
        %1692 = vmatprep.subr.bf16.mxu0 0
        %1693 = vmatpush1.bf16.msra.mxu0 0
        %1694 = vmatprep.subr.bf16.mxu0 0
        %1695 = vmatpush1.bf16.msra.mxu0 0
        %1696 = vmatprep.subr.bf16.mxu0 0
        %1697 = vmatpush1.bf16.msra.mxu0 0
        %1698 = vmatprep.subr.bf16.mxu0 0
        %1699 = vmatpush1.bf16.msra.mxu0 0
        %1700 = vmatprep.mubr.bf16.mxu0 0
        %1701 = vmatmul.mubr.bf16.gmra.mrb[0].mxu0 %v1663
        %v1702 = vpop.f32.mrb[0].mxu0
        %v1703 = vadd.f32 0.0, %v1702
        %v1704 = vpop.f32.mrb[0].mxu0
        %v1705 = vpop.f32.mrb[0].mxu0
        %v1706 = vadd.f32 0.0, %v1705
        %v1707 = vpop.f32.mrb[0].mxu0
        %1708 = vmatprep.mubr.bf16.mxu0 0
        %1709 = vmatmul.mubr.bf16.gmra.mrb[0].mxu0 %v1666
        %v1710 = vpop.f32.mrb[0].mxu0
        %v1711 = vadd.f32 0.0, %v1710
        %v1712 = vpop.f32.mrb[0].mxu0
        %v1713 = vpop.f32.mrb[0].mxu0
        %v1714 = vadd.f32 0.0, %v1713
        %v1715 = vpop.f32.mrb[0].mxu0
        %1716 = vdwg.mxu0
        %v1717 = vadd.f32 %v1634, %v1703
        %v1718 = vadd.f32 %v1637, %v1706
        %v1719 = vadd.f32 %v1642, %v1711
        %v1720 = vadd.f32 %v1645, %v1714
        %v1721 = vld [vmem:[%s4] sm:$0x1]
        %v1723 = vlaneseq
        %v1724 = vshrl.u32 %v1723, 7
        %v1725 = vsub.s32 0, %v1724
        %v1726 = vrot.slane %v1721, %v1725
        %v1728 = vadd.f32 %v1717, %v1726
        %v1729 = vadd.f32 %v1718, %v1726
        %v1730 = vadd.f32 %v1719, %v1726
        %v1731 = vadd.f32 %v1720, %v1726
        %v1732 = vmax.f32 %v1728, 0.0
        %v1733 = vmax.f32 %v1729, 0.0
        %v1734 = vmax.f32 %v1730, 0.0
        %v1735 = vmax.f32 %v1731, 0.0
        %v1740 = vcombine.high %v1732, %v1732
        %v1742 = vunpack.c.l.s4 1983009808
        %v1743 = vunpack.c.0.s8 %v1742
        %v1744 = vlaneseq
        %v1745 = vshrl.u32 %v1744, 7
        %v1746 = vsub.s32 %v1743, %v1745
        %v1747 = vrot.slane %v1732, %v1746
        %v1749 = vunpack.c.l.s4 1983009808
        %v1750 = vunpack.c.0.s8 %v1749
        %v1751 = vlaneseq
        %v1752 = vshrl.u32 %v1751, 7
        %v1753 = vsub.s32 %v1750, %v1752
        %v1754 = vrot.slane %v1740, %v1753
        %v1755 = vcombine.high %v1747, %v1747
        %v1756 = vcombine.high %v1754, %v1754
        %v1757 = vcombine.high %v1733, %v1733
        %v1759 = vunpack.c.l.s4 1983009808
        %v1760 = vunpack.c.0.s8 %v1759
        %v1761 = vlaneseq
        %v1762 = vshrl.u32 %v1761, 7
        %v1763 = vsub.s32 %v1760, %v1762
        %v1764 = vrot.slane %v1733, %v1763
        %v1766 = vunpack.c.l.s4 1983009808
        %v1767 = vunpack.c.0.s8 %v1766
        %v1768 = vlaneseq
        %v1769 = vshrl.u32 %v1768, 7
        %v1770 = vsub.s32 %v1767, %v1769
        %v1771 = vrot.slane %v1757, %v1770
        %v1772 = vcombine.high %v1764, %v1764
        %v1773 = vcombine.high %v1771, %v1771
        %v1774 = vcombine.high %v1734, %v1734
        %v1776 = vunpack.c.l.s4 1983009808
        %v1777 = vunpack.c.0.s8 %v1776
        %v1778 = vlaneseq
        %v1779 = vshrl.u32 %v1778, 7
        %v1780 = vsub.s32 %v1777, %v1779
        %v1781 = vrot.slane %v1734, %v1780
        %v1783 = vunpack.c.l.s4 1983009808
        %v1784 = vunpack.c.0.s8 %v1783
        %v1785 = vlaneseq
        %v1786 = vshrl.u32 %v1785, 7
        %v1787 = vsub.s32 %v1784, %v1786
        %v1788 = vrot.slane %v1774, %v1787
        %v1789 = vcombine.high %v1781, %v1781
        %v1790 = vcombine.high %v1788, %v1788
        %v1791 = vcombine.high %v1735, %v1735
        %v1793 = vunpack.c.l.s4 1983009808
        %v1794 = vunpack.c.0.s8 %v1793
        %v1795 = vlaneseq
        %v1796 = vshrl.u32 %v1795, 7
        %v1797 = vsub.s32 %v1794, %v1796
        %v1798 = vrot.slane %v1735, %v1797
        %v1800 = vunpack.c.l.s4 1983009808
        %v1801 = vunpack.c.0.s8 %v1800
        %v1802 = vlaneseq
        %v1803 = vshrl.u32 %v1802, 7
        %v1804 = vsub.s32 %v1801, %v1803
        %v1805 = vrot.slane %v1791, %v1804
        %v1806 = vcombine.high %v1798, %v1798
        %v1807 = vcombine.high %v1805, %v1805
        %vm1824 = vcmask 517120
        %v1825 = vsel %vm1824, %v1747, -inf
        %v1826 = vrot.slane %v1825, 4
        %v1827 = vmax.f32 %v1825, %v1826
        %v1828 = vrot.slane %v1827, 2
        %v1829 = vmax.f32 %v1827, %v1828
        %v1830 = vrot.slane %v1829, 1
        %v1831 = vmax.f32 %v1829, %v1830
        %v1832 = vsel %vm1824, %v1755, -inf
        %v1833 = vrot.slane %v1832, 4
        %v1834 = vmax.f32 %v1832, %v1833
        %v1835 = vrot.slane %v1834, 2
        %v1836 = vmax.f32 %v1834, %v1835
        %v1837 = vrot.slane %v1836, 1
        %v1838 = vmax.f32 %v1836, %v1837
        %v1839 = vsel %vm1824, %v1754, -inf
        %v1840 = vrot.slane %v1839, 4
        %v1841 = vmax.f32 %v1839, %v1840
        %v1842 = vrot.slane %v1841, 2
        %v1843 = vmax.f32 %v1841, %v1842
        %v1844 = vrot.slane %v1843, 1
        %v1845 = vmax.f32 %v1843, %v1844
        %v1846 = vsel %vm1824, %v1756, -inf
        %v1847 = vrot.slane %v1846, 4
        %v1848 = vmax.f32 %v1846, %v1847
        %v1849 = vrot.slane %v1848, 2
        %v1850 = vmax.f32 %v1848, %v1849
        %v1851 = vrot.slane %v1850, 1
        %v1852 = vmax.f32 %v1850, %v1851
        %v1853 = vsel %vm1824, %v1764, -inf
        %v1854 = vrot.slane %v1853, 4
        %v1855 = vmax.f32 %v1853, %v1854
        %v1856 = vrot.slane %v1855, 2
        %v1857 = vmax.f32 %v1855, %v1856
        %v1858 = vrot.slane %v1857, 1
        %v1859 = vmax.f32 %v1857, %v1858
        %v1860 = vsel %vm1824, %v1772, -inf
        %v1861 = vrot.slane %v1860, 4
        %v1862 = vmax.f32 %v1860, %v1861
        %v1863 = vrot.slane %v1862, 2
        %v1864 = vmax.f32 %v1862, %v1863
        %v1865 = vrot.slane %v1864, 1
        %v1866 = vmax.f32 %v1864, %v1865
        %v1867 = vsel %vm1824, %v1771, -inf
        %v1868 = vrot.slane %v1867, 4
        %v1869 = vmax.f32 %v1867, %v1868
        %v1870 = vrot.slane %v1869, 2
        %v1871 = vmax.f32 %v1869, %v1870
        %v1872 = vrot.slane %v1871, 1
        %v1873 = vmax.f32 %v1871, %v1872
        %v1874 = vsel %vm1824, %v1773, -inf
        %v1875 = vrot.slane %v1874, 4
        %v1876 = vmax.f32 %v1874, %v1875
        %v1877 = vrot.slane %v1876, 2
        %v1878 = vmax.f32 %v1876, %v1877
        %v1879 = vrot.slane %v1878, 1
        %v1880 = vmax.f32 %v1878, %v1879
        %v1881 = vsel %vm1824, %v1781, -inf
        %v1882 = vrot.slane %v1881, 4
        %v1883 = vmax.f32 %v1881, %v1882
        %v1884 = vrot.slane %v1883, 2
        %v1885 = vmax.f32 %v1883, %v1884
        %v1886 = vrot.slane %v1885, 1
        %v1887 = vmax.f32 %v1885, %v1886
        %v1888 = vsel %vm1824, %v1789, -inf
        %v1889 = vrot.slane %v1888, 4
        %v1890 = vmax.f32 %v1888, %v1889
        %v1891 = vrot.slane %v1890, 2
        %v1892 = vmax.f32 %v1890, %v1891
        %v1893 = vrot.slane %v1892, 1
        %v1894 = vmax.f32 %v1892, %v1893
        %v1895 = vsel %vm1824, %v1788, -inf
        %v1896 = vrot.slane %v1895, 4
        %v1897 = vmax.f32 %v1895, %v1896
        %v1898 = vrot.slane %v1897, 2
        %v1899 = vmax.f32 %v1897, %v1898
        %v1900 = vrot.slane %v1899, 1
        %v1901 = vmax.f32 %v1899, %v1900
        %v1902 = vsel %vm1824, %v1790, -inf
        %v1903 = vrot.slane %v1902, 4
        %v1904 = vmax.f32 %v1902, %v1903
        %v1905 = vrot.slane %v1904, 2
        %v1906 = vmax.f32 %v1904, %v1905
        %v1907 = vrot.slane %v1906, 1
        %v1908 = vmax.f32 %v1906, %v1907
        %v1909 = vsel %vm1824, %v1798, -inf
        %v1910 = vrot.slane %v1909, 4
        %v1911 = vmax.f32 %v1909, %v1910
        %v1912 = vrot.slane %v1911, 2
        %v1913 = vmax.f32 %v1911, %v1912
        %v1914 = vrot.slane %v1913, 1
        %v1915 = vmax.f32 %v1913, %v1914
        %v1916 = vsel %vm1824, %v1806, -inf
        %v1917 = vrot.slane %v1916, 4
        %v1918 = vmax.f32 %v1916, %v1917
        %v1919 = vrot.slane %v1918, 2
        %v1920 = vmax.f32 %v1918, %v1919
        %v1921 = vrot.slane %v1920, 1
        %v1922 = vmax.f32 %v1920, %v1921
        %v1923 = vsel %vm1824, %v1805, -inf
        %v1924 = vrot.slane %v1923, 4
        %v1925 = vmax.f32 %v1923, %v1924
        %v1926 = vrot.slane %v1925, 2
        %v1927 = vmax.f32 %v1925, %v1926
        %v1928 = vrot.slane %v1927, 1
        %v1929 = vmax.f32 %v1927, %v1928
        %v1930 = vsel %vm1824, %v1807, -inf
        %v1931 = vrot.slane %v1930, 4
        %v1932 = vmax.f32 %v1930, %v1931
        %v1933 = vrot.slane %v1932, 2
        %v1934 = vmax.f32 %v1932, %v1933
        %v1935 = vrot.slane %v1934, 1
        %v1936 = vmax.f32 %v1934, %v1935
        %v1953 = vsel %vm1304, %v1838, %v1831
        %v1954 = vsel %vm1306, %v1845, %v1953
        %v1955 = vsel %vm1308, %v1852, %v1954
        %v1956 = vsel %vm1310, %v1859, %v1955
        %v1957 = vsel %vm1312, %v1866, %v1956
        %v1958 = vsel %vm1314, %v1873, %v1957
        %v1959 = vsel %vm1316, %v1880, %v1958
        %v1960 = vsel %vm1304, %v1894, %v1887
        %v1961 = vsel %vm1306, %v1901, %v1960
        %v1962 = vsel %vm1308, %v1908, %v1961
        %v1963 = vsel %vm1310, %v1915, %v1962
        %v1964 = vsel %vm1312, %v1922, %v1963
        %v1965 = vsel %vm1314, %v1929, %v1964
        %v1966 = vsel %vm1316, %v1936, %v1965
        %v1969 = vrot.slane %v1959, 7
        %v1970 = vrot.slane %v1966, 7
        %v1971 = vsel %vm615, %v1969, %v1970
        %v1972 = vsel %vm615, %v1970, %v1969
        %v1973 = vsel %vm599, 0.0, %v1972
        %v1974 = vsel %vm600, 0.0, %v1971
        %vm1975 = vcmp.eq.s32.totalorder %v591, 15
        %vm1976 = vcmp.eq.s32.totalorder %v592, 15
        %v1977 = vrot.slane %v1959, 1
        %v1978 = vrot.slane %v1966, 1
        %v1979 = vsel %vm648, %v1977, %v1978
        %v1980 = vsel %vm648, %v1978, %v1977
        %v1981 = vsel %vm1975, 0.0, %v1979
        %v1982 = vsel %vm1976, 0.0, %v1980
        %v1983 = vld [vmem:[%s5] sm:$0xf]
        %v1984 = vld [vmem:[%s5 + $0x4] sm:$0xf]
        %v1985 = vld [vmem:[%s5 + $0x8] sm:$0xf]
        %v1986 = vld [vmem:[%s5 + $0xc] sm:$0xf]
        %v1987 = vld [vmem:[%s5 + $0x10] sm:$0xf]
        %v1988 = vld [vmem:[%s5 + $0x14] sm:$0xf]
        %v1989 = vld [vmem:[%s5 + $0x18] sm:$0xf]
        %v1990 = vld [vmem:[%s5 + $0x1c] sm:$0xf]
        %s1991 = scalar_lea.vmem %s5, 32
        %v1992 = vld [vmem:[%s1991] sm:$0xf]
        %v1993 = vld [vmem:[%s1991 + $0x4] sm:$0xf]
        %v1994 = vld [vmem:[%s1991 + $0x8] sm:$0xf]
        %v1995 = vld [vmem:[%s1991 + $0xc] sm:$0xf]
        %v1996 = vld [vmem:[%s1991 + $0x10] sm:$0xf]
        %v1997 = vld [vmem:[%s1991 + $0x14] sm:$0xf]
        %v1998 = vld [vmem:[%s1991 + $0x18] sm:$0xf]
        %v1999 = vld [vmem:[%s1991 + $0x1c] sm:$0xf]
        %s2000 = scalar_lea.vmem %s5, 64
        %v2001 = vld [vmem:[%s2000] sm:$0xf]
        %v2002 = vld [vmem:[%s2000 + $0x4] sm:$0xf]
        %v2003 = vld [vmem:[%s2000 + $0x8] sm:$0xf]
        %v2004 = vld [vmem:[%s2000 + $0xc] sm:$0xf]
        %v2005 = vld [vmem:[%s2000 + $0x10] sm:$0xf]
        %v2006 = vld [vmem:[%s2000 + $0x14] sm:$0xf]
        %v2007 = vld [vmem:[%s2000 + $0x18] sm:$0xf]
        %v2008 = vld [vmem:[%s2000 + $0x1c] sm:$0xf]
        %v2009 = vpack.c.bf16 %v1974, %v1973
        %v2010 = vpack.c.bf16 %v1831, %v1831
        %v2011 = vpack.c.bf16 %v1838, %v1838
        %v2012 = vpack.c.bf16 %v1845, %v1845
        %v2013 = vpack.c.bf16 %v1852, %v1852
        %v2014 = vpack.c.bf16 %v1859, %v1859
        %v2015 = vpack.c.bf16 %v1866, %v1866
        %v2016 = vpack.c.bf16 %v1873, %v1873
        %v2017 = vpack.c.bf16 %v1880, %v1880
        %v2018 = vpack.c.bf16 %v1887, %v1887
        %v2019 = vpack.c.bf16 %v1894, %v1894
        %v2020 = vpack.c.bf16 %v1901, %v1901
        %v2021 = vpack.c.bf16 %v1908, %v1908
        %v2022 = vpack.c.bf16 %v1915, %v1915
        %v2023 = vpack.c.bf16 %v1922, %v1922
        %v2024 = vpack.c.bf16 %v1929, %v1929
        %v2025 = vpack.c.bf16 %v1936, %v1936
        %v2042 = vunpack.c.l.b16 %v2010
        %v2043 = vunpack.c.l.b16 %v2011
        %v2044 = vunpack.c.l.b16 %v2012
        %v2045 = vunpack.c.l.b16 %v2013
        %v2046 = vunpack.c.l.b16 %v2014
        %v2047 = vunpack.c.l.b16 %v2015
        %v2048 = vunpack.c.l.b16 %v2016
        %v2049 = vunpack.c.l.b16 %v2017
        %v2050 = vunpack.c.l.b16 %v2018
        %v2051 = vunpack.c.l.b16 %v2019
        %v2052 = vunpack.c.l.b16 %v2020
        %v2053 = vunpack.c.l.b16 %v2021
        %v2054 = vunpack.c.l.b16 %v2022
        %v2055 = vunpack.c.l.b16 %v2023
        %v2056 = vunpack.c.l.b16 %v2024
        %v2057 = vunpack.c.l.b16 %v2025
        %v2058 = vsel %vm1304, %v2043, %v2042
        %v2059 = vsel %vm1306, %v2044, %v2058
        %v2060 = vsel %vm1308, %v2045, %v2059
        %v2061 = vsel %vm1310, %v2046, %v2060
        %v2062 = vsel %vm1312, %v2047, %v2061
        %v2063 = vsel %vm1314, %v2048, %v2062
        %v2064 = vsel %vm1316, %v2049, %v2063
        %v2065 = vsel %vm1304, %v2051, %v2050
        %v2066 = vsel %vm1306, %v2052, %v2065
        %v2067 = vsel %vm1308, %v2053, %v2066
        %v2068 = vsel %vm1310, %v2054, %v2067
        %v2069 = vsel %vm1312, %v2055, %v2068
        %v2070 = vsel %vm1314, %v2056, %v2069
        %v2071 = vsel %vm1316, %v2057, %v2070
        %v2072 = vpack.c.b16 %v2071, %v2064
        %v2081 = vunpack.c.l.b16 %v1992
        %v2082 = vunpack.c.l.b16 %v1993
        %v2083 = vunpack.c.l.b16 %v1994
        %v2084 = vunpack.c.l.b16 %v1995
        %v2085 = vunpack.c.l.b16 %v1996
        %v2086 = vunpack.c.l.b16 %v1997
        %v2087 = vunpack.c.l.b16 %v1998
        %v2088 = vunpack.c.l.b16 %v1999
        %v2089 = vpack.c.b16 %v2082, %v2081
        %v2090 = vpack.c.b16 %v2084, %v2083
        %v2091 = vpack.c.b16 %v2086, %v2085
        %v2092 = vpack.c.b16 %v2088, %v2087
        %vm2097 = vcmask 523264
        %v2099 = vsel %vm2097, %v2072, 0
        %2101 = vmatprep.subr.bf16.mxu0 0
        %2102 = vmatpush1.bf16.msra.mxu0 %v2089
        %2103 = vmatprep.subr.bf16.mxu0 0
        %2104 = vmatpush1.bf16.msra.mxu0 %v2090
        %2105 = vmatprep.subr.bf16.mxu0 0
        %2106 = vmatpush1.bf16.msra.mxu0 %v2091
        %2107 = vmatprep.subr.bf16.mxu0 0
        %2108 = vmatpush1.bf16.msra.mxu0 %v2092
        %2109 = vmatprep.subr.bf16.mxu0 0
        %2110 = vmatpush1.bf16.msra.mxu0 0
        %2111 = vmatprep.subr.bf16.mxu0 0
        %2112 = vmatpush1.bf16.msra.mxu0 0
        %2113 = vmatprep.subr.bf16.mxu0 0
        %2114 = vmatpush1.bf16.msra.mxu0 0
        %2115 = vmatprep.subr.bf16.mxu0 0
        %2116 = vmatpush1.bf16.msra.mxu0 0
        %2117 = vmatprep.subr.bf16.mxu0 0
        %2118 = vmatpush1.bf16.msra.mxu0 0
        %2119 = vmatprep.subr.bf16.mxu0 0
        %2120 = vmatpush1.bf16.msra.mxu0 0
        %2121 = vmatprep.subr.bf16.mxu0 0
        %2122 = vmatpush1.bf16.msra.mxu0 0
        %2123 = vmatprep.subr.bf16.mxu0 0
        %2124 = vmatpush1.bf16.msra.mxu0 0
        %2125 = vmatprep.subr.bf16.mxu0 0
        %2126 = vmatpush1.bf16.msra.mxu0 0
        %2127 = vmatprep.subr.bf16.mxu0 0
        %2128 = vmatpush1.bf16.msra.mxu0 0
        %2129 = vmatprep.subr.bf16.mxu0 0
        %2130 = vmatpush1.bf16.msra.mxu0 0
        %2131 = vmatprep.subr.bf16.mxu0 0
        %2132 = vmatpush1.bf16.msra.mxu0 0
        %2133 = vmatprep.mubr.bf16.mxu0 0
        %2134 = vmatmul.mubr.bf16.gmra.mrb[0].mxu0 %v2099
        %v2135 = vpop.f32.mrb[0].mxu0
        %v2136 = vadd.f32 0.0, %v2135
        %v2137 = vpop.f32.mrb[0].mxu0
        %v2138 = vpop.f32.mrb[0].mxu0
        %v2139 = vadd.f32 0.0, %v2138
        %v2140 = vpop.f32.mrb[0].mxu0
        %2141 = vdwg.mxu0
        %v2150 = vunpack.c.l.b16 %v1983
        %v2151 = vunpack.c.l.b16 %v1984
        %v2152 = vunpack.c.l.b16 %v1985
        %v2153 = vunpack.c.l.b16 %v1986
        %v2154 = vunpack.c.l.b16 %v1987
        %v2155 = vunpack.c.l.b16 %v1988
        %v2156 = vunpack.c.l.b16 %v1989
        %v2157 = vunpack.c.l.b16 %v1990
        %v2158 = vpack.c.b16 %v2151, %v2150
        %v2159 = vpack.c.b16 %v2153, %v2152
        %v2160 = vpack.c.b16 %v2155, %v2154
        %v2161 = vpack.c.b16 %v2157, %v2156
        %v2167 = vsel %vm2097, %v2009, 0
        %2169 = vmatprep.subr.bf16.mxu0 0
        %2170 = vmatpush1.bf16.msra.mxu0 %v2158
        %2171 = vmatprep.subr.bf16.mxu0 0
        %2172 = vmatpush1.bf16.msra.mxu0 %v2159
        %2173 = vmatprep.subr.bf16.mxu0 0
        %2174 = vmatpush1.bf16.msra.mxu0 %v2160
        %2175 = vmatprep.subr.bf16.mxu0 0
        %2176 = vmatpush1.bf16.msra.mxu0 %v2161
        %2177 = vmatprep.subr.bf16.mxu0 0
        %2178 = vmatpush1.bf16.msra.mxu0 0
        %2179 = vmatprep.subr.bf16.mxu0 0
        %2180 = vmatpush1.bf16.msra.mxu0 0
        %2181 = vmatprep.subr.bf16.mxu0 0
        %2182 = vmatpush1.bf16.msra.mxu0 0
        %2183 = vmatprep.subr.bf16.mxu0 0
        %2184 = vmatpush1.bf16.msra.mxu0 0
        %2185 = vmatprep.subr.bf16.mxu0 0
        %2186 = vmatpush1.bf16.msra.mxu0 0
        %2187 = vmatprep.subr.bf16.mxu0 0
        %2188 = vmatpush1.bf16.msra.mxu0 0
        %2189 = vmatprep.subr.bf16.mxu0 0
        %2190 = vmatpush1.bf16.msra.mxu0 0
        %2191 = vmatprep.subr.bf16.mxu0 0
        %2192 = vmatpush1.bf16.msra.mxu0 0
        %2193 = vmatprep.subr.bf16.mxu0 0
        %2194 = vmatpush1.bf16.msra.mxu0 0
        %2195 = vmatprep.subr.bf16.mxu0 0
        %2196 = vmatpush1.bf16.msra.mxu0 0
        %2197 = vmatprep.subr.bf16.mxu0 0
        %2198 = vmatpush1.bf16.msra.mxu0 0
        %2199 = vmatprep.subr.bf16.mxu0 0
        %2200 = vmatpush1.bf16.msra.mxu0 0
        %2201 = vmatprep.mubr.bf16.mxu0 0
        %2202 = vmatmul.mubr.bf16.gmra.mrb[0].mxu0 %v2167
        %v2203 = vpop.f32.mrb[0].mxu0
        %v2204 = vadd.f32 %v2136, %v2203
        %v2205 = vpop.f32.mrb[0].mxu0
        %v2206 = vpop.f32.mrb[0].mxu0
        %v2207 = vadd.f32 %v2139, %v2206
        %v2208 = vpop.f32.mrb[0].mxu0
        %2209 = vdwg.mxu0
        %v2210 = vpack.c.bf16 %v1982, %v1981
        %v2219 = vunpack.c.l.b16 %v2001
        %v2220 = vunpack.c.l.b16 %v2002
        %v2221 = vunpack.c.l.b16 %v2003
        %v2222 = vunpack.c.l.b16 %v2004
        %v2223 = vunpack.c.l.b16 %v2005
        %v2224 = vunpack.c.l.b16 %v2006
        %v2225 = vunpack.c.l.b16 %v2007
        %v2226 = vunpack.c.l.b16 %v2008
        %v2227 = vpack.c.b16 %v2220, %v2219
        %v2228 = vpack.c.b16 %v2222, %v2221
        %v2229 = vpack.c.b16 %v2224, %v2223
        %v2230 = vpack.c.b16 %v2226, %v2225
        %v2236 = vsel %vm2097, %v2210, 0
        %2238 = vmatprep.subr.bf16.mxu0 0
        %2239 = vmatpush1.bf16.msra.mxu0 %v2227
        %2240 = vmatprep.subr.bf16.mxu0 0
        %2241 = vmatpush1.bf16.msra.mxu0 %v2228
        %2242 = vmatprep.subr.bf16.mxu0 0
        %2243 = vmatpush1.bf16.msra.mxu0 %v2229
        %2244 = vmatprep.subr.bf16.mxu0 0
        %2245 = vmatpush1.bf16.msra.mxu0 %v2230
        %2246 = vmatprep.subr.bf16.mxu0 0
        %2247 = vmatpush1.bf16.msra.mxu0 0
        %2248 = vmatprep.subr.bf16.mxu0 0
        %2249 = vmatpush1.bf16.msra.mxu0 0
        %2250 = vmatprep.subr.bf16.mxu0 0
        %2251 = vmatpush1.bf16.msra.mxu0 0
        %2252 = vmatprep.subr.bf16.mxu0 0
        %2253 = vmatpush1.bf16.msra.mxu0 0
        %2254 = vmatprep.subr.bf16.mxu0 0
        %2255 = vmatpush1.bf16.msra.mxu0 0
        %2256 = vmatprep.subr.bf16.mxu0 0
        %2257 = vmatpush1.bf16.msra.mxu0 0
        %2258 = vmatprep.subr.bf16.mxu0 0
        %2259 = vmatpush1.bf16.msra.mxu0 0
        %2260 = vmatprep.subr.bf16.mxu0 0
        %2261 = vmatpush1.bf16.msra.mxu0 0
        %2262 = vmatprep.subr.bf16.mxu0 0
        %2263 = vmatpush1.bf16.msra.mxu0 0
        %2264 = vmatprep.subr.bf16.mxu0 0
        %2265 = vmatpush1.bf16.msra.mxu0 0
        %2266 = vmatprep.subr.bf16.mxu0 0
        %2267 = vmatpush1.bf16.msra.mxu0 0
        %2268 = vmatprep.subr.bf16.mxu0 0
        %2269 = vmatpush1.bf16.msra.mxu0 0
        %2270 = vmatprep.mubr.bf16.mxu0 0
        %2271 = vmatmul.mubr.bf16.gmra.mrb[0].mxu0 %v2236
        %v2272 = vpop.f32.mrb[0].mxu0
        %v2273 = vadd.f32 0.0, %v2272
        %v2274 = vpop.f32.mrb[0].mxu0
        %v2275 = vpop.f32.mrb[0].mxu0
        %v2276 = vadd.f32 0.0, %v2275
        %v2277 = vpop.f32.mrb[0].mxu0
        %2278 = vdwg.mxu0
        %v2279 = vadd.f32 %v2204, %v2273
        %v2280 = vadd.f32 %v2207, %v2276
        %v2281 = vld [vmem:[%s6] sm:$0x1]
        %v2283 = vlaneseq
        %v2284 = vshrl.u32 %v2283, 7
        %v2285 = vsub.s32 0, %v2284
        %v2286 = vrot.slane %v2281, %v2285
        %v2288 = vadd.f32 %v2279, %v2286
        %v2289 = vadd.f32 %v2280, %v2286
        %v2290 = vmax.f32 %v2288, 0.0
        %v2291 = vmax.f32 %v2289, 0.0
        %v2294 = vcombine.high %v2290, %v2290
        %v2296 = vunpack.c.l.s4 1983009808
        %v2297 = vunpack.c.0.s8 %v2296
        %v2298 = vlaneseq
        %v2299 = vshrl.u32 %v2298, 7
        %v2300 = vsub.s32 %v2297, %v2299
        %v2301 = vrot.slane %v2290, %v2300
        %v2303 = vunpack.c.l.s4 1983009808
        %v2304 = vunpack.c.0.s8 %v2303
        %v2305 = vlaneseq
        %v2306 = vshrl.u32 %v2305, 7
        %v2307 = vsub.s32 %v2304, %v2306
        %v2308 = vrot.slane %v2294, %v2307
        %v2309 = vcombine.high %v2301, %v2301
        %v2310 = vcombine.high %v2308, %v2308
        %v2311 = vcombine.high %v2291, %v2291
        %v2313 = vunpack.c.l.s4 1983009808
        %v2314 = vunpack.c.0.s8 %v2313
        %v2315 = vlaneseq
        %v2316 = vshrl.u32 %v2315, 7
        %v2317 = vsub.s32 %v2314, %v2316
        %v2318 = vrot.slane %v2291, %v2317
        %v2320 = vunpack.c.l.s4 1983009808
        %v2321 = vunpack.c.0.s8 %v2320
        %v2322 = vlaneseq
        %v2323 = vshrl.u32 %v2322, 7
        %v2324 = vsub.s32 %v2321, %v2323
        %v2325 = vrot.slane %v2311, %v2324
        %v2326 = vcombine.high %v2318, %v2318
        %v2327 = vcombine.high %v2325, %v2325
        %vm2336 = vcmask 1041408
        %v2337 = vsel %vm2336, %v2301, -inf
        %v2338 = vrot.slane %v2337, 4
        %v2339 = vmax.f32 %v2337, %v2338
        %v2340 = vrot.slane %v2339, 2
        %v2341 = vmax.f32 %v2339, %v2340
        %v2342 = vrot.slane %v2341, 1
        %v2343 = vmax.f32 %v2341, %v2342
        %v2344 = vsel %vm2336, %v2309, -inf
        %v2345 = vrot.slane %v2344, 4
        %v2346 = vmax.f32 %v2344, %v2345
        %v2347 = vrot.slane %v2346, 2
        %v2348 = vmax.f32 %v2346, %v2347
        %v2349 = vrot.slane %v2348, 1
        %v2350 = vmax.f32 %v2348, %v2349
        %v2351 = vsel %vm2336, %v2308, -inf
        %v2352 = vrot.slane %v2351, 4
        %v2353 = vmax.f32 %v2351, %v2352
        %v2354 = vrot.slane %v2353, 2
        %v2355 = vmax.f32 %v2353, %v2354
        %v2356 = vrot.slane %v2355, 1
        %v2357 = vmax.f32 %v2355, %v2356
        %v2358 = vsel %vm2336, %v2310, -inf
        %v2359 = vrot.slane %v2358, 4
        %v2360 = vmax.f32 %v2358, %v2359
        %v2361 = vrot.slane %v2360, 2
        %v2362 = vmax.f32 %v2360, %v2361
        %v2363 = vrot.slane %v2362, 1
        %v2364 = vmax.f32 %v2362, %v2363
        %v2365 = vsel %vm2336, %v2318, -inf
        %v2366 = vrot.slane %v2365, 4
        %v2367 = vmax.f32 %v2365, %v2366
        %v2368 = vrot.slane %v2367, 2
        %v2369 = vmax.f32 %v2367, %v2368
        %v2370 = vrot.slane %v2369, 1
        %v2371 = vmax.f32 %v2369, %v2370
        %v2372 = vsel %vm2336, %v2326, -inf
        %v2373 = vrot.slane %v2372, 4
        %v2374 = vmax.f32 %v2372, %v2373
        %v2375 = vrot.slane %v2374, 2
        %v2376 = vmax.f32 %v2374, %v2375
        %v2377 = vrot.slane %v2376, 1
        %v2378 = vmax.f32 %v2376, %v2377
        %v2379 = vsel %vm2336, %v2325, -inf
        %v2380 = vrot.slane %v2379, 4
        %v2381 = vmax.f32 %v2379, %v2380
        %v2382 = vrot.slane %v2381, 2
        %v2383 = vmax.f32 %v2381, %v2382
        %v2384 = vrot.slane %v2383, 1
        %v2385 = vmax.f32 %v2383, %v2384
        %v2386 = vsel %vm2336, %v2327, -inf
        %v2387 = vrot.slane %v2386, 4
        %v2388 = vmax.f32 %v2386, %v2387
        %v2389 = vrot.slane %v2388, 2
        %v2390 = vmax.f32 %v2388, %v2389
        %v2391 = vrot.slane %v2390, 1
        %v2392 = vmax.f32 %v2390, %v2391
        %v2401 = vsel %vm1304, %v2350, %v2343
        %v2402 = vsel %vm1306, %v2357, %v2401
        %v2403 = vsel %vm1308, %v2364, %v2402
        %v2404 = vsel %vm1310, %v2371, %v2403
        %v2405 = vsel %vm1312, %v2378, %v2404
        %v2406 = vsel %vm1314, %v2385, %v2405
        %v2407 = vsel %vm1316, %v2392, %v2406
        %v2409 = vrot.slane %v2407, 7
        %v2410 = vsel %vm599, 0.0, %v2409
        %vm2411 = vcmp.eq.s32.totalorder %v591, 7
        %v2412 = vrot.slane %v2407, 1
        %v2413 = vsel %vm2411, 0.0, %v2412
        %v2414 = vld [vmem:[%s7] sm:$0xff]
        %v2415 = vld [vmem:[%s7 + $0x8] sm:$0xff]
        %v2416 = vld [vmem:[%s7 + $0x10] sm:$0xff]
        %v2417 = vld [vmem:[%s7 + $0x18] sm:$0xff]
        %v2418 = vld [vmem:[%s7 + $0x20] sm:$0xff]
        %v2419 = vld [vmem:[%s7 + $0x28] sm:$0xff]
        %v2420 = vld [vmem:[%s7 + $0x30] sm:$0xff]
        %v2421 = vld [vmem:[%s7 + $0x38] sm:$0xff]
        %v2422 = vld [vmem:[%s7 + $0x40] sm:$0xff]
        %v2423 = vld [vmem:[%s7 + $0x48] sm:$0xff]
        %v2424 = vld [vmem:[%s7 + $0x50] sm:$0xff]
        %v2425 = vld [vmem:[%s7 + $0x58] sm:$0xff]
        %v2426 = vld [vmem:[%s7 + $0x60] sm:$0xff]
        %v2427 = vld [vmem:[%s7 + $0x68] sm:$0xff]
        %v2428 = vld [vmem:[%s7 + $0x70] sm:$0xff]
        %v2429 = vld [vmem:[%s7 + $0x78] sm:$0xff]
        %s2430 = scalar_lea.vmem %s7, 128
        %v2431 = vld [vmem:[%s2430] sm:$0xff]
        %v2432 = vld [vmem:[%s2430 + $0x8] sm:$0xff]
        %v2433 = vld [vmem:[%s2430 + $0x10] sm:$0xff]
        %v2434 = vld [vmem:[%s2430 + $0x18] sm:$0xff]
        %v2435 = vld [vmem:[%s2430 + $0x20] sm:$0xff]
        %v2436 = vld [vmem:[%s2430 + $0x28] sm:$0xff]
        %v2437 = vld [vmem:[%s2430 + $0x30] sm:$0xff]
        %v2438 = vld [vmem:[%s2430 + $0x38] sm:$0xff]
        %v2439 = vld [vmem:[%s2430 + $0x40] sm:$0xff]
        %v2440 = vld [vmem:[%s2430 + $0x48] sm:$0xff]
        %v2441 = vld [vmem:[%s2430 + $0x50] sm:$0xff]
        %v2442 = vld [vmem:[%s2430 + $0x58] sm:$0xff]
        %v2443 = vld [vmem:[%s2430 + $0x60] sm:$0xff]
        %v2444 = vld [vmem:[%s2430 + $0x68] sm:$0xff]
        %v2445 = vld [vmem:[%s2430 + $0x70] sm:$0xff]
        %v2446 = vld [vmem:[%s2430 + $0x78] sm:$0xff]
        %s2447 = scalar_lea.vmem %s7, 256
        %v2448 = vld [vmem:[%s2447] sm:$0xff]
        %v2449 = vld [vmem:[%s2447 + $0x8] sm:$0xff]
        %v2450 = vld [vmem:[%s2447 + $0x10] sm:$0xff]
        %v2451 = vld [vmem:[%s2447 + $0x18] sm:$0xff]
        %v2452 = vld [vmem:[%s2447 + $0x20] sm:$0xff]
        %v2453 = vld [vmem:[%s2447 + $0x28] sm:$0xff]
        %v2454 = vld [vmem:[%s2447 + $0x30] sm:$0xff]
        %v2455 = vld [vmem:[%s2447 + $0x38] sm:$0xff]
        %v2456 = vld [vmem:[%s2447 + $0x40] sm:$0xff]
        %v2457 = vld [vmem:[%s2447 + $0x48] sm:$0xff]
        %v2458 = vld [vmem:[%s2447 + $0x50] sm:$0xff]
        %v2459 = vld [vmem:[%s2447 + $0x58] sm:$0xff]
        %v2460 = vld [vmem:[%s2447 + $0x60] sm:$0xff]
        %v2461 = vld [vmem:[%s2447 + $0x68] sm:$0xff]
        %v2462 = vld [vmem:[%s2447 + $0x70] sm:$0xff]
        %v2463 = vld [vmem:[%s2447 + $0x78] sm:$0xff]
        %v2464 = vpack.c.bf16 %v2410, %v2410
        %v2465 = vpack.c.bf16 %v2343, %v2343
        %v2466 = vpack.c.bf16 %v2350, %v2350
        %v2467 = vpack.c.bf16 %v2357, %v2357
        %v2468 = vpack.c.bf16 %v2364, %v2364
        %v2469 = vpack.c.bf16 %v2371, %v2371
        %v2470 = vpack.c.bf16 %v2378, %v2378
        %v2471 = vpack.c.bf16 %v2385, %v2385
        %v2472 = vpack.c.bf16 %v2392, %v2392
        %v2481 = vunpack.c.l.b16 %v2465
        %v2482 = vunpack.c.l.b16 %v2466
        %v2483 = vunpack.c.l.b16 %v2467
        %v2484 = vunpack.c.l.b16 %v2468
        %v2485 = vunpack.c.l.b16 %v2469
        %v2486 = vunpack.c.l.b16 %v2470
        %v2487 = vunpack.c.l.b16 %v2471
        %v2488 = vunpack.c.l.b16 %v2472
        %v2489 = vsel %vm1304, %v2482, %v2481
        %v2490 = vsel %vm1306, %v2483, %v2489
        %v2491 = vsel %vm1308, %v2484, %v2490
        %v2492 = vsel %vm1310, %v2485, %v2491
        %v2493 = vsel %vm1312, %v2486, %v2492
        %v2494 = vsel %vm1314, %v2487, %v2493
        %v2495 = vsel %vm1316, %v2488, %v2494
        %v2496 = vpack.c.b16 %v2495, %v2495
        %v2514 = vunpack.c.l.b16 %v2431
        %v2515 = vunpack.c.h.b16 %v2431
        %v2516 = vunpack.c.l.b16 %v2432
        %v2517 = vunpack.c.h.b16 %v2432
        %v2518 = vunpack.c.l.b16 %v2433
        %v2519 = vunpack.c.h.b16 %v2433
        %v2520 = vunpack.c.l.b16 %v2434
        %v2521 = vunpack.c.h.b16 %v2434
        %v2522 = vunpack.c.l.b16 %v2435
        %v2523 = vunpack.c.h.b16 %v2435
        %v2524 = vunpack.c.l.b16 %v2436
        %v2525 = vunpack.c.h.b16 %v2436
        %v2526 = vunpack.c.l.b16 %v2437
        %v2527 = vunpack.c.h.b16 %v2437
        %v2528 = vunpack.c.l.b16 %v2438
        %v2529 = vunpack.c.h.b16 %v2438
        %v2530 = vunpack.c.l.b16 %v2439
        %v2531 = vunpack.c.h.b16 %v2439
        %v2532 = vunpack.c.l.b16 %v2440
        %v2533 = vunpack.c.h.b16 %v2440
        %v2534 = vunpack.c.l.b16 %v2441
        %v2535 = vunpack.c.h.b16 %v2441
        %v2536 = vunpack.c.l.b16 %v2442
        %v2537 = vunpack.c.h.b16 %v2442
        %v2538 = vunpack.c.l.b16 %v2443
        %v2539 = vunpack.c.h.b16 %v2443
        %v2540 = vunpack.c.l.b16 %v2444
        %v2541 = vunpack.c.h.b16 %v2444
        %v2542 = vunpack.c.l.b16 %v2445
        %v2543 = vunpack.c.h.b16 %v2445
        %v2544 = vunpack.c.l.b16 %v2446
        %v2545 = vunpack.c.h.b16 %v2446
        %v2546 = vpack.c.b16 %v2516, %v2514
        %v2547 = vpack.c.b16 %v2517, %v2515
        %v2548 = vpack.c.b16 %v2520, %v2518
        %v2549 = vpack.c.b16 %v2521, %v2519
        %v2550 = vpack.c.b16 %v2524, %v2522
        %v2551 = vpack.c.b16 %v2525, %v2523
        %v2552 = vpack.c.b16 %v2528, %v2526
        %v2553 = vpack.c.b16 %v2529, %v2527
        %v2554 = vpack.c.b16 %v2532, %v2530
        %v2555 = vpack.c.b16 %v2533, %v2531
        %v2556 = vpack.c.b16 %v2536, %v2534
        %v2557 = vpack.c.b16 %v2537, %v2535
        %v2558 = vpack.c.b16 %v2540, %v2538
        %v2559 = vpack.c.b16 %v2541, %v2539
        %v2560 = vpack.c.b16 %v2544, %v2542
        %v2561 = vpack.c.b16 %v2545, %v2543
        %2578 = vmatprep.subr.bf16.mxu0 %v2547
        %2579 = vmatpush1.bf16.msra.mxu0 %v2546
        %2580 = vmatprep.subr.bf16.mxu0 %v2549
        %2581 = vmatpush1.bf16.msra.mxu0 %v2548
        %2582 = vmatprep.subr.bf16.mxu0 %v2551
        %2583 = vmatpush1.bf16.msra.mxu0 %v2550
        %2584 = vmatprep.subr.bf16.mxu0 %v2553
        %2585 = vmatpush1.bf16.msra.mxu0 %v2552
        %2586 = vmatprep.subr.bf16.mxu0 %v2555
        %2587 = vmatpush1.bf16.msra.mxu0 %v2554
        %2588 = vmatprep.subr.bf16.mxu0 %v2557
        %2589 = vmatpush1.bf16.msra.mxu0 %v2556
        %2590 = vmatprep.subr.bf16.mxu0 %v2559
        %2591 = vmatpush1.bf16.msra.mxu0 %v2558
        %2592 = vmatprep.subr.bf16.mxu0 %v2561
        %2593 = vmatpush1.bf16.msra.mxu0 %v2560
        %2594 = vmatprep.subr.bf16.mxu0 0
        %2595 = vmatpush1.bf16.msra.mxu0 0
        %2596 = vmatprep.subr.bf16.mxu0 0
        %2597 = vmatpush1.bf16.msra.mxu0 0
        %2598 = vmatprep.subr.bf16.mxu0 0
        %2599 = vmatpush1.bf16.msra.mxu0 0
        %2600 = vmatprep.subr.bf16.mxu0 0
        %2601 = vmatpush1.bf16.msra.mxu0 0
        %2602 = vmatprep.subr.bf16.mxu0 0
        %2603 = vmatpush1.bf16.msra.mxu0 0
        %2604 = vmatprep.subr.bf16.mxu0 0
        %2605 = vmatpush1.bf16.msra.mxu0 0
        %2606 = vmatprep.subr.bf16.mxu0 0
        %2607 = vmatpush1.bf16.msra.mxu0 0
        %2608 = vmatprep.subr.bf16.mxu0 0
        %2609 = vmatpush1.bf16.msra.mxu0 0
        %2610 = vmatprep.mubr.bf16.mxu0 0
        %2611 = vmatmul.mubr.bf16.gmra.mrb[0].mxu0 %v2496
        %v2612 = vpop.f32.mrb[0].mxu0
        %v2613 = vadd.f32 0.0, %v2612
        %v2614 = vpop.f32.mrb[0].mxu0
        %v2615 = vadd.f32 0.0, %v2614
        %v2616 = vpop.f32.mrb[0].mxu0
        %v2617 = vpop.f32.mrb[0].mxu0
        %2618 = vdwg.mxu0
        %v2635 = vunpack.c.l.b16 %v2414
        %v2636 = vunpack.c.h.b16 %v2414
        %v2637 = vunpack.c.l.b16 %v2415
        %v2638 = vunpack.c.h.b16 %v2415
        %v2639 = vunpack.c.l.b16 %v2416
        %v2640 = vunpack.c.h.b16 %v2416
        %v2641 = vunpack.c.l.b16 %v2417
        %v2642 = vunpack.c.h.b16 %v2417
        %v2643 = vunpack.c.l.b16 %v2418
        %v2644 = vunpack.c.h.b16 %v2418
        %v2645 = vunpack.c.l.b16 %v2419
        %v2646 = vunpack.c.h.b16 %v2419
        %v2647 = vunpack.c.l.b16 %v2420
        %v2648 = vunpack.c.h.b16 %v2420
        %v2649 = vunpack.c.l.b16 %v2421
        %v2650 = vunpack.c.h.b16 %v2421
        %v2651 = vunpack.c.l.b16 %v2422
        %v2652 = vunpack.c.h.b16 %v2422
        %v2653 = vunpack.c.l.b16 %v2423
        %v2654 = vunpack.c.h.b16 %v2423
        %v2655 = vunpack.c.l.b16 %v2424
        %v2656 = vunpack.c.h.b16 %v2424
        %v2657 = vunpack.c.l.b16 %v2425
        %v2658 = vunpack.c.h.b16 %v2425
        %v2659 = vunpack.c.l.b16 %v2426
        %v2660 = vunpack.c.h.b16 %v2426
        %v2661 = vunpack.c.l.b16 %v2427
        %v2662 = vunpack.c.h.b16 %v2427
        %v2663 = vunpack.c.l.b16 %v2428
        %v2664 = vunpack.c.h.b16 %v2428
        %v2665 = vunpack.c.l.b16 %v2429
        %v2666 = vunpack.c.h.b16 %v2429
        %v2667 = vpack.c.b16 %v2637, %v2635
        %v2668 = vpack.c.b16 %v2638, %v2636
        %v2669 = vpack.c.b16 %v2641, %v2639
        %v2670 = vpack.c.b16 %v2642, %v2640
        %v2671 = vpack.c.b16 %v2645, %v2643
        %v2672 = vpack.c.b16 %v2646, %v2644
        %v2673 = vpack.c.b16 %v2649, %v2647
        %v2674 = vpack.c.b16 %v2650, %v2648
        %v2675 = vpack.c.b16 %v2653, %v2651
        %v2676 = vpack.c.b16 %v2654, %v2652
        %v2677 = vpack.c.b16 %v2657, %v2655
        %v2678 = vpack.c.b16 %v2658, %v2656
        %v2679 = vpack.c.b16 %v2661, %v2659
        %v2680 = vpack.c.b16 %v2662, %v2660
        %v2681 = vpack.c.b16 %v2665, %v2663
        %v2682 = vpack.c.b16 %v2666, %v2664
        %2699 = vmatprep.subr.bf16.mxu0 %v2668
        %2700 = vmatpush1.bf16.msra.mxu0 %v2667
        %2701 = vmatprep.subr.bf16.mxu0 %v2670
        %2702 = vmatpush1.bf16.msra.mxu0 %v2669
        %2703 = vmatprep.subr.bf16.mxu0 %v2672
        %2704 = vmatpush1.bf16.msra.mxu0 %v2671
        %2705 = vmatprep.subr.bf16.mxu0 %v2674
        %2706 = vmatpush1.bf16.msra.mxu0 %v2673
        %2707 = vmatprep.subr.bf16.mxu0 %v2676
        %2708 = vmatpush1.bf16.msra.mxu0 %v2675
        %2709 = vmatprep.subr.bf16.mxu0 %v2678
        %2710 = vmatpush1.bf16.msra.mxu0 %v2677
        %2711 = vmatprep.subr.bf16.mxu0 %v2680
        %2712 = vmatpush1.bf16.msra.mxu0 %v2679
        %2713 = vmatprep.subr.bf16.mxu0 %v2682
        %2714 = vmatpush1.bf16.msra.mxu0 %v2681
        %2715 = vmatprep.subr.bf16.mxu0 0
        %2716 = vmatpush1.bf16.msra.mxu0 0
        %2717 = vmatprep.subr.bf16.mxu0 0
        %2718 = vmatpush1.bf16.msra.mxu0 0
        %2719 = vmatprep.subr.bf16.mxu0 0
        %2720 = vmatpush1.bf16.msra.mxu0 0
        %2721 = vmatprep.subr.bf16.mxu0 0
        %2722 = vmatpush1.bf16.msra.mxu0 0
        %2723 = vmatprep.subr.bf16.mxu0 0
        %2724 = vmatpush1.bf16.msra.mxu0 0
        %2725 = vmatprep.subr.bf16.mxu0 0
        %2726 = vmatpush1.bf16.msra.mxu0 0
        %2727 = vmatprep.subr.bf16.mxu0 0
        %2728 = vmatpush1.bf16.msra.mxu0 0
        %2729 = vmatprep.subr.bf16.mxu0 0
        %2730 = vmatpush1.bf16.msra.mxu0 0
        %2731 = vmatprep.mubr.bf16.mxu0 0
        %2732 = vmatmul.mubr.bf16.gmra.mrb[0].mxu0 %v2464
        %v2733 = vpop.f32.mrb[0].mxu0
        %v2734 = vadd.f32 %v2613, %v2733
        %v2735 = vpop.f32.mrb[0].mxu0
        %v2736 = vadd.f32 %v2615, %v2735
        %v2737 = vpop.f32.mrb[0].mxu0
        %v2738 = vpop.f32.mrb[0].mxu0
        %2739 = vdwg.mxu0
        %v2740 = vpack.c.bf16 %v2413, %v2413
        %v2757 = vunpack.c.l.b16 %v2448
        %v2758 = vunpack.c.h.b16 %v2448
        %v2759 = vunpack.c.l.b16 %v2449
        %v2760 = vunpack.c.h.b16 %v2449
        %v2761 = vunpack.c.l.b16 %v2450
        %v2762 = vunpack.c.h.b16 %v2450
        %v2763 = vunpack.c.l.b16 %v2451
        %v2764 = vunpack.c.h.b16 %v2451
        %v2765 = vunpack.c.l.b16 %v2452
        %v2766 = vunpack.c.h.b16 %v2452
        %v2767 = vunpack.c.l.b16 %v2453
        %v2768 = vunpack.c.h.b16 %v2453
        %v2769 = vunpack.c.l.b16 %v2454
        %v2770 = vunpack.c.h.b16 %v2454
        %v2771 = vunpack.c.l.b16 %v2455
        %v2772 = vunpack.c.h.b16 %v2455
        %v2773 = vunpack.c.l.b16 %v2456
        %v2774 = vunpack.c.h.b16 %v2456
        %v2775 = vunpack.c.l.b16 %v2457
        %v2776 = vunpack.c.h.b16 %v2457
        %v2777 = vunpack.c.l.b16 %v2458
        %v2778 = vunpack.c.h.b16 %v2458
        %v2779 = vunpack.c.l.b16 %v2459
        %v2780 = vunpack.c.h.b16 %v2459
        %v2781 = vunpack.c.l.b16 %v2460
        %v2782 = vunpack.c.h.b16 %v2460
        %v2783 = vunpack.c.l.b16 %v2461
        %v2784 = vunpack.c.h.b16 %v2461
        %v2785 = vunpack.c.l.b16 %v2462
        %v2786 = vunpack.c.h.b16 %v2462
        %v2787 = vunpack.c.l.b16 %v2463
        %v2788 = vunpack.c.h.b16 %v2463
        %v2789 = vpack.c.b16 %v2759, %v2757
        %v2790 = vpack.c.b16 %v2760, %v2758
        %v2791 = vpack.c.b16 %v2763, %v2761
        %v2792 = vpack.c.b16 %v2764, %v2762
        %v2793 = vpack.c.b16 %v2767, %v2765
        %v2794 = vpack.c.b16 %v2768, %v2766
        %v2795 = vpack.c.b16 %v2771, %v2769
        %v2796 = vpack.c.b16 %v2772, %v2770
        %v2797 = vpack.c.b16 %v2775, %v2773
        %v2798 = vpack.c.b16 %v2776, %v2774
        %v2799 = vpack.c.b16 %v2779, %v2777
        %v2800 = vpack.c.b16 %v2780, %v2778
        %v2801 = vpack.c.b16 %v2783, %v2781
        %v2802 = vpack.c.b16 %v2784, %v2782
        %v2803 = vpack.c.b16 %v2787, %v2785
        %v2804 = vpack.c.b16 %v2788, %v2786
        %2821 = vmatprep.subr.bf16.mxu0 %v2790
        %2822 = vmatpush1.bf16.msra.mxu0 %v2789
        %2823 = vmatprep.subr.bf16.mxu0 %v2792
        %2824 = vmatpush1.bf16.msra.mxu0 %v2791
        %2825 = vmatprep.subr.bf16.mxu0 %v2794
        %2826 = vmatpush1.bf16.msra.mxu0 %v2793
        %2827 = vmatprep.subr.bf16.mxu0 %v2796
        %2828 = vmatpush1.bf16.msra.mxu0 %v2795
        %2829 = vmatprep.subr.bf16.mxu0 %v2798
        %2830 = vmatpush1.bf16.msra.mxu0 %v2797
        %2831 = vmatprep.subr.bf16.mxu0 %v2800
        %2832 = vmatpush1.bf16.msra.mxu0 %v2799
        %2833 = vmatprep.subr.bf16.mxu0 %v2802
        %2834 = vmatpush1.bf16.msra.mxu0 %v2801
        %2835 = vmatprep.subr.bf16.mxu0 %v2804
        %2836 = vmatpush1.bf16.msra.mxu0 %v2803
        %2837 = vmatprep.subr.bf16.mxu0 0
        %2838 = vmatpush1.bf16.msra.mxu0 0
        %2839 = vmatprep.subr.bf16.mxu0 0
        %2840 = vmatpush1.bf16.msra.mxu0 0
        %2841 = vmatprep.subr.bf16.mxu0 0
        %2842 = vmatpush1.bf16.msra.mxu0 0
        %2843 = vmatprep.subr.bf16.mxu0 0
        %2844 = vmatpush1.bf16.msra.mxu0 0
        %2845 = vmatprep.subr.bf16.mxu0 0
        %2846 = vmatpush1.bf16.msra.mxu0 0
        %2847 = vmatprep.subr.bf16.mxu0 0
        %2848 = vmatpush1.bf16.msra.mxu0 0
        %2849 = vmatprep.subr.bf16.mxu0 0
        %2850 = vmatpush1.bf16.msra.mxu0 0
        %2851 = vmatprep.subr.bf16.mxu0 0
        %2852 = vmatpush1.bf16.msra.mxu0 0
        %2853 = vmatprep.mubr.bf16.mxu0 0
        %2854 = vmatmul.mubr.bf16.gmra.mrb[0].mxu0 %v2740
        %v2855 = vpop.f32.mrb[0].mxu0
        %v2856 = vadd.f32 0.0, %v2855
        %v2857 = vpop.f32.mrb[0].mxu0
        %v2858 = vadd.f32 0.0, %v2857
        %v2859 = vpop.f32.mrb[0].mxu0
        %v2860 = vpop.f32.mrb[0].mxu0
        %2861 = vdwg.mxu0
        %v2862 = vadd.f32 %v2734, %v2856
        %v2863 = vadd.f32 %v2736, %v2858
        %v2864 = vld [vmem:[%s8] sm:$0x3]
        %v2866 = vlaneseq
        %v2867 = vshrl.u32 %v2866, 7
        %v2868 = vsub.s32 0, %v2867
        %v2869 = vrot.slane %v2864, %v2868
        %v2870 = vlaneseq
        %v2871 = vshrl.u32 %v2870, 7
        %v2872 = vsub.s32 1, %v2871
        %v2873 = vrot.slane %v2864, %v2872
        %v2876 = vadd.f32 %v2862, %v2869
        %v2877 = vadd.f32 %v2863, %v2873
        %v2878 = vmax.f32 %v2876, 0.0
        %v2879 = vmax.f32 %v2877, 0.0
        %v2882 = vcombine.low %v2878, %v2879
        %v2883 = vcombine.high %v2878, %v2879
        %v2885 = vunpack.c.l.s4 1983009808
        %v2886 = vunpack.c.0.s8 %v2885
        %v2887 = vlaneseq
        %v2888 = vshrl.u32 %v2887, 7
        %v2889 = vsub.s32 %v2886, %v2888
        %v2890 = vrot.slane %v2882, %v2889
        %v2892 = vunpack.c.l.s4 1983009808
        %v2893 = vunpack.c.0.s8 %v2892
        %v2894 = vlaneseq
        %v2895 = vshrl.u32 %v2894, 7
        %v2896 = vsub.s32 %v2893, %v2895
        %v2897 = vrot.slane %v2883, %v2896
        %v2898 = vcombine.high %v2890, %v2890
        %v2899 = vcombine.high %v2897, %v2897
        %v2901 = vunpack.c.l.s4 1983009808
        %v2902 = vunpack.c.0.s8 %v2901
        %v2903 = vlaneseq
        %v2904 = vshrl.u32 %v2903, 7
        %v2905 = vsub.s32 %v2902, %v2904
        %v2906 = vrot.slane %v2890, %v2905
        %v2907 = vcombine.high %v2906, %v2906
        %v2909 = vunpack.c.l.s4 1983009808
        %v2910 = vunpack.c.0.s8 %v2909
        %v2911 = vlaneseq
        %v2912 = vshrl.u32 %v2911, 7
        %v2913 = vsub.s32 %v2910, %v2912
        %v2914 = vrot.slane %v2898, %v2913
        %v2915 = vcombine.high %v2914, %v2914
        %v2917 = vunpack.c.l.s4 1983009808
        %v2918 = vunpack.c.0.s8 %v2917
        %v2919 = vlaneseq
        %v2920 = vshrl.u32 %v2919, 7
        %v2921 = vsub.s32 %v2918, %v2920
        %v2922 = vrot.slane %v2897, %v2921
        %v2923 = vcombine.high %v2922, %v2922
        %v2925 = vunpack.c.l.s4 1983009808
        %v2926 = vunpack.c.0.s8 %v2925
        %v2927 = vlaneseq
        %v2928 = vshrl.u32 %v2927, 7
        %v2929 = vsub.s32 %v2926, %v2928
        %v2930 = vrot.slane %v2899, %v2929
        %v2931 = vcombine.high %v2930, %v2930
        %v2940 = vsel %vm2336, %v2906, -inf
        %v2941 = vrot.slane %v2940, 4
        %v2942 = vmax.f32 %v2940, %v2941
        %v2943 = vrot.slane %v2942, 2
        %v2944 = vmax.f32 %v2942, %v2943
        %v2945 = vrot.slane %v2944, 1
        %v2946 = vmax.f32 %v2944, %v2945
        %v2947 = vsel %vm2336, %v2907, -inf
        %v2948 = vrot.slane %v2947, 4
        %v2949 = vmax.f32 %v2947, %v2948
        %v2950 = vrot.slane %v2949, 2
        %v2951 = vmax.f32 %v2949, %v2950
        %v2952 = vrot.slane %v2951, 1
        %v2953 = vmax.f32 %v2951, %v2952
        %v2954 = vsel %vm2336, %v2914, -inf
        %v2955 = vrot.slane %v2954, 4
        %v2956 = vmax.f32 %v2954, %v2955
        %v2957 = vrot.slane %v2956, 2
        %v2958 = vmax.f32 %v2956, %v2957
        %v2959 = vrot.slane %v2958, 1
        %v2960 = vmax.f32 %v2958, %v2959
        %v2961 = vsel %vm2336, %v2915, -inf
        %v2962 = vrot.slane %v2961, 4
        %v2963 = vmax.f32 %v2961, %v2962
        %v2964 = vrot.slane %v2963, 2
        %v2965 = vmax.f32 %v2963, %v2964
        %v2966 = vrot.slane %v2965, 1
        %v2967 = vmax.f32 %v2965, %v2966
        %v2968 = vsel %vm2336, %v2922, -inf
        %v2969 = vrot.slane %v2968, 4
        %v2970 = vmax.f32 %v2968, %v2969
        %v2971 = vrot.slane %v2970, 2
        %v2972 = vmax.f32 %v2970, %v2971
        %v2973 = vrot.slane %v2972, 1
        %v2974 = vmax.f32 %v2972, %v2973
        %v2975 = vsel %vm2336, %v2923, -inf
        %v2976 = vrot.slane %v2975, 4
        %v2977 = vmax.f32 %v2975, %v2976
        %v2978 = vrot.slane %v2977, 2
        %v2979 = vmax.f32 %v2977, %v2978
        %v2980 = vrot.slane %v2979, 1
        %v2981 = vmax.f32 %v2979, %v2980
        %v2982 = vsel %vm2336, %v2930, -inf
        %v2983 = vrot.slane %v2982, 4
        %v2984 = vmax.f32 %v2982, %v2983
        %v2985 = vrot.slane %v2984, 2
        %v2986 = vmax.f32 %v2984, %v2985
        %v2987 = vrot.slane %v2986, 1
        %v2988 = vmax.f32 %v2986, %v2987
        %v2989 = vsel %vm2336, %v2931, -inf
        %v2990 = vrot.slane %v2989, 4
        %v2991 = vmax.f32 %v2989, %v2990
        %v2992 = vrot.slane %v2991, 2
        %v2993 = vmax.f32 %v2991, %v2992
        %v2994 = vrot.slane %v2993, 1
        %v2995 = vmax.f32 %v2993, %v2994
        %v3004 = vcombine.low %v2946, %v2953
        %v3006 = vunpack.c.l.s4 1983009808
        %v3007 = vunpack.c.0.s8 %v3006
        %v3008 = vlaneseq
        %v3009 = vshrl.u32 %v3008, 7
        %v3010 = vsub.s32 %v3007, %v3009
        %v3011 = vrot.slane %v3004, %v3010
        %v3012 = vcombine.low %v2960, %v2967
        %v3014 = vunpack.c.l.s4 1983009808
        %v3015 = vunpack.c.0.s8 %v3014
        %v3016 = vlaneseq
        %v3017 = vshrl.u32 %v3016, 7
        %v3018 = vsub.s32 %v3015, %v3017
        %v3019 = vrot.slane %v3012, %v3018
        %v3020 = vcombine.low %v2974, %v2981
        %v3022 = vunpack.c.l.s4 1983009808
        %v3023 = vunpack.c.0.s8 %v3022
        %v3024 = vlaneseq
        %v3025 = vshrl.u32 %v3024, 7
        %v3026 = vsub.s32 %v3023, %v3025
        %v3027 = vrot.slane %v3020, %v3026
        %v3028 = vcombine.low %v2988, %v2995
        %v3030 = vunpack.c.l.s4 1983009808
        %v3031 = vunpack.c.0.s8 %v3030
        %v3032 = vlaneseq
        %v3033 = vshrl.u32 %v3032, 7
        %v3034 = vsub.s32 %v3031, %v3033
        %v3035 = vrot.slane %v3028, %v3034
        %v3036 = vcombine.low %v3011, %v3019
        %v3037 = vcombine.low %v3027, %v3035
        %v3039 = vunpack.c.l.s4 1983009808
        %v3040 = vunpack.c.0.s8 %v3039
        %v3041 = vlaneseq
        %v3042 = vshrl.u32 %v3041, 7
        %v3043 = vsub.s32 %v3040, %v3042
        %v3044 = vrot.slane %v3036, %v3043
        %v3046 = vunpack.c.l.s4 1983009808
        %v3047 = vunpack.c.0.s8 %v3046
        %v3048 = vlaneseq
        %v3049 = vshrl.u32 %v3048, 7
        %v3050 = vsub.s32 %v3047, %v3049
        %v3051 = vrot.slane %v3037, %v3050
        %v3052 = vcombine.low %v3044, %v3051
        %v3053 = vcombine.high %v3044, %v3051
        %v3056 = vrot.slane %v3052, 7
        %v3057 = vrot.slane %v3053, 7
        %v3058 = vsel %vm599, 0.0, %v3056
        %v3059 = vsel %vm599, 0.0, %v3057
        %v3060 = vrot.slane %v3052, 1
        %v3061 = vrot.slane %v3053, 1
        %v3062 = vsel %vm2411, 0.0, %v3060
        %v3063 = vsel %vm2411, 0.0, %v3061
        %v3064 = vld [vmem:[#allocation5] sm:$0xf]
        %v3065 = vld [vmem:[#allocation5 + $0x4] sm:$0xf]
        %v3066 = vld [vmem:[#allocation5 + $0x8] sm:$0xf]
        %v3067 = vld [vmem:[#allocation5 + $0xc] sm:$0xf]
        %v3068 = vld [vmem:[#allocation5 + $0x10] sm:$0xf]
        %v3069 = vld [vmem:[#allocation5 + $0x14] sm:$0xf]
        %v3070 = vld [vmem:[#allocation5 + $0x18] sm:$0xf]
        %v3071 = vld [vmem:[#allocation5 + $0x1c] sm:$0xf]
        %v3072 = vld [vmem:[#allocation5 + $0x20] sm:$0xf]
        %v3073 = vld [vmem:[#allocation5 + $0x24] sm:$0xf]
        %v3074 = vld [vmem:[#allocation5 + $0x28] sm:$0xf]
        %v3075 = vld [vmem:[#allocation5 + $0x2c] sm:$0xf]
        %v3076 = vld [vmem:[#allocation5 + $0x30] sm:$0xf]
        %v3077 = vld [vmem:[#allocation5 + $0x34] sm:$0xf]
        %v3078 = vld [vmem:[#allocation5 + $0x38] sm:$0xf]
        %v3079 = vld [vmem:[#allocation5 + $0x3c] sm:$0xf]
        %v3080 = vld [vmem:[#allocation5 + $0x40] sm:$0xf]
        %v3081 = vld [vmem:[#allocation5 + $0x44] sm:$0xf]
        %v3082 = vld [vmem:[#allocation5 + $0x48] sm:$0xf]
        %v3083 = vld [vmem:[#allocation5 + $0x4c] sm:$0xf]
        %v3084 = vld [vmem:[#allocation5 + $0x50] sm:$0xf]
        %v3085 = vld [vmem:[#allocation5 + $0x54] sm:$0xf]
        %v3086 = vld [vmem:[#allocation5 + $0x58] sm:$0xf]
        %v3087 = vld [vmem:[#allocation5 + $0x5c] sm:$0xf]
        %v3088 = vld [vmem:[#allocation5 + $0x60] sm:$0xf]
        %v3089 = vld [vmem:[#allocation5 + $0x64] sm:$0xf]
        %v3090 = vld [vmem:[#allocation5 + $0x68] sm:$0xf]
        %v3091 = vld [vmem:[#allocation5 + $0x6c] sm:$0xf]
        %v3092 = vld [vmem:[#allocation5 + $0x70] sm:$0xf]
        %v3093 = vld [vmem:[#allocation5 + $0x74] sm:$0xf]
        %v3094 = vld [vmem:[#allocation5 + $0x78] sm:$0xf]
        %v3095 = vld [vmem:[#allocation5 + $0x7c] sm:$0xf]
        %s3096 = scalar_lea.vmem [#allocation5], 128
        %v3097 = vld [vmem:[%s3096] sm:$0xf]
        %v3098 = vld [vmem:[%s3096 + $0x4] sm:$0xf]
        %v3099 = vld [vmem:[%s3096 + $0x8] sm:$0xf]
        %v3100 = vld [vmem:[%s3096 + $0xc] sm:$0xf]
        %v3101 = vld [vmem:[%s3096 + $0x10] sm:$0xf]
        %v3102 = vld [vmem:[%s3096 + $0x14] sm:$0xf]
        %v3103 = vld [vmem:[%s3096 + $0x18] sm:$0xf]
        %v3104 = vld [vmem:[%s3096 + $0x1c] sm:$0xf]
        %v3105 = vld [vmem:[%s3096 + $0x20] sm:$0xf]
        %v3106 = vld [vmem:[%s3096 + $0x24] sm:$0xf]
        %v3107 = vld [vmem:[%s3096 + $0x28] sm:$0xf]
        %v3108 = vld [vmem:[%s3096 + $0x2c] sm:$0xf]
        %v3109 = vld [vmem:[%s3096 + $0x30] sm:$0xf]
        %v3110 = vld [vmem:[%s3096 + $0x34] sm:$0xf]
        %v3111 = vld [vmem:[%s3096 + $0x38] sm:$0xf]
        %v3112 = vld [vmem:[%s3096 + $0x3c] sm:$0xf]
        %v3113 = vld [vmem:[%s3096 + $0x40] sm:$0xf]
        %v3114 = vld [vmem:[%s3096 + $0x44] sm:$0xf]
        %v3115 = vld [vmem:[%s3096 + $0x48] sm:$0xf]
        %v3116 = vld [vmem:[%s3096 + $0x4c] sm:$0xf]
        %v3117 = vld [vmem:[%s3096 + $0x50] sm:$0xf]
        %v3118 = vld [vmem:[%s3096 + $0x54] sm:$0xf]
        %v3119 = vld [vmem:[%s3096 + $0x58] sm:$0xf]
        %v3120 = vld [vmem:[%s3096 + $0x5c] sm:$0xf]
        %v3121 = vld [vmem:[%s3096 + $0x60] sm:$0xf]
        %v3122 = vld [vmem:[%s3096 + $0x64] sm:$0xf]
        %v3123 = vld [vmem:[%s3096 + $0x68] sm:$0xf]
        %v3124 = vld [vmem:[%s3096 + $0x6c] sm:$0xf]
        %v3125 = vld [vmem:[%s3096 + $0x70] sm:$0xf]
        %v3126 = vld [vmem:[%s3096 + $0x74] sm:$0xf]
        %v3127 = vld [vmem:[%s3096 + $0x78] sm:$0xf]
        %v3128 = vld [vmem:[%s3096 + $0x7c] sm:$0xf]
        %s3129 = scalar_lea.vmem [#allocation5], 256
        %v3130 = vld [vmem:[%s3129] sm:$0xf]
        %v3131 = vld [vmem:[%s3129 + $0x4] sm:$0xf]
        %v3132 = vld [vmem:[%s3129 + $0x8] sm:$0xf]
        %v3133 = vld [vmem:[%s3129 + $0xc] sm:$0xf]
        %v3134 = vld [vmem:[%s3129 + $0x10] sm:$0xf]
        %v3135 = vld [vmem:[%s3129 + $0x14] sm:$0xf]
        %v3136 = vld [vmem:[%s3129 + $0x18] sm:$0xf]
        %v3137 = vld [vmem:[%s3129 + $0x1c] sm:$0xf]
        %v3138 = vld [vmem:[%s3129 + $0x20] sm:$0xf]
        %v3139 = vld [vmem:[%s3129 + $0x24] sm:$0xf]
        %v3140 = vld [vmem:[%s3129 + $0x28] sm:$0xf]
        %v3141 = vld [vmem:[%s3129 + $0x2c] sm:$0xf]
        %v3142 = vld [vmem:[%s3129 + $0x30] sm:$0xf]
        %v3143 = vld [vmem:[%s3129 + $0x34] sm:$0xf]
        %v3144 = vld [vmem:[%s3129 + $0x38] sm:$0xf]
        %v3145 = vld [vmem:[%s3129 + $0x3c] sm:$0xf]
        %v3146 = vld [vmem:[%s3129 + $0x40] sm:$0xf]
        %v3147 = vld [vmem:[%s3129 + $0x44] sm:$0xf]
        %v3148 = vld [vmem:[%s3129 + $0x48] sm:$0xf]
        %v3149 = vld [vmem:[%s3129 + $0x4c] sm:$0xf]
        %v3150 = vld [vmem:[%s3129 + $0x50] sm:$0xf]
        %v3151 = vld [vmem:[%s3129 + $0x54] sm:$0xf]
        %v3152 = vld [vmem:[%s3129 + $0x58] sm:$0xf]
        %v3153 = vld [vmem:[%s3129 + $0x5c] sm:$0xf]
        %v3154 = vld [vmem:[%s3129 + $0x60] sm:$0xf]
        %v3155 = vld [vmem:[%s3129 + $0x64] sm:$0xf]
        %v3156 = vld [vmem:[%s3129 + $0x68] sm:$0xf]
        %v3157 = vld [vmem:[%s3129 + $0x6c] sm:$0xf]
        %v3158 = vld [vmem:[%s3129 + $0x70] sm:$0xf]
        %v3159 = vld [vmem:[%s3129 + $0x74] sm:$0xf]
        %v3160 = vld [vmem:[%s3129 + $0x78] sm:$0xf]
        %v3161 = vld [vmem:[%s3129 + $0x7c] sm:$0xf]
        %v3162 = vpack.c.bf16 %v3058, %v3058
        %v3163 = vpack.c.bf16 %v3059, %v3059
        %v3164 = vpack.c.bf16 %v3052, %v3052
        %v3165 = vpack.c.bf16 %v3053, %v3053
        %v3198 = vunpack.c.l.b16 %v3097
        %v3199 = vunpack.c.l.b16 %v3098
        %v3200 = vunpack.c.l.b16 %v3099
        %v3201 = vunpack.c.l.b16 %v3100
        %v3202 = vunpack.c.l.b16 %v3101
        %v3203 = vunpack.c.l.b16 %v3102
        %v3204 = vunpack.c.l.b16 %v3103
        %v3205 = vunpack.c.l.b16 %v3104
        %v3206 = vunpack.c.l.b16 %v3105
        %v3207 = vunpack.c.l.b16 %v3106
        %v3208 = vunpack.c.l.b16 %v3107
        %v3209 = vunpack.c.l.b16 %v3108
        %v3210 = vunpack.c.l.b16 %v3109
        %v3211 = vunpack.c.l.b16 %v3110
        %v3212 = vunpack.c.l.b16 %v3111
        %v3213 = vunpack.c.l.b16 %v3112
        %v3214 = vunpack.c.l.b16 %v3113
        %v3215 = vunpack.c.l.b16 %v3114
        %v3216 = vunpack.c.l.b16 %v3115
        %v3217 = vunpack.c.l.b16 %v3116
        %v3218 = vunpack.c.l.b16 %v3117
        %v3219 = vunpack.c.l.b16 %v3118
        %v3220 = vunpack.c.l.b16 %v3119
        %v3221 = vunpack.c.l.b16 %v3120
        %v3222 = vunpack.c.l.b16 %v3121
        %v3223 = vunpack.c.l.b16 %v3122
        %v3224 = vunpack.c.l.b16 %v3123
        %v3225 = vunpack.c.l.b16 %v3124
        %v3226 = vunpack.c.l.b16 %v3125
        %v3227 = vunpack.c.l.b16 %v3126
        %v3228 = vunpack.c.l.b16 %v3127
        %v3229 = vunpack.c.l.b16 %v3128
        %v3230 = vpack.c.b16 %v3199, %v3198
        %v3231 = vpack.c.b16 %v3201, %v3200
        %v3232 = vpack.c.b16 %v3203, %v3202
        %v3233 = vpack.c.b16 %v3205, %v3204
        %v3234 = vpack.c.b16 %v3207, %v3206
        %v3235 = vpack.c.b16 %v3209, %v3208
        %v3236 = vpack.c.b16 %v3211, %v3210
        %v3237 = vpack.c.b16 %v3213, %v3212
        %v3238 = vpack.c.b16 %v3215, %v3214
        %v3239 = vpack.c.b16 %v3217, %v3216
        %v3240 = vpack.c.b16 %v3219, %v3218
        %v3241 = vpack.c.b16 %v3221, %v3220
        %v3242 = vpack.c.b16 %v3223, %v3222
        %v3243 = vpack.c.b16 %v3225, %v3224
        %v3244 = vpack.c.b16 %v3227, %v3226
        %v3245 = vpack.c.b16 %v3229, %v3228
        %3262 = vmatprep.subr.bf16.mxu0 0
        %3263 = vmatpush1.bf16.msra.mxu0 %v3230
        %3264 = vmatprep.subr.bf16.mxu0 0
        %3265 = vmatpush1.bf16.msra.mxu0 %v3231
        %3266 = vmatprep.subr.bf16.mxu0 0
        %3267 = vmatpush1.bf16.msra.mxu0 %v3232
        %3268 = vmatprep.subr.bf16.mxu0 0
        %3269 = vmatpush1.bf16.msra.mxu0 %v3233
        %3270 = vmatprep.subr.bf16.mxu0 0
        %3271 = vmatpush1.bf16.msra.mxu0 %v3234
        %3272 = vmatprep.subr.bf16.mxu0 0
        %3273 = vmatpush1.bf16.msra.mxu0 %v3235
        %3274 = vmatprep.subr.bf16.mxu0 0
        %3275 = vmatpush1.bf16.msra.mxu0 %v3236
        %3276 = vmatprep.subr.bf16.mxu0 0
        %3277 = vmatpush1.bf16.msra.mxu0 %v3237
        %3278 = vmatprep.subr.bf16.mxu0 0
        %3279 = vmatpush1.bf16.msra.mxu0 %v3238
        %3280 = vmatprep.subr.bf16.mxu0 0
        %3281 = vmatpush1.bf16.msra.mxu0 %v3239
        %3282 = vmatprep.subr.bf16.mxu0 0
        %3283 = vmatpush1.bf16.msra.mxu0 %v3240
        %3284 = vmatprep.subr.bf16.mxu0 0
        %3285 = vmatpush1.bf16.msra.mxu0 %v3241
        %3286 = vmatprep.subr.bf16.mxu0 0
        %3287 = vmatpush1.bf16.msra.mxu0 %v3242
        %3288 = vmatprep.subr.bf16.mxu0 0
        %3289 = vmatpush1.bf16.msra.mxu0 %v3243
        %3290 = vmatprep.subr.bf16.mxu0 0
        %3291 = vmatpush1.bf16.msra.mxu0 %v3244
        %3292 = vmatprep.subr.bf16.mxu0 0
        %3293 = vmatpush1.bf16.msra.mxu0 %v3245
        %3294 = vmatprep.mubr.bf16.mxu0 %v3165
        %3295 = vmatmul.mubr.bf16.gmra.mrb[0].mxu0 %v3164
        %v3296 = vpop.f32.mrb[0].mxu0
        %v3297 = vadd.f32 0.0, %v3296
        %v3298 = vpop.f32.mrb[0].mxu0
        %v3299 = vpop.f32.mrb[0].mxu0
        %v3300 = vpop.f32.mrb[0].mxu0
        %3301 = vdwg.mxu0
        %v3334 = vunpack.c.l.b16 %v3064
        %v3335 = vunpack.c.l.b16 %v3065
        %v3336 = vunpack.c.l.b16 %v3066
        %v3337 = vunpack.c.l.b16 %v3067
        %v3338 = vunpack.c.l.b16 %v3068
        %v3339 = vunpack.c.l.b16 %v3069
        %v3340 = vunpack.c.l.b16 %v3070
        %v3341 = vunpack.c.l.b16 %v3071
        %v3342 = vunpack.c.l.b16 %v3072
        %v3343 = vunpack.c.l.b16 %v3073
        %v3344 = vunpack.c.l.b16 %v3074
        %v3345 = vunpack.c.l.b16 %v3075
        %v3346 = vunpack.c.l.b16 %v3076
        %v3347 = vunpack.c.l.b16 %v3077
        %v3348 = vunpack.c.l.b16 %v3078
        %v3349 = vunpack.c.l.b16 %v3079
        %v3350 = vunpack.c.l.b16 %v3080
        %v3351 = vunpack.c.l.b16 %v3081
        %v3352 = vunpack.c.l.b16 %v3082
        %v3353 = vunpack.c.l.b16 %v3083
        %v3354 = vunpack.c.l.b16 %v3084
        %v3355 = vunpack.c.l.b16 %v3085
        %v3356 = vunpack.c.l.b16 %v3086
        %v3357 = vunpack.c.l.b16 %v3087
        %v3358 = vunpack.c.l.b16 %v3088
        %v3359 = vunpack.c.l.b16 %v3089
        %v3360 = vunpack.c.l.b16 %v3090
        %v3361 = vunpack.c.l.b16 %v3091
        %v3362 = vunpack.c.l.b16 %v3092
        %v3363 = vunpack.c.l.b16 %v3093
        %v3364 = vunpack.c.l.b16 %v3094
        %v3365 = vunpack.c.l.b16 %v3095
        %v3366 = vpack.c.b16 %v3335, %v3334
        %v3367 = vpack.c.b16 %v3337, %v3336
        %v3368 = vpack.c.b16 %v3339, %v3338
        %v3369 = vpack.c.b16 %v3341, %v3340
        %v3370 = vpack.c.b16 %v3343, %v3342
        %v3371 = vpack.c.b16 %v3345, %v3344
        %v3372 = vpack.c.b16 %v3347, %v3346
        %v3373 = vpack.c.b16 %v3349, %v3348
        %v3374 = vpack.c.b16 %v3351, %v3350
        %v3375 = vpack.c.b16 %v3353, %v3352
        %v3376 = vpack.c.b16 %v3355, %v3354
        %v3377 = vpack.c.b16 %v3357, %v3356
        %v3378 = vpack.c.b16 %v3359, %v3358
        %v3379 = vpack.c.b16 %v3361, %v3360
        %v3380 = vpack.c.b16 %v3363, %v3362
        %v3381 = vpack.c.b16 %v3365, %v3364
        %3398 = vmatprep.subr.bf16.mxu0 0
        %3399 = vmatpush1.bf16.msra.mxu0 %v3366
        %3400 = vmatprep.subr.bf16.mxu0 0
        %3401 = vmatpush1.bf16.msra.mxu0 %v3367
        %3402 = vmatprep.subr.bf16.mxu0 0
        %3403 = vmatpush1.bf16.msra.mxu0 %v3368
        %3404 = vmatprep.subr.bf16.mxu0 0
        %3405 = vmatpush1.bf16.msra.mxu0 %v3369
        %3406 = vmatprep.subr.bf16.mxu0 0
        %3407 = vmatpush1.bf16.msra.mxu0 %v3370
        %3408 = vmatprep.subr.bf16.mxu0 0
        %3409 = vmatpush1.bf16.msra.mxu0 %v3371
        %3410 = vmatprep.subr.bf16.mxu0 0
        %3411 = vmatpush1.bf16.msra.mxu0 %v3372
        %3412 = vmatprep.subr.bf16.mxu0 0
        %3413 = vmatpush1.bf16.msra.mxu0 %v3373
        %3414 = vmatprep.subr.bf16.mxu0 0
        %3415 = vmatpush1.bf16.msra.mxu0 %v3374
        %3416 = vmatprep.subr.bf16.mxu0 0
        %3417 = vmatpush1.bf16.msra.mxu0 %v3375
        %3418 = vmatprep.subr.bf16.mxu0 0
        %3419 = vmatpush1.bf16.msra.mxu0 %v3376
        %3420 = vmatprep.subr.bf16.mxu0 0
        %3421 = vmatpush1.bf16.msra.mxu0 %v3377
        %3422 = vmatprep.subr.bf16.mxu0 0
        %3423 = vmatpush1.bf16.msra.mxu0 %v3378
        %3424 = vmatprep.subr.bf16.mxu0 0
        %3425 = vmatpush1.bf16.msra.mxu0 %v3379
        %3426 = vmatprep.subr.bf16.mxu0 0
        %3427 = vmatpush1.bf16.msra.mxu0 %v3380
        %3428 = vmatprep.subr.bf16.mxu0 0
        %3429 = vmatpush1.bf16.msra.mxu0 %v3381
        %3430 = vmatprep.mubr.bf16.mxu0 %v3163
        %3431 = vmatmul.mubr.bf16.gmra.mrb[0].mxu0 %v3162
        %v3432 = vpop.f32.mrb[0].mxu0
        %v3433 = vadd.f32 %v3297, %v3432
        %v3434 = vpop.f32.mrb[0].mxu0
        %v3435 = vpop.f32.mrb[0].mxu0
        %v3436 = vpop.f32.mrb[0].mxu0
        %3437 = vdwg.mxu0
        %v3438 = vpack.c.bf16 %v3062, %v3062
        %v3439 = vpack.c.bf16 %v3063, %v3063
        %v3472 = vunpack.c.l.b16 %v3130
        %v3473 = vunpack.c.l.b16 %v3131
        %v3474 = vunpack.c.l.b16 %v3132
        %v3475 = vunpack.c.l.b16 %v3133
        %v3476 = vunpack.c.l.b16 %v3134
        %v3477 = vunpack.c.l.b16 %v3135
        %v3478 = vunpack.c.l.b16 %v3136
        %v3479 = vunpack.c.l.b16 %v3137
        %v3480 = vunpack.c.l.b16 %v3138
        %v3481 = vunpack.c.l.b16 %v3139
        %v3482 = vunpack.c.l.b16 %v3140
        %v3483 = vunpack.c.l.b16 %v3141
        %v3484 = vunpack.c.l.b16 %v3142
        %v3485 = vunpack.c.l.b16 %v3143
        %v3486 = vunpack.c.l.b16 %v3144
        %v3487 = vunpack.c.l.b16 %v3145
        %v3488 = vunpack.c.l.b16 %v3146
        %v3489 = vunpack.c.l.b16 %v3147
        %v3490 = vunpack.c.l.b16 %v3148
        %v3491 = vunpack.c.l.b16 %v3149
        %v3492 = vunpack.c.l.b16 %v3150
        %v3493 = vunpack.c.l.b16 %v3151
        %v3494 = vunpack.c.l.b16 %v3152
        %v3495 = vunpack.c.l.b16 %v3153
        %v3496 = vunpack.c.l.b16 %v3154
        %v3497 = vunpack.c.l.b16 %v3155
        %v3498 = vunpack.c.l.b16 %v3156
        %v3499 = vunpack.c.l.b16 %v3157
        %v3500 = vunpack.c.l.b16 %v3158
        %v3501 = vunpack.c.l.b16 %v3159
        %v3502 = vunpack.c.l.b16 %v3160
        %v3503 = vunpack.c.l.b16 %v3161
        %v3504 = vpack.c.b16 %v3473, %v3472
        %v3505 = vpack.c.b16 %v3475, %v3474
        %v3506 = vpack.c.b16 %v3477, %v3476
        %v3507 = vpack.c.b16 %v3479, %v3478
        %v3508 = vpack.c.b16 %v3481, %v3480
        %v3509 = vpack.c.b16 %v3483, %v3482
        %v3510 = vpack.c.b16 %v3485, %v3484
        %v3511 = vpack.c.b16 %v3487, %v3486
        %v3512 = vpack.c.b16 %v3489, %v3488
        %v3513 = vpack.c.b16 %v3491, %v3490
        %v3514 = vpack.c.b16 %v3493, %v3492
        %v3515 = vpack.c.b16 %v3495, %v3494
        %v3516 = vpack.c.b16 %v3497, %v3496
        %v3517 = vpack.c.b16 %v3499, %v3498
        %v3518 = vpack.c.b16 %v3501, %v3500
        %v3519 = vpack.c.b16 %v3503, %v3502
        %3536 = vmatprep.subr.bf16.mxu0 0
        %3537 = vmatpush1.bf16.msra.mxu0 %v3504
        %3538 = vmatprep.subr.bf16.mxu0 0
        %3539 = vmatpush1.bf16.msra.mxu0 %v3505
        %3540 = vmatprep.subr.bf16.mxu0 0
        %3541 = vmatpush1.bf16.msra.mxu0 %v3506
        %3542 = vmatprep.subr.bf16.mxu0 0
        %3543 = vmatpush1.bf16.msra.mxu0 %v3507
        %3544 = vmatprep.subr.bf16.mxu0 0
        %3545 = vmatpush1.bf16.msra.mxu0 %v3508
        %3546 = vmatprep.subr.bf16.mxu0 0
        %3547 = vmatpush1.bf16.msra.mxu0 %v3509
        %3548 = vmatprep.subr.bf16.mxu0 0
        %3549 = vmatpush1.bf16.msra.mxu0 %v3510
        %3550 = vmatprep.subr.bf16.mxu0 0
        %3551 = vmatpush1.bf16.msra.mxu0 %v3511
        %3552 = vmatprep.subr.bf16.mxu0 0
        %3553 = vmatpush1.bf16.msra.mxu0 %v3512
        %3554 = vmatprep.subr.bf16.mxu0 0
        %3555 = vmatpush1.bf16.msra.mxu0 %v3513
        %3556 = vmatprep.subr.bf16.mxu0 0
        %3557 = vmatpush1.bf16.msra.mxu0 %v3514
        %3558 = vmatprep.subr.bf16.mxu0 0
        %3559 = vmatpush1.bf16.msra.mxu0 %v3515
        %3560 = vmatprep.subr.bf16.mxu0 0
        %3561 = vmatpush1.bf16.msra.mxu0 %v3516
        %3562 = vmatprep.subr.bf16.mxu0 0
        %3563 = vmatpush1.bf16.msra.mxu0 %v3517
        %3564 = vmatprep.subr.bf16.mxu0 0
        %3565 = vmatpush1.bf16.msra.mxu0 %v3518
        %3566 = vmatprep.subr.bf16.mxu0 0
        %3567 = vmatpush1.bf16.msra.mxu0 %v3519
        %3568 = vmatprep.mubr.bf16.mxu0 %v3439
        %3569 = vmatmul.mubr.bf16.gmra.mrb[0].mxu0 %v3438
        %v3570 = vpop.f32.mrb[0].mxu0
        %v3571 = vadd.f32 0.0, %v3570
        %v3572 = vpop.f32.mrb[0].mxu0
        %v3573 = vpop.f32.mrb[0].mxu0
        %v3574 = vpop.f32.mrb[0].mxu0
        %3575 = vdwg.mxu0
        %v3576 = vadd.f32 %v3433, %v3571
        %v3577 = vld [vmem:[%s10] sm:$0x1]
        %v3579 = vlaneseq
        %v3580 = vshrl.u32 %v3579, 7
        %v3581 = vsub.s32 0, %v3580
        %v3582 = vrot.slane %v3577, %v3581
        %v3584 = vadd.f32 %v3576, %v3582
        %v3585 = vmax.f32 %v3584, 0.0
        %v3587 = vcombine.high %v3585, %v3585
        %v3589 = vunpack.c.l.s4 1966171168
        %v3590 = vunpack.c.0.s8 %v3589
        %v3591 = vlaneseq
        %v3592 = vshrl.u32 %v3591, 7
        %v3593 = vsub.s32 %v3590, %v3592
        %v3594 = vrot.slane %v3585, %v3593
        %v3596 = vunpack.c.l.s4 1966171168
        %v3597 = vunpack.c.0.s8 %v3596
        %v3598 = vlaneseq
        %v3599 = vshrl.u32 %v3598, 7
        %v3600 = vsub.s32 %v3597, %v3599
        %v3601 = vrot.slane %v3587, %v3600
        %v3602 = vcombine.high %v3594, %v3594
        %v3603 = vcombine.high %v3601, %v3601
        %v3605 = vunpack.c.l.s4 1966171168
        %v3606 = vunpack.c.0.s8 %v3605
        %v3607 = vlaneseq
        %v3608 = vshrl.u32 %v3607, 7
        %v3609 = vsub.s32 %v3606, %v3608
        %v3610 = vrot.slane %v3594, %v3609
        %v3612 = vunpack.c.l.s4 1966171168
        %v3613 = vunpack.c.0.s8 %v3612
        %v3614 = vlaneseq
        %v3615 = vshrl.u32 %v3614, 7
        %v3616 = vsub.s32 %v3613, %v3615
        %v3617 = vrot.slane %v3601, %v3616
        %v3619 = vunpack.c.l.s4 1966171168
        %v3620 = vunpack.c.0.s8 %v3619
        %v3621 = vlaneseq
        %v3622 = vshrl.u32 %v3621, 7
        %v3623 = vsub.s32 %v3620, %v3622
        %v3624 = vrot.slane %v3602, %v3623
        %v3626 = vunpack.c.l.s4 1966171168
        %v3627 = vunpack.c.0.s8 %v3626
        %v3628 = vlaneseq
        %v3629 = vshrl.u32 %v3628, 7
        %v3630 = vsub.s32 %v3627, %v3629
        %v3631 = vrot.slane %v3603, %v3630
        %v3632 = vcombine.high %v3610, %v3610
        %v3633 = vcombine.high %v3617, %v3617
        %v3634 = vcombine.high %v3624, %v3624
        %v3635 = vcombine.high %v3631, %v3631
        %v3636 = vlaneseq
        %v3637 = vshrl.u32 %v3636, 7
        %v3638 = vsub.s32 0, %v3637
        %v3639 = vrot.slane %v3610, %v3638
        %v3640 = vlaneseq
        %v3641 = vshrl.u32 %v3640, 7
        %v3642 = vsub.s32 0, %v3641
        %v3643 = vrot.slane %v3624, %v3642
        %v3644 = vlaneseq
        %v3645 = vshrl.u32 %v3644, 7
        %v3646 = vsub.s32 0, %v3645
        %v3647 = vrot.slane %v3632, %v3646
        %v3648 = vlaneseq
        %v3649 = vshrl.u32 %v3648, 7
        %v3650 = vsub.s32 0, %v3649
        %v3651 = vrot.slane %v3634, %v3650
        %v3652 = vlaneseq
        %v3653 = vshrl.u32 %v3652, 7
        %v3654 = vsub.s32 0, %v3653
        %v3655 = vrot.slane %v3617, %v3654
        %v3656 = vlaneseq
        %v3657 = vshrl.u32 %v3656, 7
        %v3658 = vsub.s32 0, %v3657
        %v3659 = vrot.slane %v3631, %v3658
        %v3660 = vlaneseq
        %v3661 = vshrl.u32 %v3660, 7
        %v3662 = vsub.s32 0, %v3661
        %v3663 = vrot.slane %v3633, %v3662
        %v3664 = vlaneseq
        %v3665 = vshrl.u32 %v3664, 7
        %v3666 = vsub.s32 0, %v3665
        %v3667 = vrot.slane %v3635, %v3666
        %v3668 = vcombine.low %v3639, %v3643
        %v3669 = vcombine.low %v3647, %v3651
        %v3671 = vunpack.c.l.s4 1983009808
        %v3672 = vunpack.c.0.s8 %v3671
        %v3673 = vlaneseq
        %v3674 = vshrl.u32 %v3673, 7
        %v3675 = vsub.s32 %v3672, %v3674
        %v3676 = vrot.slane %v3668, %v3675
        %v3678 = vunpack.c.l.s4 1983009808
        %v3679 = vunpack.c.0.s8 %v3678
        %v3680 = vlaneseq
        %v3681 = vshrl.u32 %v3680, 7
        %v3682 = vsub.s32 %v3679, %v3681
        %v3683 = vrot.slane %v3669, %v3682
        %v3684 = vcombine.low %v3676, %v3683
        %v3685 = vcombine.low %v3655, %v3659
        %v3686 = vcombine.low %v3663, %v3667
        %v3688 = vunpack.c.l.s4 1983009808
        %v3689 = vunpack.c.0.s8 %v3688
        %v3690 = vlaneseq
        %v3691 = vshrl.u32 %v3690, 7
        %v3692 = vsub.s32 %v3689, %v3691
        %v3693 = vrot.slane %v3685, %v3692
        %v3695 = vunpack.c.l.s4 1983009808
        %v3696 = vunpack.c.0.s8 %v3695
        %v3697 = vlaneseq
        %v3698 = vshrl.u32 %v3697, 7
        %v3699 = vsub.s32 %v3696, %v3698
        %v3700 = vrot.slane %v3686, %v3699
        %v3701 = vcombine.low %v3693, %v3700
        %v3704 = vrot.slane %v3684, 7
        %v3705 = vrot.slane %v3701, 7
        %v3706 = vsel %vm615, %v3704, %v3705
        %v3707 = vsel %vm615, %v3705, %v3704
        %v3708 = vsel %vm599, 0.0, %v3707
        %v3709 = vsel %vm600, 0.0, %v3706
        %v3710 = vrot.slane %v3684, 1
        %v3711 = vrot.slane %v3701, 1
        %v3712 = vsel %vm648, %v3710, %v3711
        %v3713 = vsel %vm648, %v3711, %v3710
        %v3714 = vsel %vm1975, 0.0, %v3712
        %v3715 = vsel %vm1976, 0.0, %v3713
        %v3716 = vld [vmem:[%s11] sm:$0xf]
        %v3717 = vld [vmem:[%s11 + $0x4] sm:$0xf]
        %v3718 = vld [vmem:[%s11 + $0x8] sm:$0xf]
        %v3719 = vld [vmem:[%s11 + $0xc] sm:$0xf]
        %v3720 = vld [vmem:[%s11 + $0x10] sm:$0xf]
        %v3721 = vld [vmem:[%s11 + $0x14] sm:$0xf]
        %v3722 = vld [vmem:[%s11 + $0x18] sm:$0xf]
        %v3723 = vld [vmem:[%s11 + $0x1c] sm:$0xf]
        %v3724 = vld [vmem:[%s11 + $0x20] sm:$0xf]
        %v3725 = vld [vmem:[%s11 + $0x24] sm:$0xf]
        %v3726 = vld [vmem:[%s11 + $0x28] sm:$0xf]
        %v3727 = vld [vmem:[%s11 + $0x2c] sm:$0xf]
        %v3728 = vld [vmem:[%s11 + $0x30] sm:$0xf]
        %v3729 = vld [vmem:[%s11 + $0x34] sm:$0xf]
        %v3730 = vld [vmem:[%s11 + $0x38] sm:$0xf]
        %v3731 = vld [vmem:[%s11 + $0x3c] sm:$0xf]
        %s3732 = scalar_lea.vmem %s11, 64
        %v3733 = vld [vmem:[%s3732] sm:$0xf]
        %v3734 = vld [vmem:[%s3732 + $0x4] sm:$0xf]
        %v3735 = vld [vmem:[%s3732 + $0x8] sm:$0xf]
        %v3736 = vld [vmem:[%s3732 + $0xc] sm:$0xf]
        %v3737 = vld [vmem:[%s3732 + $0x10] sm:$0xf]
        %v3738 = vld [vmem:[%s3732 + $0x14] sm:$0xf]
        %v3739 = vld [vmem:[%s3732 + $0x18] sm:$0xf]
        %v3740 = vld [vmem:[%s3732 + $0x1c] sm:$0xf]
        %v3741 = vld [vmem:[%s3732 + $0x20] sm:$0xf]
        %v3742 = vld [vmem:[%s3732 + $0x24] sm:$0xf]
        %v3743 = vld [vmem:[%s3732 + $0x28] sm:$0xf]
        %v3744 = vld [vmem:[%s3732 + $0x2c] sm:$0xf]
        %v3745 = vld [vmem:[%s3732 + $0x30] sm:$0xf]
        %v3746 = vld [vmem:[%s3732 + $0x34] sm:$0xf]
        %v3747 = vld [vmem:[%s3732 + $0x38] sm:$0xf]
        %v3748 = vld [vmem:[%s3732 + $0x3c] sm:$0xf]
        %s3749 = scalar_lea.vmem %s11, 128
        %v3750 = vld [vmem:[%s3749] sm:$0xf]
        %v3751 = vld [vmem:[%s3749 + $0x4] sm:$0xf]
        %v3752 = vld [vmem:[%s3749 + $0x8] sm:$0xf]
        %v3753 = vld [vmem:[%s3749 + $0xc] sm:$0xf]
        %v3754 = vld [vmem:[%s3749 + $0x10] sm:$0xf]
        %v3755 = vld [vmem:[%s3749 + $0x14] sm:$0xf]
        %v3756 = vld [vmem:[%s3749 + $0x18] sm:$0xf]
        %v3757 = vld [vmem:[%s3749 + $0x1c] sm:$0xf]
        %v3758 = vld [vmem:[%s3749 + $0x20] sm:$0xf]
        %v3759 = vld [vmem:[%s3749 + $0x24] sm:$0xf]
        %v3760 = vld [vmem:[%s3749 + $0x28] sm:$0xf]
        %v3761 = vld [vmem:[%s3749 + $0x2c] sm:$0xf]
        %v3762 = vld [vmem:[%s3749 + $0x30] sm:$0xf]
        %v3763 = vld [vmem:[%s3749 + $0x34] sm:$0xf]
        %v3764 = vld [vmem:[%s3749 + $0x38] sm:$0xf]
        %v3765 = vld [vmem:[%s3749 + $0x3c] sm:$0xf]
        %v3766 = vpack.c.bf16 %v3709, %v3708
        %v3767 = vpack.c.bf16 %v3701, %v3684
        %v3784 = vunpack.c.l.b16 %v3733
        %v3785 = vunpack.c.l.b16 %v3734
        %v3786 = vunpack.c.l.b16 %v3735
        %v3787 = vunpack.c.l.b16 %v3736
        %v3788 = vunpack.c.l.b16 %v3737
        %v3789 = vunpack.c.l.b16 %v3738
        %v3790 = vunpack.c.l.b16 %v3739
        %v3791 = vunpack.c.l.b16 %v3740
        %v3792 = vunpack.c.l.b16 %v3741
        %v3793 = vunpack.c.l.b16 %v3742
        %v3794 = vunpack.c.l.b16 %v3743
        %v3795 = vunpack.c.l.b16 %v3744
        %v3796 = vunpack.c.l.b16 %v3745
        %v3797 = vunpack.c.l.b16 %v3746
        %v3798 = vunpack.c.l.b16 %v3747
        %v3799 = vunpack.c.l.b16 %v3748
        %v3800 = vpack.c.b16 %v3785, %v3784
        %v3801 = vpack.c.b16 %v3787, %v3786
        %v3802 = vpack.c.b16 %v3789, %v3788
        %v3803 = vpack.c.b16 %v3791, %v3790
        %v3804 = vpack.c.b16 %v3793, %v3792
        %v3805 = vpack.c.b16 %v3795, %v3794
        %v3806 = vpack.c.b16 %v3797, %v3796
        %v3807 = vpack.c.b16 %v3799, %v3798
        %3816 = vmatprep.subr.bf16.mxu0 0
        %3817 = vmatpush1.bf16.msra.mxu0 %v3800
        %3818 = vmatprep.subr.bf16.mxu0 0
        %3819 = vmatpush1.bf16.msra.mxu0 %v3801
        %3820 = vmatprep.subr.bf16.mxu0 0
        %3821 = vmatpush1.bf16.msra.mxu0 %v3802
        %3822 = vmatprep.subr.bf16.mxu0 0
        %3823 = vmatpush1.bf16.msra.mxu0 %v3803
        %3824 = vmatprep.subr.bf16.mxu0 0
        %3825 = vmatpush1.bf16.msra.mxu0 %v3804
        %3826 = vmatprep.subr.bf16.mxu0 0
        %3827 = vmatpush1.bf16.msra.mxu0 %v3805
        %3828 = vmatprep.subr.bf16.mxu0 0
        %3829 = vmatpush1.bf16.msra.mxu0 %v3806
        %3830 = vmatprep.subr.bf16.mxu0 0
        %3831 = vmatpush1.bf16.msra.mxu0 %v3807
        %3832 = vmatprep.subr.bf16.mxu0 0
        %3833 = vmatpush1.bf16.msra.mxu0 0
        %3834 = vmatprep.subr.bf16.mxu0 0
        %3835 = vmatpush1.bf16.msra.mxu0 0
        %3836 = vmatprep.subr.bf16.mxu0 0
        %3837 = vmatpush1.bf16.msra.mxu0 0
        %3838 = vmatprep.subr.bf16.mxu0 0
        %3839 = vmatpush1.bf16.msra.mxu0 0
        %3840 = vmatprep.subr.bf16.mxu0 0
        %3841 = vmatpush1.bf16.msra.mxu0 0
        %3842 = vmatprep.subr.bf16.mxu0 0
        %3843 = vmatpush1.bf16.msra.mxu0 0
        %3844 = vmatprep.subr.bf16.mxu0 0
        %3845 = vmatpush1.bf16.msra.mxu0 0
        %3846 = vmatprep.subr.bf16.mxu0 0
        %3847 = vmatpush1.bf16.msra.mxu0 0
        %3848 = vmatprep.mubr.bf16.mxu0 0
        %3849 = vmatmul.mubr.bf16.gmra.mrb[0].mxu0 %v3767
        %v3850 = vpop.f32.mrb[0].mxu0
        %v3851 = vadd.f32 0.0, %v3850
        %v3852 = vpop.f32.mrb[0].mxu0
        %v3853 = vpop.f32.mrb[0].mxu0
        %v3854 = vadd.f32 0.0, %v3853
        %v3855 = vpop.f32.mrb[0].mxu0
        %3856 = vdwg.mxu0
        %v3873 = vunpack.c.l.b16 %v3716
        %v3874 = vunpack.c.l.b16 %v3717
        %v3875 = vunpack.c.l.b16 %v3718
        %v3876 = vunpack.c.l.b16 %v3719
        %v3877 = vunpack.c.l.b16 %v3720
        %v3878 = vunpack.c.l.b16 %v3721
        %v3879 = vunpack.c.l.b16 %v3722
        %v3880 = vunpack.c.l.b16 %v3723
        %v3881 = vunpack.c.l.b16 %v3724
        %v3882 = vunpack.c.l.b16 %v3725
        %v3883 = vunpack.c.l.b16 %v3726
        %v3884 = vunpack.c.l.b16 %v3727
        %v3885 = vunpack.c.l.b16 %v3728
        %v3886 = vunpack.c.l.b16 %v3729
        %v3887 = vunpack.c.l.b16 %v3730
        %v3888 = vunpack.c.l.b16 %v3731
        %v3889 = vpack.c.b16 %v3874, %v3873
        %v3890 = vpack.c.b16 %v3876, %v3875
        %v3891 = vpack.c.b16 %v3878, %v3877
        %v3892 = vpack.c.b16 %v3880, %v3879
        %v3893 = vpack.c.b16 %v3882, %v3881
        %v3894 = vpack.c.b16 %v3884, %v3883
        %v3895 = vpack.c.b16 %v3886, %v3885
        %v3896 = vpack.c.b16 %v3888, %v3887
        %3905 = vmatprep.subr.bf16.mxu0 0
        %3906 = vmatpush1.bf16.msra.mxu0 %v3889
        %3907 = vmatprep.subr.bf16.mxu0 0
        %3908 = vmatpush1.bf16.msra.mxu0 %v3890
        %3909 = vmatprep.subr.bf16.mxu0 0
        %3910 = vmatpush1.bf16.msra.mxu0 %v3891
        %3911 = vmatprep.subr.bf16.mxu0 0
        %3912 = vmatpush1.bf16.msra.mxu0 %v3892
        %3913 = vmatprep.subr.bf16.mxu0 0
        %3914 = vmatpush1.bf16.msra.mxu0 %v3893
        %3915 = vmatprep.subr.bf16.mxu0 0
        %3916 = vmatpush1.bf16.msra.mxu0 %v3894
        %3917 = vmatprep.subr.bf16.mxu0 0
        %3918 = vmatpush1.bf16.msra.mxu0 %v3895
        %3919 = vmatprep.subr.bf16.mxu0 0
        %3920 = vmatpush1.bf16.msra.mxu0 %v3896
        %3921 = vmatprep.subr.bf16.mxu0 0
        %3922 = vmatpush1.bf16.msra.mxu0 0
        %3923 = vmatprep.subr.bf16.mxu0 0
        %3924 = vmatpush1.bf16.msra.mxu0 0
        %3925 = vmatprep.subr.bf16.mxu0 0
        %3926 = vmatpush1.bf16.msra.mxu0 0
        %3927 = vmatprep.subr.bf16.mxu0 0
        %3928 = vmatpush1.bf16.msra.mxu0 0
        %3929 = vmatprep.subr.bf16.mxu0 0
        %3930 = vmatpush1.bf16.msra.mxu0 0
        %3931 = vmatprep.subr.bf16.mxu0 0
        %3932 = vmatpush1.bf16.msra.mxu0 0
        %3933 = vmatprep.subr.bf16.mxu0 0
        %3934 = vmatpush1.bf16.msra.mxu0 0
        %3935 = vmatprep.subr.bf16.mxu0 0
        %3936 = vmatpush1.bf16.msra.mxu0 0
        %3937 = vmatprep.mubr.bf16.mxu0 0
        %3938 = vmatmul.mubr.bf16.gmra.mrb[0].mxu0 %v3766
        %v3939 = vpop.f32.mrb[0].mxu0
        %v3940 = vadd.f32 %v3851, %v3939
        %v3941 = vpop.f32.mrb[0].mxu0
        %v3942 = vpop.f32.mrb[0].mxu0
        %v3943 = vadd.f32 %v3854, %v3942
        %v3944 = vpop.f32.mrb[0].mxu0
        %3945 = vdwg.mxu0
        %v3946 = vpack.c.bf16 %v3715, %v3714
        %v3963 = vunpack.c.l.b16 %v3750
        %v3964 = vunpack.c.l.b16 %v3751
        %v3965 = vunpack.c.l.b16 %v3752
        %v3966 = vunpack.c.l.b16 %v3753
        %v3967 = vunpack.c.l.b16 %v3754
        %v3968 = vunpack.c.l.b16 %v3755
        %v3969 = vunpack.c.l.b16 %v3756
        %v3970 = vunpack.c.l.b16 %v3757
        %v3971 = vunpack.c.l.b16 %v3758
        %v3972 = vunpack.c.l.b16 %v3759
        %v3973 = vunpack.c.l.b16 %v3760
        %v3974 = vunpack.c.l.b16 %v3761
        %v3975 = vunpack.c.l.b16 %v3762
        %v3976 = vunpack.c.l.b16 %v3763
        %v3977 = vunpack.c.l.b16 %v3764
        %v3978 = vunpack.c.l.b16 %v3765
        %v3979 = vpack.c.b16 %v3964, %v3963
        %v3980 = vpack.c.b16 %v3966, %v3965
        %v3981 = vpack.c.b16 %v3968, %v3967
        %v3982 = vpack.c.b16 %v3970, %v3969
        %v3983 = vpack.c.b16 %v3972, %v3971
        %v3984 = vpack.c.b16 %v3974, %v3973
        %v3985 = vpack.c.b16 %v3976, %v3975
        %v3986 = vpack.c.b16 %v3978, %v3977
        %3995 = vmatprep.subr.bf16.mxu0 0
        %3996 = vmatpush1.bf16.msra.mxu0 %v3979
        %3997 = vmatprep.subr.bf16.mxu0 0
        %3998 = vmatpush1.bf16.msra.mxu0 %v3980
        %3999 = vmatprep.subr.bf16.mxu0 0
        %4000 = vmatpush1.bf16.msra.mxu0 %v3981
        %4001 = vmatprep.subr.bf16.mxu0 0
        %4002 = vmatpush1.bf16.msra.mxu0 %v3982
        %4003 = vmatprep.subr.bf16.mxu0 0
        %4004 = vmatpush1.bf16.msra.mxu0 %v3983
        %4005 = vmatprep.subr.bf16.mxu0 0
        %4006 = vmatpush1.bf16.msra.mxu0 %v3984
        %4007 = vmatprep.subr.bf16.mxu0 0
        %4008 = vmatpush1.bf16.msra.mxu0 %v3985
        %4009 = vmatprep.subr.bf16.mxu0 0
        %4010 = vmatpush1.bf16.msra.mxu0 %v3986
        %4011 = vmatprep.subr.bf16.mxu0 0
        %4012 = vmatpush1.bf16.msra.mxu0 0
        %4013 = vmatprep.subr.bf16.mxu0 0
        %4014 = vmatpush1.bf16.msra.mxu0 0
        %4015 = vmatprep.subr.bf16.mxu0 0
        %4016 = vmatpush1.bf16.msra.mxu0 0
        %4017 = vmatprep.subr.bf16.mxu0 0
        %4018 = vmatpush1.bf16.msra.mxu0 0
        %4019 = vmatprep.subr.bf16.mxu0 0
        %4020 = vmatpush1.bf16.msra.mxu0 0
        %4021 = vmatprep.subr.bf16.mxu0 0
        %4022 = vmatpush1.bf16.msra.mxu0 0
        %4023 = vmatprep.subr.bf16.mxu0 0
        %4024 = vmatpush1.bf16.msra.mxu0 0
        %4025 = vmatprep.subr.bf16.mxu0 0
        %4026 = vmatpush1.bf16.msra.mxu0 0
        %4027 = vmatprep.mubr.bf16.mxu0 0
        %4028 = vmatmul.mubr.bf16.gmra.mrb[0].mxu0 %v3946
        %v4029 = vpop.f32.mrb[0].mxu0
        %v4030 = vadd.f32 0.0, %v4029
        %v4031 = vpop.f32.mrb[0].mxu0
        %v4032 = vpop.f32.mrb[0].mxu0
        %v4033 = vadd.f32 0.0, %v4032
        %v4034 = vpop.f32.mrb[0].mxu0
        %4035 = vdwg.mxu0
        %v4036 = vadd.f32 %v3940, %v4030
        %v4037 = vadd.f32 %v3943, %v4033
        %v4038 = vld [vmem:[%s12] sm:$0x1]
        %v4040 = vlaneseq
        %v4041 = vshrl.u32 %v4040, 7
        %v4042 = vsub.s32 0, %v4041
        %v4043 = vrot.slane %v4038, %v4042
        %v4045 = vadd.f32 %v4036, %v4043
        %v4046 = vadd.f32 %v4037, %v4043
        %v4047 = vmax.f32 %v4045, 0.0
        %v4048 = vmax.f32 %v4046, 0.0
        %v4051 = vcombine.high %v4047, %v4047
        %v4053 = vunpack.c.l.s4 1966171168
        %v4054 = vunpack.c.0.s8 %v4053
        %v4055 = vlaneseq
        %v4056 = vshrl.u32 %v4055, 7
        %v4057 = vsub.s32 %v4054, %v4056
        %v4058 = vrot.slane %v4047, %v4057
        %v4060 = vunpack.c.l.s4 1966171168
        %v4061 = vunpack.c.0.s8 %v4060
        %v4062 = vlaneseq
        %v4063 = vshrl.u32 %v4062, 7
        %v4064 = vsub.s32 %v4061, %v4063
        %v4065 = vrot.slane %v4051, %v4064
        %v4066 = vcombine.high %v4058, %v4058
        %v4067 = vcombine.high %v4065, %v4065
        %v4069 = vunpack.c.l.s4 1966171168
        %v4070 = vunpack.c.0.s8 %v4069
        %v4071 = vlaneseq
        %v4072 = vshrl.u32 %v4071, 7
        %v4073 = vsub.s32 %v4070, %v4072
        %v4074 = vrot.slane %v4058, %v4073
        %v4076 = vunpack.c.l.s4 1966171168
        %v4077 = vunpack.c.0.s8 %v4076
        %v4078 = vlaneseq
        %v4079 = vshrl.u32 %v4078, 7
        %v4080 = vsub.s32 %v4077, %v4079
        %v4081 = vrot.slane %v4065, %v4080
        %v4083 = vunpack.c.l.s4 1966171168
        %v4084 = vunpack.c.0.s8 %v4083
        %v4085 = vlaneseq
        %v4086 = vshrl.u32 %v4085, 7
        %v4087 = vsub.s32 %v4084, %v4086
        %v4088 = vrot.slane %v4066, %v4087
        %v4090 = vunpack.c.l.s4 1966171168
        %v4091 = vunpack.c.0.s8 %v4090
        %v4092 = vlaneseq
        %v4093 = vshrl.u32 %v4092, 7
        %v4094 = vsub.s32 %v4091, %v4093
        %v4095 = vrot.slane %v4067, %v4094
        %v4096 = vcombine.high %v4074, %v4074
        %v4097 = vcombine.high %v4081, %v4081
        %v4098 = vcombine.high %v4088, %v4088
        %v4099 = vcombine.high %v4095, %v4095
        %v4100 = vcombine.high %v4048, %v4048
        %v4102 = vunpack.c.l.s4 1966171168
        %v4103 = vunpack.c.0.s8 %v4102
        %v4104 = vlaneseq
        %v4105 = vshrl.u32 %v4104, 7
        %v4106 = vsub.s32 %v4103, %v4105
        %v4107 = vrot.slane %v4048, %v4106
        %v4109 = vunpack.c.l.s4 1966171168
        %v4110 = vunpack.c.0.s8 %v4109
        %v4111 = vlaneseq
        %v4112 = vshrl.u32 %v4111, 7
        %v4113 = vsub.s32 %v4110, %v4112
        %v4114 = vrot.slane %v4100, %v4113
        %v4115 = vcombine.high %v4107, %v4107
        %v4116 = vcombine.high %v4114, %v4114
        %v4118 = vunpack.c.l.s4 1966171168
        %v4119 = vunpack.c.0.s8 %v4118
        %v4120 = vlaneseq
        %v4121 = vshrl.u32 %v4120, 7
        %v4122 = vsub.s32 %v4119, %v4121
        %v4123 = vrot.slane %v4107, %v4122
        %v4125 = vunpack.c.l.s4 1966171168
        %v4126 = vunpack.c.0.s8 %v4125
        %v4127 = vlaneseq
        %v4128 = vshrl.u32 %v4127, 7
        %v4129 = vsub.s32 %v4126, %v4128
        %v4130 = vrot.slane %v4114, %v4129
        %v4132 = vunpack.c.l.s4 1966171168
        %v4133 = vunpack.c.0.s8 %v4132
        %v4134 = vlaneseq
        %v4135 = vshrl.u32 %v4134, 7
        %v4136 = vsub.s32 %v4133, %v4135
        %v4137 = vrot.slane %v4115, %v4136
        %v4139 = vunpack.c.l.s4 1966171168
        %v4140 = vunpack.c.0.s8 %v4139
        %v4141 = vlaneseq
        %v4142 = vshrl.u32 %v4141, 7
        %v4143 = vsub.s32 %v4140, %v4142
        %v4144 = vrot.slane %v4116, %v4143
        %v4145 = vcombine.high %v4123, %v4123
        %v4146 = vcombine.high %v4130, %v4130
        %v4147 = vcombine.high %v4137, %v4137
        %v4148 = vcombine.high %v4144, %v4144
        %v4149 = vlaneseq
        %v4150 = vshrl.u32 %v4149, 7
        %v4151 = vsub.s32 0, %v4150
        %v4152 = vrot.slane %v4074, %v4151
        %v4153 = vlaneseq
        %v4154 = vshrl.u32 %v4153, 7
        %v4155 = vsub.s32 0, %v4154
        %v4156 = vrot.slane %v4088, %v4155
        %v4157 = vlaneseq
        %v4158 = vshrl.u32 %v4157, 7
        %v4159 = vsub.s32 0, %v4158
        %v4160 = vrot.slane %v4096, %v4159
        %v4161 = vlaneseq
        %v4162 = vshrl.u32 %v4161, 7
        %v4163 = vsub.s32 0, %v4162
        %v4164 = vrot.slane %v4098, %v4163
        %v4165 = vlaneseq
        %v4166 = vshrl.u32 %v4165, 7
        %v4167 = vsub.s32 0, %v4166
        %v4168 = vrot.slane %v4081, %v4167
        %v4169 = vlaneseq
        %v4170 = vshrl.u32 %v4169, 7
        %v4171 = vsub.s32 0, %v4170
        %v4172 = vrot.slane %v4095, %v4171
        %v4173 = vlaneseq
        %v4174 = vshrl.u32 %v4173, 7
        %v4175 = vsub.s32 0, %v4174
        %v4176 = vrot.slane %v4097, %v4175
        %v4177 = vlaneseq
        %v4178 = vshrl.u32 %v4177, 7
        %v4179 = vsub.s32 0, %v4178
        %v4180 = vrot.slane %v4099, %v4179
        %v4181 = vlaneseq
        %v4182 = vshrl.u32 %v4181, 7
        %v4183 = vsub.s32 0, %v4182
        %v4184 = vrot.slane %v4123, %v4183
        %v4185 = vlaneseq
        %v4186 = vshrl.u32 %v4185, 7
        %v4187 = vsub.s32 0, %v4186
        %v4188 = vrot.slane %v4137, %v4187
        %v4189 = vlaneseq
        %v4190 = vshrl.u32 %v4189, 7
        %v4191 = vsub.s32 0, %v4190
        %v4192 = vrot.slane %v4145, %v4191
        %v4193 = vlaneseq
        %v4194 = vshrl.u32 %v4193, 7
        %v4195 = vsub.s32 0, %v4194
        %v4196 = vrot.slane %v4147, %v4195
        %v4197 = vlaneseq
        %v4198 = vshrl.u32 %v4197, 7
        %v4199 = vsub.s32 0, %v4198
        %v4200 = vrot.slane %v4130, %v4199
        %v4201 = vlaneseq
        %v4202 = vshrl.u32 %v4201, 7
        %v4203 = vsub.s32 0, %v4202
        %v4204 = vrot.slane %v4144, %v4203
        %v4205 = vlaneseq
        %v4206 = vshrl.u32 %v4205, 7
        %v4207 = vsub.s32 0, %v4206
        %v4208 = vrot.slane %v4146, %v4207
        %v4209 = vlaneseq
        %v4210 = vshrl.u32 %v4209, 7
        %v4211 = vsub.s32 0, %v4210
        %v4212 = vrot.slane %v4148, %v4211
        %v4213 = vcombine.low %v4152, %v4156
        %v4214 = vcombine.low %v4160, %v4164
        %v4216 = vunpack.c.l.s4 1983009808
        %v4217 = vunpack.c.0.s8 %v4216
        %v4218 = vlaneseq
        %v4219 = vshrl.u32 %v4218, 7
        %v4220 = vsub.s32 %v4217, %v4219
        %v4221 = vrot.slane %v4213, %v4220
        %v4223 = vunpack.c.l.s4 1983009808
        %v4224 = vunpack.c.0.s8 %v4223
        %v4225 = vlaneseq
        %v4226 = vshrl.u32 %v4225, 7
        %v4227 = vsub.s32 %v4224, %v4226
        %v4228 = vrot.slane %v4214, %v4227
        %v4229 = vcombine.low %v4221, %v4228
        %v4230 = vcombine.low %v4168, %v4172
        %v4231 = vcombine.low %v4176, %v4180
        %v4233 = vunpack.c.l.s4 1983009808
        %v4234 = vunpack.c.0.s8 %v4233
        %v4235 = vlaneseq
        %v4236 = vshrl.u32 %v4235, 7
        %v4237 = vsub.s32 %v4234, %v4236
        %v4238 = vrot.slane %v4230, %v4237
        %v4240 = vunpack.c.l.s4 1983009808
        %v4241 = vunpack.c.0.s8 %v4240
        %v4242 = vlaneseq
        %v4243 = vshrl.u32 %v4242, 7
        %v4244 = vsub.s32 %v4241, %v4243
        %v4245 = vrot.slane %v4231, %v4244
        %v4246 = vcombine.low %v4238, %v4245
        %v4247 = vcombine.low %v4184, %v4188
        %v4248 = vcombine.low %v4192, %v4196
        %v4250 = vunpack.c.l.s4 1983009808
        %v4251 = vunpack.c.0.s8 %v4250
        %v4252 = vlaneseq
        %v4253 = vshrl.u32 %v4252, 7
        %v4254 = vsub.s32 %v4251, %v4253
        %v4255 = vrot.slane %v4247, %v4254
        %v4257 = vunpack.c.l.s4 1983009808
        %v4258 = vunpack.c.0.s8 %v4257
        %v4259 = vlaneseq
        %v4260 = vshrl.u32 %v4259, 7
        %v4261 = vsub.s32 %v4258, %v4260
        %v4262 = vrot.slane %v4248, %v4261
        %v4263 = vcombine.low %v4255, %v4262
        %v4264 = vcombine.low %v4200, %v4204
        %v4265 = vcombine.low %v4208, %v4212
        %v4267 = vunpack.c.l.s4 1983009808
        %v4268 = vunpack.c.0.s8 %v4267
        %v4269 = vlaneseq
        %v4270 = vshrl.u32 %v4269, 7
        %v4271 = vsub.s32 %v4268, %v4270
        %v4272 = vrot.slane %v4264, %v4271
        %v4274 = vunpack.c.l.s4 1983009808
        %v4275 = vunpack.c.0.s8 %v4274
        %v4276 = vlaneseq
        %v4277 = vshrl.u32 %v4276, 7
        %v4278 = vsub.s32 %v4275, %v4277
        %v4279 = vrot.slane %v4265, %v4278
        %v4280 = vcombine.low %v4272, %v4279
        %v4285 = vrot.slane %v4229, 7
        %v4286 = vrot.slane %v4246, 7
        %v4287 = vrot.slane %v4263, 7
        %v4288 = vrot.slane %v4280, 7
        %v4289 = vsel %vm615, %v4287, %v4288
        %v4290 = vsel %vm615, %v4286, %v4287
        %v4291 = vsel %vm615, %v4285, %v4286
        %v4292 = vsel %vm615, %v4288, %v4285
        %v4293 = vsel %vm599, 0.0, %v4292
        %v4294 = vsel %vm600, 0.0, %v4291
        %v4295 = vsel %vm601, 0.0, %v4290
        %v4296 = vsel %vm602, 0.0, %v4289
        %v4297 = vrot.slane %v4229, 1
        %v4298 = vrot.slane %v4246, 1
        %v4299 = vrot.slane %v4263, 1
        %v4300 = vrot.slane %v4280, 1
        %v4301 = vsel %vm648, %v4299, %v4300
        %v4302 = vsel %vm648, %v4298, %v4299
        %v4303 = vsel %vm648, %v4297, %v4298
        %v4304 = vsel %vm648, %v4300, %v4297
        %v4305 = vsel %vm1355, 0.0, %v4303
        %v4306 = vsel %vm1356, 0.0, %v4302
        %v4307 = vsel %vm1357, 0.0, %v4301
        %v4308 = vsel %vm1358, 0.0, %v4304
        %v4309 = vld [vmem:[%s13] sm:$0xf]
        %v4310 = vld [vmem:[%s13 + $0x4] sm:$0xf]
        %v4311 = vld [vmem:[%s13 + $0x8] sm:$0xf]
        %v4312 = vld [vmem:[%s13 + $0xc] sm:$0xf]
        %v4313 = vld [vmem:[%s13 + $0x10] sm:$0xf]
        %v4314 = vld [vmem:[%s13 + $0x14] sm:$0xf]
        %v4315 = vld [vmem:[%s13 + $0x18] sm:$0xf]
        %v4316 = vld [vmem:[%s13 + $0x1c] sm:$0xf]
        %s4317 = scalar_lea.vmem %s13, 32
        %v4318 = vld [vmem:[%s4317] sm:$0xf]
        %v4319 = vld [vmem:[%s4317 + $0x4] sm:$0xf]
        %v4320 = vld [vmem:[%s4317 + $0x8] sm:$0xf]
        %v4321 = vld [vmem:[%s4317 + $0xc] sm:$0xf]
        %v4322 = vld [vmem:[%s4317 + $0x10] sm:$0xf]
        %v4323 = vld [vmem:[%s4317 + $0x14] sm:$0xf]
        %v4324 = vld [vmem:[%s4317 + $0x18] sm:$0xf]
        %v4325 = vld [vmem:[%s4317 + $0x1c] sm:$0xf]
        %s4326 = scalar_lea.vmem %s13, 64
        %v4327 = vld [vmem:[%s4326] sm:$0xf]
        %v4328 = vld [vmem:[%s4326 + $0x4] sm:$0xf]
        %v4329 = vld [vmem:[%s4326 + $0x8] sm:$0xf]
        %v4330 = vld [vmem:[%s4326 + $0xc] sm:$0xf]
        %v4331 = vld [vmem:[%s4326 + $0x10] sm:$0xf]
        %v4332 = vld [vmem:[%s4326 + $0x14] sm:$0xf]
        %v4333 = vld [vmem:[%s4326 + $0x18] sm:$0xf]
        %v4334 = vld [vmem:[%s4326 + $0x1c] sm:$0xf]
        %v4335 = vpack.c.bf16 %v4294, %v4293
        %v4336 = vpack.c.bf16 %v4296, %v4295
        %v4337 = vpack.c.bf16 %v4246, %v4229
        %v4338 = vpack.c.bf16 %v4280, %v4263
        %v4347 = vunpack.c.l.b16 %v4318
        %v4348 = vunpack.c.l.b16 %v4319
        %v4349 = vunpack.c.l.b16 %v4320
        %v4350 = vunpack.c.l.b16 %v4321
        %v4351 = vunpack.c.l.b16 %v4322
        %v4352 = vunpack.c.l.b16 %v4323
        %v4353 = vunpack.c.l.b16 %v4324
        %v4354 = vunpack.c.l.b16 %v4325
        %v4355 = vpack.c.b16 %v4348, %v4347
        %v4356 = vpack.c.b16 %v4350, %v4349
        %v4357 = vpack.c.b16 %v4352, %v4351
        %v4358 = vpack.c.b16 %v4354, %v4353
        %v4364 = vsel %vm2097, %v4337, 0
        %v4367 = vsel %vm2097, %v4338, 0
        %4369 = vmatprep.subr.bf16.mxu0 0
        %4370 = vmatpush1.bf16.msra.mxu0 %v4355
        %4371 = vmatprep.subr.bf16.mxu0 0
        %4372 = vmatpush1.bf16.msra.mxu0 %v4356
        %4373 = vmatprep.subr.bf16.mxu0 0
        %4374 = vmatpush1.bf16.msra.mxu0 %v4357
        %4375 = vmatprep.subr.bf16.mxu0 0
        %4376 = vmatpush1.bf16.msra.mxu0 %v4358
        %4377 = vmatprep.subr.bf16.mxu0 0
        %4378 = vmatpush1.bf16.msra.mxu0 0
        %4379 = vmatprep.subr.bf16.mxu0 0
        %4380 = vmatpush1.bf16.msra.mxu0 0
        %4381 = vmatprep.subr.bf16.mxu0 0
        %4382 = vmatpush1.bf16.msra.mxu0 0
        %4383 = vmatprep.subr.bf16.mxu0 0
        %4384 = vmatpush1.bf16.msra.mxu0 0
        %4385 = vmatprep.subr.bf16.mxu0 0
        %4386 = vmatpush1.bf16.msra.mxu0 0
        %4387 = vmatprep.subr.bf16.mxu0 0
        %4388 = vmatpush1.bf16.msra.mxu0 0
        %4389 = vmatprep.subr.bf16.mxu0 0
        %4390 = vmatpush1.bf16.msra.mxu0 0
        %4391 = vmatprep.subr.bf16.mxu0 0
        %4392 = vmatpush1.bf16.msra.mxu0 0
        %4393 = vmatprep.subr.bf16.mxu0 0
        %4394 = vmatpush1.bf16.msra.mxu0 0
        %4395 = vmatprep.subr.bf16.mxu0 0
        %4396 = vmatpush1.bf16.msra.mxu0 0
        %4397 = vmatprep.subr.bf16.mxu0 0
        %4398 = vmatpush1.bf16.msra.mxu0 0
        %4399 = vmatprep.subr.bf16.mxu0 0
        %4400 = vmatpush1.bf16.msra.mxu0 0
        %4401 = vmatprep.mubr.bf16.mxu0 0
        %4402 = vmatmul.mubr.bf16.gmra.mrb[0].mxu0 %v4364
        %v4403 = vpop.f32.mrb[0].mxu0
        %v4404 = vadd.f32 0.0, %v4403
        %v4405 = vpop.f32.mrb[0].mxu0
        %v4406 = vpop.f32.mrb[0].mxu0
        %v4407 = vadd.f32 0.0, %v4406
        %v4408 = vpop.f32.mrb[0].mxu0
        %4409 = vmatprep.mubr.bf16.mxu0 0
        %4410 = vmatmul.mubr.bf16.gmra.mrb[0].mxu0 %v4367
        %v4411 = vpop.f32.mrb[0].mxu0
        %v4412 = vadd.f32 0.0, %v4411
        %v4413 = vpop.f32.mrb[0].mxu0
        %v4414 = vpop.f32.mrb[0].mxu0
        %v4415 = vadd.f32 0.0, %v4414
        %v4416 = vpop.f32.mrb[0].mxu0
        %4417 = vdwg.mxu0
        %v4426 = vunpack.c.l.b16 %v4309
        %v4427 = vunpack.c.l.b16 %v4310
        %v4428 = vunpack.c.l.b16 %v4311
        %v4429 = vunpack.c.l.b16 %v4312
        %v4430 = vunpack.c.l.b16 %v4313
        %v4431 = vunpack.c.l.b16 %v4314
        %v4432 = vunpack.c.l.b16 %v4315
        %v4433 = vunpack.c.l.b16 %v4316
        %v4434 = vpack.c.b16 %v4427, %v4426
        %v4435 = vpack.c.b16 %v4429, %v4428
        %v4436 = vpack.c.b16 %v4431, %v4430
        %v4437 = vpack.c.b16 %v4433, %v4432
        %v4443 = vsel %vm2097, %v4335, 0
        %v4446 = vsel %vm2097, %v4336, 0
        %4448 = vmatprep.subr.bf16.mxu0 0
        %4449 = vmatpush1.bf16.msra.mxu0 %v4434
        %4450 = vmatprep.subr.bf16.mxu0 0
        %4451 = vmatpush1.bf16.msra.mxu0 %v4435
        %4452 = vmatprep.subr.bf16.mxu0 0
        %4453 = vmatpush1.bf16.msra.mxu0 %v4436
        %4454 = vmatprep.subr.bf16.mxu0 0
        %4455 = vmatpush1.bf16.msra.mxu0 %v4437
        %4456 = vmatprep.subr.bf16.mxu0 0
        %4457 = vmatpush1.bf16.msra.mxu0 0
        %4458 = vmatprep.subr.bf16.mxu0 0
        %4459 = vmatpush1.bf16.msra.mxu0 0
        %4460 = vmatprep.subr.bf16.mxu0 0
        %4461 = vmatpush1.bf16.msra.mxu0 0
        %4462 = vmatprep.subr.bf16.mxu0 0
        %4463 = vmatpush1.bf16.msra.mxu0 0
        %4464 = vmatprep.subr.bf16.mxu0 0
        %4465 = vmatpush1.bf16.msra.mxu0 0
        %4466 = vmatprep.subr.bf16.mxu0 0
        %4467 = vmatpush1.bf16.msra.mxu0 0
        %4468 = vmatprep.subr.bf16.mxu0 0
        %4469 = vmatpush1.bf16.msra.mxu0 0
        %4470 = vmatprep.subr.bf16.mxu0 0
        %4471 = vmatpush1.bf16.msra.mxu0 0
        %4472 = vmatprep.subr.bf16.mxu0 0
        %4473 = vmatpush1.bf16.msra.mxu0 0
        %4474 = vmatprep.subr.bf16.mxu0 0
        %4475 = vmatpush1.bf16.msra.mxu0 0
        %4476 = vmatprep.subr.bf16.mxu0 0
        %4477 = vmatpush1.bf16.msra.mxu0 0
        %4478 = vmatprep.subr.bf16.mxu0 0
        %4479 = vmatpush1.bf16.msra.mxu0 0
        %4480 = vmatprep.mubr.bf16.mxu0 0
        %4481 = vmatmul.mubr.bf16.gmra.mrb[0].mxu0 %v4443
        %v4482 = vpop.f32.mrb[0].mxu0
        %v4483 = vadd.f32 %v4404, %v4482
        %v4484 = vpop.f32.mrb[0].mxu0
        %v4485 = vpop.f32.mrb[0].mxu0
        %v4486 = vadd.f32 %v4407, %v4485
        %v4487 = vpop.f32.mrb[0].mxu0
        %4488 = vmatprep.mubr.bf16.mxu0 0
        %4489 = vmatmul.mubr.bf16.gmra.mrb[0].mxu0 %v4446
        %v4490 = vpop.f32.mrb[0].mxu0
        %v4491 = vadd.f32 %v4412, %v4490
        %v4492 = vpop.f32.mrb[0].mxu0
        %v4493 = vpop.f32.mrb[0].mxu0
        %v4494 = vadd.f32 %v4415, %v4493
        %v4495 = vpop.f32.mrb[0].mxu0
        %4496 = vdwg.mxu0
        %v4497 = vpack.c.bf16 %v4306, %v4305
        %v4498 = vpack.c.bf16 %v4308, %v4307
        %v4507 = vunpack.c.l.b16 %v4327
        %v4508 = vunpack.c.l.b16 %v4328
        %v4509 = vunpack.c.l.b16 %v4329
        %v4510 = vunpack.c.l.b16 %v4330
        %v4511 = vunpack.c.l.b16 %v4331
        %v4512 = vunpack.c.l.b16 %v4332
        %v4513 = vunpack.c.l.b16 %v4333
        %v4514 = vunpack.c.l.b16 %v4334
        %v4515 = vpack.c.b16 %v4508, %v4507
        %v4516 = vpack.c.b16 %v4510, %v4509
        %v4517 = vpack.c.b16 %v4512, %v4511
        %v4518 = vpack.c.b16 %v4514, %v4513
        %v4524 = vsel %vm2097, %v4497, 0
        %v4527 = vsel %vm2097, %v4498, 0
        %4529 = vmatprep.subr.bf16.mxu0 0
        %4530 = vmatpush1.bf16.msra.mxu0 %v4515
        %4531 = vmatprep.subr.bf16.mxu0 0
        %4532 = vmatpush1.bf16.msra.mxu0 %v4516
        %4533 = vmatprep.subr.bf16.mxu0 0
        %4534 = vmatpush1.bf16.msra.mxu0 %v4517
        %4535 = vmatprep.subr.bf16.mxu0 0
        %4536 = vmatpush1.bf16.msra.mxu0 %v4518
        %4537 = vmatprep.subr.bf16.mxu0 0
        %4538 = vmatpush1.bf16.msra.mxu0 0
        %4539 = vmatprep.subr.bf16.mxu0 0
        %4540 = vmatpush1.bf16.msra.mxu0 0
        %4541 = vmatprep.subr.bf16.mxu0 0
        %4542 = vmatpush1.bf16.msra.mxu0 0
        %4543 = vmatprep.subr.bf16.mxu0 0
        %4544 = vmatpush1.bf16.msra.mxu0 0
        %4545 = vmatprep.subr.bf16.mxu0 0
        %4546 = vmatpush1.bf16.msra.mxu0 0
        %4547 = vmatprep.subr.bf16.mxu0 0
        %4548 = vmatpush1.bf16.msra.mxu0 0
        %4549 = vmatprep.subr.bf16.mxu0 0
        %4550 = vmatpush1.bf16.msra.mxu0 0
        %4551 = vmatprep.subr.bf16.mxu0 0
        %4552 = vmatpush1.bf16.msra.mxu0 0
        %4553 = vmatprep.subr.bf16.mxu0 0
        %4554 = vmatpush1.bf16.msra.mxu0 0
        %4555 = vmatprep.subr.bf16.mxu0 0
        %4556 = vmatpush1.bf16.msra.mxu0 0
        %4557 = vmatprep.subr.bf16.mxu0 0
        %4558 = vmatpush1.bf16.msra.mxu0 0
        %4559 = vmatprep.subr.bf16.mxu0 0
        %4560 = vmatpush1.bf16.msra.mxu0 0
        %4561 = vmatprep.mubr.bf16.mxu0 0
        %4562 = vmatmul.mubr.bf16.gmra.mrb[0].mxu0 %v4524
        %v4563 = vpop.f32.mrb[0].mxu0
        %v4564 = vadd.f32 0.0, %v4563
        %v4565 = vpop.f32.mrb[0].mxu0
        %v4566 = vpop.f32.mrb[0].mxu0
        %v4567 = vadd.f32 0.0, %v4566
        %v4568 = vpop.f32.mrb[0].mxu0
        %4569 = vmatprep.mubr.bf16.mxu0 0
        %4570 = vmatmul.mubr.bf16.gmra.mrb[0].mxu0 %v4527
        %v4571 = vpop.f32.mrb[0].mxu0
        %v4572 = vadd.f32 0.0, %v4571
        %v4573 = vpop.f32.mrb[0].mxu0
        %v4574 = vpop.f32.mrb[0].mxu0
        %v4575 = vadd.f32 0.0, %v4574
        %v4576 = vpop.f32.mrb[0].mxu0
        %4577 = vdwg.mxu0
        %v4578 = vadd.f32 %v4483, %v4564
        %v4579 = vadd.f32 %v4486, %v4567
        %v4580 = vadd.f32 %v4491, %v4572
        %v4581 = vadd.f32 %v4494, %v4575
        %v4582 = vld [vmem:[%s14] sm:$0x1]
        %v4584 = vlaneseq
        %v4585 = vshrl.u32 %v4584, 7
        %v4586 = vsub.s32 0, %v4585
        %v4587 = vrot.slane %v4582, %v4586
        %v4589 = vadd.f32 %v4578, %v4587
        %v4590 = vadd.f32 %v4579, %v4587
        %v4591 = vadd.f32 %v4580, %v4587
        %v4592 = vadd.f32 %v4581, %v4587
        %v4593 = vmax.f32 %v4589, 0.0
        %v4594 = vmax.f32 %v4590, 0.0
        %v4595 = vmax.f32 %v4591, 0.0
        %v4596 = vmax.f32 %v4592, 0.0
        %v4601 = vcombine.high %v4593, %v4593
        %v4603 = vunpack.c.l.s4 1966171168
        %v4604 = vunpack.c.0.s8 %v4603
        %v4605 = vlaneseq
        %v4606 = vshrl.u32 %v4605, 7
        %v4607 = vsub.s32 %v4604, %v4606
        %v4608 = vrot.slane %v4593, %v4607
        %v4610 = vunpack.c.l.s4 1966171168
        %v4611 = vunpack.c.0.s8 %v4610
        %v4612 = vlaneseq
        %v4613 = vshrl.u32 %v4612, 7
        %v4614 = vsub.s32 %v4611, %v4613
        %v4615 = vrot.slane %v4601, %v4614
        %v4616 = vcombine.high %v4608, %v4608
        %v4617 = vcombine.high %v4615, %v4615
        %v4619 = vunpack.c.l.s4 1966171168
        %v4620 = vunpack.c.0.s8 %v4619
        %v4621 = vlaneseq
        %v4622 = vshrl.u32 %v4621, 7
        %v4623 = vsub.s32 %v4620, %v4622
        %v4624 = vrot.slane %v4608, %v4623
        %v4626 = vunpack.c.l.s4 1966171168
        %v4627 = vunpack.c.0.s8 %v4626
        %v4628 = vlaneseq
        %v4629 = vshrl.u32 %v4628, 7
        %v4630 = vsub.s32 %v4627, %v4629
        %v4631 = vrot.slane %v4615, %v4630
        %v4633 = vunpack.c.l.s4 1966171168
        %v4634 = vunpack.c.0.s8 %v4633
        %v4635 = vlaneseq
        %v4636 = vshrl.u32 %v4635, 7
        %v4637 = vsub.s32 %v4634, %v4636
        %v4638 = vrot.slane %v4616, %v4637
        %v4640 = vunpack.c.l.s4 1966171168
        %v4641 = vunpack.c.0.s8 %v4640
        %v4642 = vlaneseq
        %v4643 = vshrl.u32 %v4642, 7
        %v4644 = vsub.s32 %v4641, %v4643
        %v4645 = vrot.slane %v4617, %v4644
        %v4646 = vcombine.high %v4624, %v4624
        %v4647 = vcombine.high %v4631, %v4631
        %v4648 = vcombine.high %v4638, %v4638
        %v4649 = vcombine.high %v4645, %v4645
        %v4650 = vcombine.high %v4594, %v4594
        %v4652 = vunpack.c.l.s4 1966171168
        %v4653 = vunpack.c.0.s8 %v4652
        %v4654 = vlaneseq
        %v4655 = vshrl.u32 %v4654, 7
        %v4656 = vsub.s32 %v4653, %v4655
        %v4657 = vrot.slane %v4594, %v4656
        %v4659 = vunpack.c.l.s4 1966171168
        %v4660 = vunpack.c.0.s8 %v4659
        %v4661 = vlaneseq
        %v4662 = vshrl.u32 %v4661, 7
        %v4663 = vsub.s32 %v4660, %v4662
        %v4664 = vrot.slane %v4650, %v4663
        %v4665 = vcombine.high %v4657, %v4657
        %v4666 = vcombine.high %v4664, %v4664
        %v4668 = vunpack.c.l.s4 1966171168
        %v4669 = vunpack.c.0.s8 %v4668
        %v4670 = vlaneseq
        %v4671 = vshrl.u32 %v4670, 7
        %v4672 = vsub.s32 %v4669, %v4671
        %v4673 = vrot.slane %v4657, %v4672
        %v4675 = vunpack.c.l.s4 1966171168
        %v4676 = vunpack.c.0.s8 %v4675
        %v4677 = vlaneseq
        %v4678 = vshrl.u32 %v4677, 7
        %v4679 = vsub.s32 %v4676, %v4678
        %v4680 = vrot.slane %v4664, %v4679
        %v4682 = vunpack.c.l.s4 1966171168
        %v4683 = vunpack.c.0.s8 %v4682
        %v4684 = vlaneseq
        %v4685 = vshrl.u32 %v4684, 7
        %v4686 = vsub.s32 %v4683, %v4685
        %v4687 = vrot.slane %v4665, %v4686
        %v4689 = vunpack.c.l.s4 1966171168
        %v4690 = vunpack.c.0.s8 %v4689
        %v4691 = vlaneseq
        %v4692 = vshrl.u32 %v4691, 7
        %v4693 = vsub.s32 %v4690, %v4692
        %v4694 = vrot.slane %v4666, %v4693
        %v4695 = vcombine.high %v4673, %v4673
        %v4696 = vcombine.high %v4680, %v4680
        %v4697 = vcombine.high %v4687, %v4687
        %v4698 = vcombine.high %v4694, %v4694
        %v4699 = vcombine.high %v4595, %v4595
        %v4701 = vunpack.c.l.s4 1966171168
        %v4702 = vunpack.c.0.s8 %v4701
        %v4703 = vlaneseq
        %v4704 = vshrl.u32 %v4703, 7
        %v4705 = vsub.s32 %v4702, %v4704
        %v4706 = vrot.slane %v4595, %v4705
        %v4708 = vunpack.c.l.s4 1966171168
        %v4709 = vunpack.c.0.s8 %v4708
        %v4710 = vlaneseq
        %v4711 = vshrl.u32 %v4710, 7
        %v4712 = vsub.s32 %v4709, %v4711
        %v4713 = vrot.slane %v4699, %v4712
        %v4714 = vcombine.high %v4706, %v4706
        %v4715 = vcombine.high %v4713, %v4713
        %v4717 = vunpack.c.l.s4 1966171168
        %v4718 = vunpack.c.0.s8 %v4717
        %v4719 = vlaneseq
        %v4720 = vshrl.u32 %v4719, 7
        %v4721 = vsub.s32 %v4718, %v4720
        %v4722 = vrot.slane %v4706, %v4721
        %v4724 = vunpack.c.l.s4 1966171168
        %v4725 = vunpack.c.0.s8 %v4724
        %v4726 = vlaneseq
        %v4727 = vshrl.u32 %v4726, 7
        %v4728 = vsub.s32 %v4725, %v4727
        %v4729 = vrot.slane %v4713, %v4728
        %v4731 = vunpack.c.l.s4 1966171168
        %v4732 = vunpack.c.0.s8 %v4731
        %v4733 = vlaneseq
        %v4734 = vshrl.u32 %v4733, 7
        %v4735 = vsub.s32 %v4732, %v4734
        %v4736 = vrot.slane %v4714, %v4735
        %v4738 = vunpack.c.l.s4 1966171168
        %v4739 = vunpack.c.0.s8 %v4738
        %v4740 = vlaneseq
        %v4741 = vshrl.u32 %v4740, 7
        %v4742 = vsub.s32 %v4739, %v4741
        %v4743 = vrot.slane %v4715, %v4742
        %v4744 = vcombine.high %v4722, %v4722
        %v4745 = vcombine.high %v4729, %v4729
        %v4746 = vcombine.high %v4736, %v4736
        %v4747 = vcombine.high %v4743, %v4743
        %v4748 = vcombine.high %v4596, %v4596
        %v4750 = vunpack.c.l.s4 1966171168
        %v4751 = vunpack.c.0.s8 %v4750
        %v4752 = vlaneseq
        %v4753 = vshrl.u32 %v4752, 7
        %v4754 = vsub.s32 %v4751, %v4753
        %v4755 = vrot.slane %v4596, %v4754
        %v4757 = vunpack.c.l.s4 1966171168
        %v4758 = vunpack.c.0.s8 %v4757
        %v4759 = vlaneseq
        %v4760 = vshrl.u32 %v4759, 7
        %v4761 = vsub.s32 %v4758, %v4760
        %v4762 = vrot.slane %v4748, %v4761
        %v4763 = vcombine.high %v4755, %v4755
        %v4764 = vcombine.high %v4762, %v4762
        %v4766 = vunpack.c.l.s4 1966171168
        %v4767 = vunpack.c.0.s8 %v4766
        %v4768 = vlaneseq
        %v4769 = vshrl.u32 %v4768, 7
        %v4770 = vsub.s32 %v4767, %v4769
        %v4771 = vrot.slane %v4755, %v4770
        %v4773 = vunpack.c.l.s4 1966171168
        %v4774 = vunpack.c.0.s8 %v4773
        %v4775 = vlaneseq
        %v4776 = vshrl.u32 %v4775, 7
        %v4777 = vsub.s32 %v4774, %v4776
        %v4778 = vrot.slane %v4762, %v4777
        %v4780 = vunpack.c.l.s4 1966171168
        %v4781 = vunpack.c.0.s8 %v4780
        %v4782 = vlaneseq
        %v4783 = vshrl.u32 %v4782, 7
        %v4784 = vsub.s32 %v4781, %v4783
        %v4785 = vrot.slane %v4763, %v4784
        %v4787 = vunpack.c.l.s4 1966171168
        %v4788 = vunpack.c.0.s8 %v4787
        %v4789 = vlaneseq
        %v4790 = vshrl.u32 %v4789, 7
        %v4791 = vsub.s32 %v4788, %v4790
        %v4792 = vrot.slane %v4764, %v4791
        %v4793 = vcombine.high %v4771, %v4771
        %v4794 = vcombine.high %v4778, %v4778
        %v4795 = vcombine.high %v4785, %v4785
        %v4796 = vcombine.high %v4792, %v4792
        %v4797 = vlaneseq
        %v4798 = vshrl.u32 %v4797, 7
        %v4799 = vsub.s32 0, %v4798
        %v4800 = vrot.slane %v4624, %v4799
        %v4801 = vlaneseq
        %v4802 = vshrl.u32 %v4801, 7
        %v4803 = vsub.s32 0, %v4802
        %v4804 = vrot.slane %v4638, %v4803
        %v4805 = vlaneseq
        %v4806 = vshrl.u32 %v4805, 7
        %v4807 = vsub.s32 0, %v4806
        %v4808 = vrot.slane %v4646, %v4807
        %v4809 = vlaneseq
        %v4810 = vshrl.u32 %v4809, 7
        %v4811 = vsub.s32 0, %v4810
        %v4812 = vrot.slane %v4648, %v4811
        %v4813 = vlaneseq
        %v4814 = vshrl.u32 %v4813, 7
        %v4815 = vsub.s32 0, %v4814
        %v4816 = vrot.slane %v4631, %v4815
        %v4817 = vlaneseq
        %v4818 = vshrl.u32 %v4817, 7
        %v4819 = vsub.s32 0, %v4818
        %v4820 = vrot.slane %v4645, %v4819
        %v4821 = vlaneseq
        %v4822 = vshrl.u32 %v4821, 7
        %v4823 = vsub.s32 0, %v4822
        %v4824 = vrot.slane %v4647, %v4823
        %v4825 = vlaneseq
        %v4826 = vshrl.u32 %v4825, 7
        %v4827 = vsub.s32 0, %v4826
        %v4828 = vrot.slane %v4649, %v4827
        %v4829 = vlaneseq
        %v4830 = vshrl.u32 %v4829, 7
        %v4831 = vsub.s32 0, %v4830
        %v4832 = vrot.slane %v4673, %v4831
        %v4833 = vlaneseq
        %v4834 = vshrl.u32 %v4833, 7
        %v4835 = vsub.s32 0, %v4834
        %v4836 = vrot.slane %v4687, %v4835
        %v4837 = vlaneseq
        %v4838 = vshrl.u32 %v4837, 7
        %v4839 = vsub.s32 0, %v4838
        %v4840 = vrot.slane %v4695, %v4839
        %v4841 = vlaneseq
        %v4842 = vshrl.u32 %v4841, 7
        %v4843 = vsub.s32 0, %v4842
        %v4844 = vrot.slane %v4697, %v4843
        %v4845 = vlaneseq
        %v4846 = vshrl.u32 %v4845, 7
        %v4847 = vsub.s32 0, %v4846
        %v4848 = vrot.slane %v4680, %v4847
        %v4849 = vlaneseq
        %v4850 = vshrl.u32 %v4849, 7
        %v4851 = vsub.s32 0, %v4850
        %v4852 = vrot.slane %v4694, %v4851
        %v4853 = vlaneseq
        %v4854 = vshrl.u32 %v4853, 7
        %v4855 = vsub.s32 0, %v4854
        %v4856 = vrot.slane %v4696, %v4855
        %v4857 = vlaneseq
        %v4858 = vshrl.u32 %v4857, 7
        %v4859 = vsub.s32 0, %v4858
        %v4860 = vrot.slane %v4698, %v4859
        %v4861 = vlaneseq
        %v4862 = vshrl.u32 %v4861, 7
        %v4863 = vsub.s32 0, %v4862
        %v4864 = vrot.slane %v4722, %v4863
        %v4865 = vlaneseq
        %v4866 = vshrl.u32 %v4865, 7
        %v4867 = vsub.s32 0, %v4866
        %v4868 = vrot.slane %v4736, %v4867
        %v4869 = vlaneseq
        %v4870 = vshrl.u32 %v4869, 7
        %v4871 = vsub.s32 0, %v4870
        %v4872 = vrot.slane %v4744, %v4871
        %v4873 = vlaneseq
        %v4874 = vshrl.u32 %v4873, 7
        %v4875 = vsub.s32 0, %v4874
        %v4876 = vrot.slane %v4746, %v4875
        %v4877 = vlaneseq
        %v4878 = vshrl.u32 %v4877, 7
        %v4879 = vsub.s32 0, %v4878
        %v4880 = vrot.slane %v4729, %v4879
        %v4881 = vlaneseq
        %v4882 = vshrl.u32 %v4881, 7
        %v4883 = vsub.s32 0, %v4882
        %v4884 = vrot.slane %v4743, %v4883
        %v4885 = vlaneseq
        %v4886 = vshrl.u32 %v4885, 7
        %v4887 = vsub.s32 0, %v4886
        %v4888 = vrot.slane %v4745, %v4887
        %v4889 = vlaneseq
        %v4890 = vshrl.u32 %v4889, 7
        %v4891 = vsub.s32 0, %v4890
        %v4892 = vrot.slane %v4747, %v4891
        %v4893 = vlaneseq
        %v4894 = vshrl.u32 %v4893, 7
        %v4895 = vsub.s32 0, %v4894
        %v4896 = vrot.slane %v4771, %v4895
        %v4897 = vlaneseq
        %v4898 = vshrl.u32 %v4897, 7
        %v4899 = vsub.s32 0, %v4898
        %v4900 = vrot.slane %v4785, %v4899
        %v4901 = vlaneseq
        %v4902 = vshrl.u32 %v4901, 7
        %v4903 = vsub.s32 0, %v4902
        %v4904 = vrot.slane %v4793, %v4903
        %v4905 = vlaneseq
        %v4906 = vshrl.u32 %v4905, 7
        %v4907 = vsub.s32 0, %v4906
        %v4908 = vrot.slane %v4795, %v4907
        %v4909 = vlaneseq
        %v4910 = vshrl.u32 %v4909, 7
        %v4911 = vsub.s32 0, %v4910
        %v4912 = vrot.slane %v4778, %v4911
        %v4913 = vlaneseq
        %v4914 = vshrl.u32 %v4913, 7
        %v4915 = vsub.s32 0, %v4914
        %v4916 = vrot.slane %v4792, %v4915
        %v4917 = vlaneseq
        %v4918 = vshrl.u32 %v4917, 7
        %v4919 = vsub.s32 0, %v4918
        %v4920 = vrot.slane %v4794, %v4919
        %v4921 = vlaneseq
        %v4922 = vshrl.u32 %v4921, 7
        %v4923 = vsub.s32 0, %v4922
        %v4924 = vrot.slane %v4796, %v4923
        %v4957 = vcombine.low %v4800, %v4804
        %v4958 = vcombine.low %v4808, %v4812
        %v4960 = vunpack.c.l.s4 1983009808
        %v4961 = vunpack.c.0.s8 %v4960
        %v4962 = vlaneseq
        %v4963 = vshrl.u32 %v4962, 7
        %v4964 = vsub.s32 %v4961, %v4963
        %v4965 = vrot.slane %v4957, %v4964
        %v4967 = vunpack.c.l.s4 1983009808
        %v4968 = vunpack.c.0.s8 %v4967
        %v4969 = vlaneseq
        %v4970 = vshrl.u32 %v4969, 7
        %v4971 = vsub.s32 %v4968, %v4970
        %v4972 = vrot.slane %v4958, %v4971
        %v4973 = vcombine.low %v4965, %v4972
        %v4974 = vcombine.low %v4816, %v4820
        %v4975 = vcombine.low %v4824, %v4828
        %v4977 = vunpack.c.l.s4 1983009808
        %v4978 = vunpack.c.0.s8 %v4977
        %v4979 = vlaneseq
        %v4980 = vshrl.u32 %v4979, 7
        %v4981 = vsub.s32 %v4978, %v4980
        %v4982 = vrot.slane %v4974, %v4981
        %v4984 = vunpack.c.l.s4 1983009808
        %v4985 = vunpack.c.0.s8 %v4984
        %v4986 = vlaneseq
        %v4987 = vshrl.u32 %v4986, 7
        %v4988 = vsub.s32 %v4985, %v4987
        %v4989 = vrot.slane %v4975, %v4988
        %v4990 = vcombine.low %v4982, %v4989
        %v4991 = vcombine.low %v4832, %v4836
        %v4992 = vcombine.low %v4840, %v4844
        %v4994 = vunpack.c.l.s4 1983009808
        %v4995 = vunpack.c.0.s8 %v4994
        %v4996 = vlaneseq
        %v4997 = vshrl.u32 %v4996, 7
        %v4998 = vsub.s32 %v4995, %v4997
        %v4999 = vrot.slane %v4991, %v4998
        %v5001 = vunpack.c.l.s4 1983009808
        %v5002 = vunpack.c.0.s8 %v5001
        %v5003 = vlaneseq
        %v5004 = vshrl.u32 %v5003, 7
        %v5005 = vsub.s32 %v5002, %v5004
        %v5006 = vrot.slane %v4992, %v5005
        %v5007 = vcombine.low %v4999, %v5006
        %v5008 = vcombine.low %v4848, %v4852
        %v5009 = vcombine.low %v4856, %v4860
        %v5011 = vunpack.c.l.s4 1983009808
        %v5012 = vunpack.c.0.s8 %v5011
        %v5013 = vlaneseq
        %v5014 = vshrl.u32 %v5013, 7
        %v5015 = vsub.s32 %v5012, %v5014
        %v5016 = vrot.slane %v5008, %v5015
        %v5018 = vunpack.c.l.s4 1983009808
        %v5019 = vunpack.c.0.s8 %v5018
        %v5020 = vlaneseq
        %v5021 = vshrl.u32 %v5020, 7
        %v5022 = vsub.s32 %v5019, %v5021
        %v5023 = vrot.slane %v5009, %v5022
        %v5024 = vcombine.low %v5016, %v5023
        %v5025 = vcombine.low %v4864, %v4868
        %v5026 = vcombine.low %v4872, %v4876
        %v5028 = vunpack.c.l.s4 1983009808
        %v5029 = vunpack.c.0.s8 %v5028
        %v5030 = vlaneseq
        %v5031 = vshrl.u32 %v5030, 7
        %v5032 = vsub.s32 %v5029, %v5031
        %v5033 = vrot.slane %v5025, %v5032
        %v5035 = vunpack.c.l.s4 1983009808
        %v5036 = vunpack.c.0.s8 %v5035
        %v5037 = vlaneseq
        %v5038 = vshrl.u32 %v5037, 7
        %v5039 = vsub.s32 %v5036, %v5038
        %v5040 = vrot.slane %v5026, %v5039
        %v5041 = vcombine.low %v5033, %v5040
        %v5042 = vcombine.low %v4880, %v4884
        %v5043 = vcombine.low %v4888, %v4892
        %v5045 = vunpack.c.l.s4 1983009808
        %v5046 = vunpack.c.0.s8 %v5045
        %v5047 = vlaneseq
        %v5048 = vshrl.u32 %v5047, 7
        %v5049 = vsub.s32 %v5046, %v5048
        %v5050 = vrot.slane %v5042, %v5049
        %v5052 = vunpack.c.l.s4 1983009808
        %v5053 = vunpack.c.0.s8 %v5052
        %v5054 = vlaneseq
        %v5055 = vshrl.u32 %v5054, 7
        %v5056 = vsub.s32 %v5053, %v5055
        %v5057 = vrot.slane %v5043, %v5056
        %v5058 = vcombine.low %v5050, %v5057
        %v5059 = vcombine.low %v4896, %v4900
        %v5060 = vcombine.low %v4904, %v4908
        %v5062 = vunpack.c.l.s4 1983009808
        %v5063 = vunpack.c.0.s8 %v5062
        %v5064 = vlaneseq
        %v5065 = vshrl.u32 %v5064, 7
        %v5066 = vsub.s32 %v5063, %v5065
        %v5067 = vrot.slane %v5059, %v5066
        %v5069 = vunpack.c.l.s4 1983009808
        %v5070 = vunpack.c.0.s8 %v5069
        %v5071 = vlaneseq
        %v5072 = vshrl.u32 %v5071, 7
        %v5073 = vsub.s32 %v5070, %v5072
        %v5074 = vrot.slane %v5060, %v5073
        %v5075 = vcombine.low %v5067, %v5074
        %v5076 = vcombine.low %v4912, %v4916
        %v5077 = vcombine.low %v4920, %v4924
        %v5079 = vunpack.c.l.s4 1983009808
        %v5080 = vunpack.c.0.s8 %v5079
        %v5081 = vlaneseq
        %v5082 = vshrl.u32 %v5081, 7
        %v5083 = vsub.s32 %v5080, %v5082
        %v5084 = vrot.slane %v5076, %v5083
        %v5086 = vunpack.c.l.s4 1983009808
        %v5087 = vunpack.c.0.s8 %v5086
        %v5088 = vlaneseq
        %v5089 = vshrl.u32 %v5088, 7
        %v5090 = vsub.s32 %v5087, %v5089
        %v5091 = vrot.slane %v5077, %v5090
        %v5092 = vcombine.low %v5084, %v5091
        %v5101 = vrot.slane %v4973, 7
        %v5102 = vrot.slane %v4990, 7
        %v5103 = vrot.slane %v5007, 7
        %v5104 = vrot.slane %v5024, 7
        %v5105 = vrot.slane %v5041, 7
        %v5106 = vrot.slane %v5058, 7
        %v5107 = vrot.slane %v5075, 7
        %v5108 = vrot.slane %v5092, 7
        %v5109 = vsel %vm615, %v5107, %v5108
        %v5110 = vsel %vm615, %v5106, %v5107
        %v5111 = vsel %vm615, %v5105, %v5106
        %v5112 = vsel %vm615, %v5104, %v5105
        %v5113 = vsel %vm615, %v5103, %v5104
        %v5114 = vsel %vm615, %v5102, %v5103
        %v5115 = vsel %vm615, %v5101, %v5102
        %v5116 = vsel %vm615, %v5108, %v5101
        %v5117 = vsel %vm599, 0.0, %v5116
        %v5118 = vsel %vm600, 0.0, %v5115
        %v5119 = vsel %vm601, 0.0, %v5114
        %v5120 = vsel %vm602, 0.0, %v5113
        %v5121 = vsel %vm603, 0.0, %v5112
        %v5122 = vsel %vm604, 0.0, %v5111
        %v5123 = vsel %vm605, 0.0, %v5110
        %v5124 = vsel %vm606, 0.0, %v5109
        %v5125 = vrot.slane %v4973, 1
        %v5126 = vrot.slane %v4990, 1
        %v5127 = vrot.slane %v5007, 1
        %v5128 = vrot.slane %v5024, 1
        %v5129 = vrot.slane %v5041, 1
        %v5130 = vrot.slane %v5058, 1
        %v5131 = vrot.slane %v5075, 1
        %v5132 = vrot.slane %v5092, 1
        %v5133 = vsel %vm648, %v5131, %v5132
        %v5134 = vsel %vm648, %v5130, %v5131
        %v5135 = vsel %vm648, %v5129, %v5130
        %v5136 = vsel %vm648, %v5128, %v5129
        %v5137 = vsel %vm648, %v5127, %v5128
        %v5138 = vsel %vm648, %v5126, %v5127
        %v5139 = vsel %vm648, %v5125, %v5126
        %v5140 = vsel %vm648, %v5132, %v5125
        %v5141 = vsel %vm632, 0.0, %v5139
        %v5142 = vsel %vm633, 0.0, %v5138
        %v5143 = vsel %vm634, 0.0, %v5137
        %v5144 = vsel %vm635, 0.0, %v5136
        %v5145 = vsel %vm636, 0.0, %v5135
        %v5146 = vsel %vm637, 0.0, %v5134
        %v5147 = vsel %vm638, 0.0, %v5133
        %v5148 = vsel %vm639, 0.0, %v5140
        %v5149 = vld [vmem:[%s15] sm:$0x1]
        %v5151 = vlaneseq
        %v5152 = vshrl.u32 %v5151, 7
        %v5153 = vsub.s32 0, %v5152
        %v5154 = vrot.slane %v5149, %v5153
        %v5156 = vmul.f32 %v5117, %v5154
        %v5157 = vmul.f32 %v5118, %v5154
        %v5158 = vmul.f32 %v5119, %v5154
        %v5159 = vmul.f32 %v5120, %v5154
        %v5160 = vmul.f32 %v5121, %v5154
        %v5161 = vmul.f32 %v5122, %v5154
        %v5162 = vmul.f32 %v5123, %v5154
        %v5163 = vmul.f32 %v5124, %v5154
        %s5164 = scalar_lea.vmem %s15, 1
        %v5165 = vld [vmem:[%s5164] sm:$0x1]
        %v5167 = vlaneseq
        %v5168 = vshrl.u32 %v5167, 7
        %v5169 = vsub.s32 0, %v5168
        %v5170 = vrot.slane %v5165, %v5169
        %v5171 = vcombine.high %v5170, %v5170
        %v5173 = vunpack.c.l.s4 1983009808
        %v5174 = vunpack.c.0.s8 %v5173
        %v5175 = vlaneseq
        %v5176 = vshrl.u32 %v5175, 7
        %v5177 = vsub.s32 %v5174, %v5176
        %v5178 = vrot.slane %v5170, %v5177
        %v5180 = vunpack.c.l.s4 1983009808
        %v5181 = vunpack.c.0.s8 %v5180
        %v5182 = vlaneseq
        %v5183 = vshrl.u32 %v5182, 7
        %v5184 = vsub.s32 %v5181, %v5183
        %v5185 = vrot.slane %v5171, %v5184
        %v5186 = vcombine.high %v5178, %v5178
        %v5187 = vcombine.high %v5185, %v5185
        %v5192 = vmul.f32 %v4800, %v5178
        %v5193 = vmul.f32 %v4804, %v5186
        %v5194 = vmul.f32 %v4808, %v5185
        %v5195 = vmul.f32 %v4812, %v5187
        %v5196 = vmul.f32 %v4816, %v5178
        %v5197 = vmul.f32 %v4820, %v5186
        %v5198 = vmul.f32 %v4824, %v5185
        %v5199 = vmul.f32 %v4828, %v5187
        %v5200 = vmul.f32 %v4832, %v5178
        %v5201 = vmul.f32 %v4836, %v5186
        %v5202 = vmul.f32 %v4840, %v5185
        %v5203 = vmul.f32 %v4844, %v5187
        %v5204 = vmul.f32 %v4848, %v5178
        %v5205 = vmul.f32 %v4852, %v5186
        %v5206 = vmul.f32 %v4856, %v5185
        %v5207 = vmul.f32 %v4860, %v5187
        %v5208 = vmul.f32 %v4864, %v5178
        %v5209 = vmul.f32 %v4868, %v5186
        %v5210 = vmul.f32 %v4872, %v5185
        %v5211 = vmul.f32 %v4876, %v5187
        %v5212 = vmul.f32 %v4880, %v5178
        %v5213 = vmul.f32 %v4884, %v5186
        %v5214 = vmul.f32 %v4888, %v5185
        %v5215 = vmul.f32 %v4892, %v5187
        %v5216 = vmul.f32 %v4896, %v5178
        %v5217 = vmul.f32 %v4900, %v5186
        %v5218 = vmul.f32 %v4904, %v5185
        %v5219 = vmul.f32 %v4908, %v5187
        %v5220 = vmul.f32 %v4912, %v5178
        %v5221 = vmul.f32 %v4916, %v5186
        %v5222 = vmul.f32 %v4920, %v5185
        %v5223 = vmul.f32 %v4924, %v5187
        %v5256 = vcombine.low %v5192, %v5193
        %v5257 = vcombine.low %v5194, %v5195
        %v5259 = vunpack.c.l.s4 1983009808
        %v5260 = vunpack.c.0.s8 %v5259
        %v5261 = vlaneseq
        %v5262 = vshrl.u32 %v5261, 7
        %v5263 = vsub.s32 %v5260, %v5262
        %v5264 = vrot.slane %v5256, %v5263
        %v5266 = vunpack.c.l.s4 1983009808
        %v5267 = vunpack.c.0.s8 %v5266
        %v5268 = vlaneseq
        %v5269 = vshrl.u32 %v5268, 7
        %v5270 = vsub.s32 %v5267, %v5269
        %v5271 = vrot.slane %v5257, %v5270
        %v5272 = vcombine.low %v5264, %v5271
        %v5273 = vcombine.low %v5196, %v5197
        %v5274 = vcombine.low %v5198, %v5199
        %v5276 = vunpack.c.l.s4 1983009808
        %v5277 = vunpack.c.0.s8 %v5276
        %v5278 = vlaneseq
        %v5279 = vshrl.u32 %v5278, 7
        %v5280 = vsub.s32 %v5277, %v5279
        %v5281 = vrot.slane %v5273, %v5280
        %v5283 = vunpack.c.l.s4 1983009808
        %v5284 = vunpack.c.0.s8 %v5283
        %v5285 = vlaneseq
        %v5286 = vshrl.u32 %v5285, 7
        %v5287 = vsub.s32 %v5284, %v5286
        %v5288 = vrot.slane %v5274, %v5287
        %v5289 = vcombine.low %v5281, %v5288
        %v5290 = vcombine.low %v5200, %v5201
        %v5291 = vcombine.low %v5202, %v5203
        %v5293 = vunpack.c.l.s4 1983009808
        %v5294 = vunpack.c.0.s8 %v5293
        %v5295 = vlaneseq
        %v5296 = vshrl.u32 %v5295, 7
        %v5297 = vsub.s32 %v5294, %v5296
        %v5298 = vrot.slane %v5290, %v5297
        %v5300 = vunpack.c.l.s4 1983009808
        %v5301 = vunpack.c.0.s8 %v5300
        %v5302 = vlaneseq
        %v5303 = vshrl.u32 %v5302, 7
        %v5304 = vsub.s32 %v5301, %v5303
        %v5305 = vrot.slane %v5291, %v5304
        %v5306 = vcombine.low %v5298, %v5305
        %v5307 = vcombine.low %v5204, %v5205
        %v5308 = vcombine.low %v5206, %v5207
        %v5310 = vunpack.c.l.s4 1983009808
        %v5311 = vunpack.c.0.s8 %v5310
        %v5312 = vlaneseq
        %v5313 = vshrl.u32 %v5312, 7
        %v5314 = vsub.s32 %v5311, %v5313
        %v5315 = vrot.slane %v5307, %v5314
        %v5317 = vunpack.c.l.s4 1983009808
        %v5318 = vunpack.c.0.s8 %v5317
        %v5319 = vlaneseq
        %v5320 = vshrl.u32 %v5319, 7
        %v5321 = vsub.s32 %v5318, %v5320
        %v5322 = vrot.slane %v5308, %v5321
        %v5323 = vcombine.low %v5315, %v5322
        %v5324 = vcombine.low %v5208, %v5209
        %v5325 = vcombine.low %v5210, %v5211
        %v5327 = vunpack.c.l.s4 1983009808
        %v5328 = vunpack.c.0.s8 %v5327
        %v5329 = vlaneseq
        %v5330 = vshrl.u32 %v5329, 7
        %v5331 = vsub.s32 %v5328, %v5330
        %v5332 = vrot.slane %v5324, %v5331
        %v5334 = vunpack.c.l.s4 1983009808
        %v5335 = vunpack.c.0.s8 %v5334
        %v5336 = vlaneseq
        %v5337 = vshrl.u32 %v5336, 7
        %v5338 = vsub.s32 %v5335, %v5337
        %v5339 = vrot.slane %v5325, %v5338
        %v5340 = vcombine.low %v5332, %v5339
        %v5341 = vcombine.low %v5212, %v5213
        %v5342 = vcombine.low %v5214, %v5215
        %v5344 = vunpack.c.l.s4 1983009808
        %v5345 = vunpack.c.0.s8 %v5344
        %v5346 = vlaneseq
        %v5347 = vshrl.u32 %v5346, 7
        %v5348 = vsub.s32 %v5345, %v5347
        %v5349 = vrot.slane %v5341, %v5348
        %v5351 = vunpack.c.l.s4 1983009808
        %v5352 = vunpack.c.0.s8 %v5351
        %v5353 = vlaneseq
        %v5354 = vshrl.u32 %v5353, 7
        %v5355 = vsub.s32 %v5352, %v5354
        %v5356 = vrot.slane %v5342, %v5355
        %v5357 = vcombine.low %v5349, %v5356
        %v5358 = vcombine.low %v5216, %v5217
        %v5359 = vcombine.low %v5218, %v5219
        %v5361 = vunpack.c.l.s4 1983009808
        %v5362 = vunpack.c.0.s8 %v5361
        %v5363 = vlaneseq
        %v5364 = vshrl.u32 %v5363, 7
        %v5365 = vsub.s32 %v5362, %v5364
        %v5366 = vrot.slane %v5358, %v5365
        %v5368 = vunpack.c.l.s4 1983009808
        %v5369 = vunpack.c.0.s8 %v5368
        %v5370 = vlaneseq
        %v5371 = vshrl.u32 %v5370, 7
        %v5372 = vsub.s32 %v5369, %v5371
        %v5373 = vrot.slane %v5359, %v5372
        %v5374 = vcombine.low %v5366, %v5373
        %v5375 = vcombine.low %v5220, %v5221
        %v5376 = vcombine.low %v5222, %v5223
        %v5378 = vunpack.c.l.s4 1983009808
        %v5379 = vunpack.c.0.s8 %v5378
        %v5380 = vlaneseq
        %v5381 = vshrl.u32 %v5380, 7
        %v5382 = vsub.s32 %v5379, %v5381
        %v5383 = vrot.slane %v5375, %v5382
        %v5385 = vunpack.c.l.s4 1983009808
        %v5386 = vunpack.c.0.s8 %v5385
        %v5387 = vlaneseq
        %v5388 = vshrl.u32 %v5387, 7
        %v5389 = vsub.s32 %v5386, %v5388
        %v5390 = vrot.slane %v5376, %v5389
        %v5391 = vcombine.low %v5383, %v5390
        %v5400 = vadd.f32 %v5156, %v5272
        %v5401 = vadd.f32 %v5157, %v5289
        %v5402 = vadd.f32 %v5158, %v5306
        %v5403 = vadd.f32 %v5159, %v5323
        %v5404 = vadd.f32 %v5160, %v5340
        %v5405 = vadd.f32 %v5161, %v5357
        %v5406 = vadd.f32 %v5162, %v5374
        %v5407 = vadd.f32 %v5163, %v5391
        %s5408 = scalar_lea.vmem %s15, 2
        %v5409 = vld [vmem:[%s5408] sm:$0x1]
        %v5411 = vlaneseq
        %v5412 = vshrl.u32 %v5411, 7
        %v5413 = vsub.s32 0, %v5412
        %v5414 = vrot.slane %v5409, %v5413
        %v5416 = vmul.f32 %v5141, %v5414
        %v5417 = vmul.f32 %v5142, %v5414
        %v5418 = vmul.f32 %v5143, %v5414
        %v5419 = vmul.f32 %v5144, %v5414
        %v5420 = vmul.f32 %v5145, %v5414
        %v5421 = vmul.f32 %v5146, %v5414
        %v5422 = vmul.f32 %v5147, %v5414
        %v5423 = vmul.f32 %v5148, %v5414
        %v5424 = vadd.f32 %v5400, %v5416
        %v5425 = vadd.f32 %v5401, %v5417
        %v5426 = vadd.f32 %v5402, %v5418
        %v5427 = vadd.f32 %v5403, %v5419
        %v5428 = vadd.f32 %v5404, %v5420
        %v5429 = vadd.f32 %v5405, %v5421
        %v5430 = vadd.f32 %v5406, %v5422
        %v5431 = vadd.f32 %v5407, %v5423
        %v5432 = vsel %vm1525, %v5424, 0.0
        %5433 = vadd.xlane.f32.xlu0 %v5432
        %v5434 = vpop.xlane.xlu0 %5433
        %v5435 = vsel %vm1525, %v5425, 0.0
        %5436 = vadd.xlane.f32.xlu0 %v5435
        %v5437 = vpop.xlane.xlu0 %5436
        %v5438 = vsel %vm1525, %v5426, 0.0
        %5439 = vadd.xlane.f32.xlu0 %v5438
        %v5440 = vpop.xlane.xlu0 %5439
        %v5441 = vsel %vm1525, %v5427, 0.0
        %5442 = vadd.xlane.f32.xlu0 %v5441
        %v5443 = vpop.xlane.xlu0 %5442
        %v5444 = vsel %vm1525, %v5428, 0.0
        %5445 = vadd.xlane.f32.xlu0 %v5444
        %v5446 = vpop.xlane.xlu0 %5445
        %v5447 = vsel %vm1525, %v5429, 0.0
        %5448 = vadd.xlane.f32.xlu0 %v5447
        %v5449 = vpop.xlane.xlu0 %5448
        %v5450 = vsel %vm1525, %v5430, 0.0
        %5451 = vadd.xlane.f32.xlu0 %v5450
        %v5452 = vpop.xlane.xlu0 %5451
        %v5453 = vsel %vm1525, %v5431, 0.0
        %5454 = vadd.xlane.f32.xlu0 %v5453
        %v5455 = vpop.xlane.xlu0 %5454
        %v5456 = vld [vmem:[#allocation2] sm:$0x1]
        %v5458 = vlaneseq
        %v5459 = vshrl.u32 %v5458, 7
        %v5460 = vsub.s32 0, %v5459
        %v5461 = vrot.slane %v5456, %v5460
        %v5463 = vadd.f32 %v5434, %v5461
        %v5464 = vadd.f32 %v5437, %v5461
        %v5465 = vadd.f32 %v5440, %v5461
        %v5466 = vadd.f32 %v5443, %v5461
        %v5467 = vadd.f32 %v5446, %v5461
        %v5468 = vadd.f32 %v5449, %v5461
        %v5469 = vadd.f32 %v5452, %v5461
        %v5470 = vadd.f32 %v5455, %v5461
        %v5471 = vxor.u32 %v5463, 2147483648
        %v5472 = vxor.u32 %v5464, 2147483648
        %v5473 = vxor.u32 %v5465, 2147483648
        %v5474 = vxor.u32 %v5466, 2147483648
        %v5475 = vxor.u32 %v5467, 2147483648
        %v5476 = vxor.u32 %v5468, 2147483648
        %v5477 = vxor.u32 %v5469, 2147483648
        %v5478 = vxor.u32 %v5470, 2147483648
        %v5479 = vmul.f32 %v5471, 1.442695
        %v5480 = vpow.pop %v5479
        %v5481 = vmul.f32 %v5472, 1.442695
        %v5482 = vpow.pop %v5481
        %v5483 = vmul.f32 %v5473, 1.442695
        %v5484 = vpow.pop %v5483
        %v5485 = vmul.f32 %v5474, 1.442695
        %v5486 = vpow.pop %v5485
        %v5487 = vmul.f32 %v5475, 1.442695
        %v5488 = vpow.pop %v5487
        %v5489 = vmul.f32 %v5476, 1.442695
        %v5490 = vpow.pop %v5489
        %v5491 = vmul.f32 %v5477, 1.442695
        %v5492 = vpow.pop %v5491
        %v5493 = vmul.f32 %v5478, 1.442695
        %v5494 = vpow.pop %v5493
        %v5495 = vadd.f32 %v5480, 1.0
        %v5496 = vadd.f32 %v5482, 1.0
        %v5497 = vadd.f32 %v5484, 1.0
        %v5498 = vadd.f32 %v5486, 1.0
        %v5499 = vadd.f32 %v5488, 1.0
        %v5500 = vadd.f32 %v5490, 1.0
        %v5501 = vadd.f32 %v5492, 1.0
        %v5502 = vadd.f32 %v5494, 1.0
        %v5503 = vrcp.pop %v5495
        %v5504 = vmul.f32 1.0, %v5503
        %v5505 = vrcp.pop %v5496
        %v5506 = vmul.f32 1.0, %v5505
        %v5507 = vrcp.pop %v5497
        %v5508 = vmul.f32 1.0, %v5507
        %v5509 = vrcp.pop %v5498
        %v5510 = vmul.f32 1.0, %v5509
        %v5511 = vrcp.pop %v5499
        %v5512 = vmul.f32 1.0, %v5511
        %v5513 = vrcp.pop %v5500
        %v5514 = vmul.f32 1.0, %v5513
        %v5515 = vrcp.pop %v5501
        %v5516 = vmul.f32 1.0, %v5515
        %v5517 = vrcp.pop %v5502
        %v5518 = vmul.f32 1.0, %v5517
        %vm5519 = vcmask 7168
        %5520 = vst.msk [vmem:[%s580] sm:$0xff] %vm5519, %v5504
        %5521 = vst.msk [vmem:[%s580 + $0x8] sm:$0xff] %vm5519, %v5506
        %5522 = vst.msk [vmem:[%s580 + $0x10] sm:$0xff] %vm5519, %v5508
        %5523 = vst.msk [vmem:[%s580 + $0x18] sm:$0xff] %vm5519, %v5510
        %5524 = vst.msk [vmem:[%s580 + $0x20] sm:$0xff] %vm5519, %v5512
        %5525 = vst.msk [vmem:[%s580 + $0x28] sm:$0xff] %vm5519, %v5514
        %5526 = vst.msk [vmem:[%s580 + $0x30] sm:$0xff] %vm5519, %v5516
        %5527 = vst.msk [vmem:[%s580 + $0x38] sm:$0xff] %vm5519, %v5518
        %p5528 = scmp.lt.s32.totalorder %s32, 1
        %s5529 = scalar_select %p5528, %s32, 1
        %s5530 = smul.addr %s5529, 8
        %s5531 = smul.addr %s5530, 8
        %s5532 = scalar_lea.vmem %s17, %s5531
        // Predicated region
        $region97: #{tpu_custom_call.1} parent=87 // pred_check
          %p5533 = pneg %p412
        $region98: #{tpu_custom_call.1} parent=87 // pred_check_branch
          %5535 = sbr.rel (%p5533) target = $region100
        $region99: #{tpu_custom_call.1} parent=87 // pred_region
          _
        $region100: #{tpu_custom_call.1} parent=87 // pred_fallthru
          _
      $region88: #{tpu_custom_call.1} parent=5 // pred_fallthru
        _
      %p5536 = scmp.le.s32.totalorder 2, %s27
      // Predicated region
      $region101: #{tpu_custom_call.1} parent=5 // pred_check
        %p5537 = pneg %p5536
      $region102: #{tpu_custom_call.1} parent=5 // pred_check_branch
        %5539 = sbr.rel (%p5537) target = $region104
      $region103: #{tpu_custom_call.1} parent=5 // pred_region
        %s5540 = ssub.s32 %s27, 2
        // Predicated region
        $region105: #{tpu_custom_call.1} parent=103 // pred_check
          %p5541 = pneg %p418
        $region106: #{tpu_custom_call.1} parent=103 // pred_check_branch
          %5543 = sbr.rel (%p5541) target = $region108
        $region107: #{tpu_custom_call.1} parent=103 // pred_region
          %p5544 = scmp.lt.s32.totalorder %s33, 1
          %s5545 = scalar_select %p5544, %s33, 1
          %s5546 = smul.addr %s5545, 8
          %s5547 = smul.addr %s5546, 8
          %s5548 = scalar_lea.vmem %s17, %s5547
        $region108: #{tpu_custom_call.1} parent=103 // pred_fallthru
          _
      $region104: #{tpu_custom_call.1} parent=5 // pred_fallthru
        _
    $region6: #{tpu_custom_call.1} parent=1 // loop_footer
      %s31 = sadd.s32 1, %s27
    $region7: #{tpu_custom_call.1} parent=1 // loop_footer_branch
      %26 = sbr.rel target = $region3
    $region8: #{tpu_custom_call.1} parent=1 // loop_exit
      _
    %5549 = vsyncpa [#allocation4], 1
    %s5550 = scalar_lea.sflag [#allocation4], 1
    %5551 = vsyncpa %s5550, 1
    %5552 = vsyncpa [#allocation6], 1

</llo_original>
